<compile_context>
chip_gen: v6e
topology: v6e:2x2x1
jax: 0.10.0
libtpu: 0.0.40
codegen_flags: <defaults>
</compile_context>

<pallas_src>
import functools

import jax
import jax.numpy as jnp
from jax import lax
from jax.experimental import pallas as pl
from jax.experimental.pallas import tpu as pltpu


# --------------------------------------------------------------------------
# Single fused kernel: GCN stack -> pool/EGAT level(s) -> pred MLP
# --------------------------------------------------------------------------
def _fused_forward_kernel(*refs, batch, n_nodes, num_block, num_levels,
                          num_chan, alpha, use_mask):
    # TODO(synk): BatchGATFeatureExtractor source is not provided; the EGAT head is a
    # per-edge-channel masked GAT stand-in (softmax(mask LeakyReLU(ef_c)) @ (h@W_c),
    # concat over channels) reproducing the required [B, N, edgefeat_dim*E] output.
    f32 = jnp.float32
    pos = 0
    x_ref = refs[pos]; pos += 1          # [B*N, Din]
    adj_ref = refs[pos]; pos += 1        # [B*N, B*N] block-diagonal adjacency
    mask0_ref = refs[pos]; pos += 1      # [B*N, 1]
    wf_ref = refs[pos]; pos += 1
    bf_ref = refs[pos]; pos += 1
    if num_block > 0:
        wblk_ref = refs[pos]; pos += 1   # [num_block, H, H]
        bblk_ref = refs[pos]; pos += 1   # [num_block, 1, H]
    else:
        wblk_ref = bblk_ref = None
    wl_ref = refs[pos]; pos += 1
    bl_ref = refs[pos]; pos += 1
    level_refs = []
    for _ in range(num_levels):
        # (pool_bd [K, BN, BN], wgat [K, Din_l, C*E], ef_slab [B*C*N, N],
        #  efm_slab [B*C*N, N], mask_l [BN, 1])
        level_refs.append(tuple(refs[pos:pos + 5])); pos += 5
    w1_ref = refs[pos]; pos += 1
    b1_ref = refs[pos]; pos += 1
    w2_ref = refs[pos]; pos += 1
    b2_ref = refs[pos]; pos += 1
    out_ref = refs[pos]; pos += 1        # [B, label_dim]
    emb_scr = refs[pos]; pos += 1        # VMEM [B*N, d_total] layer-concat slab

    adj_bd = adj_ref[...]

    # ---- GraphConv: y = F.normalize((adj @ h) @ W + b), optional ReLU ----------
    def gconv(h, w, b, relu):
        t = jnp.dot(adj_bd, h, preferred_element_type=f32)
        y = jnp.dot(t, w, preferred_element_type=f32) + b
        ss = jnp.sum(y * y, axis=-1, keepdims=True)
        y = y * lax.rsqrt(jnp.maximum(ss, 1e-24))      # == y / max(||y||, 1e-12)
        if relu:
            y = jnp.maximum(y, 0.0)
        return y

    # ---- fresh nn.BatchNorm1d(num_nodes), training mode: per-node stats over
    #      (batch, feature), biased var, eps=1e-5, gamma=1, beta=0 -----------------
    def batch_norm(h):                                  # h: [B*N, D]
        d = h.shape[-1]
        inv = 1.0 / float(batch * d)
        rs = jnp.sum(h, axis=-1, keepdims=True)         # [B*N, 1]
        node_sum = rs[0:n_nodes]
        for b in range(1, batch):
            node_sum = node_sum + rs[b * n_nodes:(b + 1) * n_nodes]
        mean = jnp.concatenate([node_sum] * batch, axis=0) * inv
        diff = h - mean
        vs = jnp.sum(diff * diff, axis=-1, keepdims=True)
        node_var = vs[0:n_nodes]
        for b in range(1, batch):
            node_var = node_var + vs[b * n_nodes:(b + 1) * n_nodes]
        var = jnp.concatenate([node_var] * batch, axis=0) * inv
        return diff * lax.rsqrt(var + 1e-5)

    rd_lists = [[] for _ in range(batch)]               # per-batch readout rows

    def append_readouts(v):                              # v: [B*N, D]
        for b in range(batch):
            rd_lists[b].append(
                jnp.max(v[b * n_nodes:(b + 1) * n_nodes, :], axis=0, keepdims=True))

    # ---------------- GCN stack: conv_first / conv_block / conv_last -------------
    h = batch_norm(gconv(x_ref[...], wf_ref[...], bf_ref[...], True))
    off = 0
    dk = h.shape[-1]
    emb_scr[:, off:off + dk] = h                         # static lane-slice store
    off += dk
    for i in range(num_block):
        h = batch_norm(gconv(h, wblk_ref[i], bblk_ref[i], True))
        dk = h.shape[-1]
        emb_scr[:, off:off + dk] = h
        off += dk
    h = gconv(h, wl_ref[...], bl_ref[...], False)
    dk = h.shape[-1]
    emb_scr[:, off:off + dk] = h
    off += dk

    emb = emb_scr[...] * mask0_ref[...]                  # [B*N, d_total]
    append_readouts(emb)

    # ---------------- pooling + EGAT levels --------------------------------------
    for li in range(num_levels):
        pool_ref, wgat_ref, ef_ref, efm_ref, maskl_ref = level_refs[li]
        num_wblk = pool_ref.shape[0]
        ce = wgat_ref.shape[-1]
        e_dim = ce // num_chan

        # Pool_Edges fused with the hoisted h @ W_stacked matmul: the pooled concat
        # never materializes; hc accumulates (pm^T_bd @ emb) @ W_rowblock directly.
        hc = None
        for k in range(num_wblk):
            pooled = jnp.dot(pool_ref[k], emb, preferred_element_type=f32)
            t = jnp.dot(pooled, wgat_ref[k], preferred_element_type=f32)
            hc = t if hc is None else hc + t             # [B*N, C*E]

        # Stacked softmax over all (batch, channel) attention rows at once.
        ef = ef_ref[...]                                  # [B*C*N, N]
        efm = efm_ref[...]
        lrelu = jnp.where(ef > 0, ef, alpha * ef)
        scores = jnp.where(efm > 0, lrelu, -1e9)
        p = jnp.exp(scores - jnp.max(scores, axis=-1, keepdims=True))
        attn = p * pl.reciprocal(jnp.sum(p, axis=-1, keepdims=True), approx=True)

        lane = lax.broadcasted_iota(jnp.int32, (1, ce), 1)
        col_masks = [((lane >= c * e_dim) & (lane < (c + 1) * e_dim)).astype(f32)
                     for c in range(num_chan)]

        maskl = maskl_ref[...]
        out_rows = []
        for b in range(batch):
            hc_b = hc[b * n_nodes:(b + 1) * n_nodes, :]
            acc = None
            for c in range(num_chan):
                r0 = (b * num_chan + c) * n_nodes
                contrib = jnp.dot(attn[r0:r0 + n_nodes, :], hc_b * col_masks[c],
                                  preferred_element_type=f32)
                acc = contrib if acc is None else acc + contrib
            out_rows.append(acc)
        emb = jnp.concatenate(out_rows, axis=0) if batch > 1 else out_rows[0]
        if use_mask:
            emb = emb * maskl
        append_readouts(emb)

    # ---------------- pred MLP (Linear -> ReLU -> Linear) ------------------------
    widths = [r.shape[-1] for r in rd_lists[0]]
    offs, o = [], 0
    for d in widths:
        offs.append(o); o += d
    w1_blocks = [w1_ref[offs[l]:offs[l] + widths[l], :] for l in range(len(widths))]
    b1 = b1_ref[...]
    w2 = w2_ref[...]
    b2 = b2_ref[...]
    for b in range(batch):
        hp = b1
        for l in range(len(widths)):
            hp = hp + jnp.dot(rd_lists[b][l], w1_blocks[l], preferred_element_type=f32)
        hp = jnp.maximum(hp, 0.0)
        out_ref[pl.ds(b, 1), :] = jnp.dot(hp, w2, preferred_element_type=f32) + b2


# --------------------------------------------------------------------------
# Plain-JAX glue (mask / block-diagonal / packing) — all fused under jit.
# --------------------------------------------------------------------------
def construct_mask(max_nodes, batch_num_nodes):
    idx = jnp.arange(max_nodes)[None, :]
    return (idx < batch_num_nodes[:, None]).astype(jnp.float32)[:, :, None]


def _block_diag(mats_bnn):
    """[B, N, N] -> block-diagonal [B*N, B*N]."""
    B, N, _ = mats_bnn.shape
    out = jnp.zeros((B * N, B * N), mats_bnn.dtype)
    for b in range(B):
        out = out.at[b * N:(b + 1) * N, b * N:(b + 1) * N].set(mats_bnn[b])
    return out


def edgefeat_gat_svd_encoder_forward(
    params, x, adj, edgefeat_list, edgefeat_mask_list,
    batch_num_nodes, batch_num_nodes_list,
    pool_matrices_list, edge_pool_matrices_list,
    *, edge_pool_weight=0.5, eigen_concat_singular=True,
    egat_alpha=0.2, use_mask=True,
):
    f32 = jnp.float32
    B, N, _ = adj.shape
    BN = B * N

    mask0 = construct_mask(N, batch_num_nodes).reshape(BN, 1)
    x_flat = x.reshape(BN, -1).astype(f32)
    adj_bd = _block_diag(adj.astype(f32))

    w_first = params["conv_first_w"]
    b_first = params["conv_first_b"].reshape(1, -1)
    blocks = params["conv_block"]
    num_block = len(blocks)
    w_last = params["conv_last_w"]
    b_last = params["conv_last_b"].reshape(1, -1)
    d_total = (w_first.shape[1] + sum(w.shape[1] for w, _ in blocks)
               + w_last.shape[1])

    args = [x_flat, adj_bd, mask0, w_first, b_first]
    if num_block > 0:
        args.append(jnp.stack([w for w, _ in blocks]))
        args.append(jnp.stack([b.reshape(1, -1) for _, b in blocks]))
    args += [w_last, b_last]

    num_levels = len(pool_matrices_list)
    num_chan = params["egat_w"][0].shape[0] if num_levels > 0 else 1
    readout_widths = [d_total]

    for i in range(num_levels):
        pms = pool_matrices_list[i]
        epms = edge_pool_matrices_list[i]
        num_pool = len(pms)
        if eigen_concat_singular:
            mats = []
            for j in range(num_pool):
                mats.append(jnp.transpose(pms[j], (0, 2, 1)))
                mats.append(jnp.transpose(epms[j], (0, 2, 1)))
        else:
            mats = [jnp.transpose(pms[j] + edge_pool_weight * epms[j], (0, 2, 1))
                    for j in range(num_pool)]
        pool_bd = jnp.stack([_block_diag(m.astype(f32)) for m in mats])

        w_egat = params["egat_w"][i]                      # [C, d_in, E]
        C, d_in, E = w_egat.shape
        assert C == num_chan, (C, num_chan)
        assert d_in % len(mats) == 0, (d_in, len(mats))
        d_emb_lvl = d_in // len(mats)
        w_stacked = jnp.transpose(w_egat, (1, 0, 2)).reshape(d_in, C * E)
        wgat = jnp.stack([w_stacked[k * d_emb_lvl:(k + 1) * d_emb_lvl]
                          for k in range(len(mats))])     # [K, d_emb_lvl, C*E]

        ef = edgefeat_list[i]                             # [B, N, N, C]
        ef_slab = jnp.transpose(ef, (0, 3, 1, 2)).reshape(B * C * N, N).astype(f32)
        efm = edgefeat_mask_list[i]                       # [B, N, N]
        efm_slab = jnp.broadcast_to(efm[:, None], (B, C, N, N)) \
                      .reshape(B * C * N, N).astype(f32)

        maskl = (construct_mask(N, batch_num_nodes_list[i]).reshape(BN, 1)
                 if use_mask else jnp.ones((BN, 1), f32))

        args += [pool_bd, wgat, ef_slab, efm_slab, maskl]
        readout_widths.append(C * E)

    w1 = params["pred_w1"]
    assert sum(readout_widths) == w1.shape[0], (readout_widths, w1.shape)
    args += [w1, params["pred_b1"].reshape(1, -1),
             params["pred_w2"], params["pred_b2"].reshape(1, -1)]
    label_dim = params["pred_w2"].shape[1]

    kernel = functools.partial(
        _fused_forward_kernel, batch=B, n_nodes=N, num_block=num_block,
        num_levels=num_levels, num_chan=num_chan,
        alpha=egat_alpha, use_mask=use_mask)

    return pl.pallas_call(
        kernel,
        out_shape=jax.ShapeDtypeStruct((B, label_dim), f32),
        scratch_shapes=[pltpu.VMEM((BN, d_total), jnp.float32)],
    )(*args)


# --------------------------------------------------------------------------
# Deterministic parameter / input construction
# --------------------------------------------------------------------------
def xavier_relu(key, fan_in, fan_out):
    gain = jnp.sqrt(2.0)  # nn.init.calculate_gain('relu')
    bound = gain * jnp.sqrt(6.0 / (fan_in + fan_out))
    return jax.random.uniform(key, (fan_in, fan_out), jnp.float32, -bound, bound)


def linear_init(key, fan_in, fan_out):
    kw, kb = jax.random.split(key)
    bound = 1.0 / jnp.sqrt(fan_in)
    w = jax.random.uniform(kw, (fan_in, fan_out), jnp.float32, -bound, bound)
    b = jax.random.uniform(kb, (fan_out,), jnp.float32, -bound, bound)
    return w, b


if __name__ == "__main__":
    key = jax.random.PRNGKey(0)
    keys = iter(jax.random.split(key, 64))

    # Small config consistent with the module. The module requires
    # hidden_dim*(num_layers-1)+embedding_dim == edgefeat_dim*embedding_dim for the
    # final concat to line up (edgefeat_dim=3), hence hidden=embedding, num_layers=3.
    B, N = 2, 16
    input_dim, hidden_dim, embedding_dim = 4, 32, 32
    num_layers, label_dim = 3, 6
    edgefeat_dim = 3
    num_pool_matrix = 2
    pool_sizes = [4]
    pred_hidden = 50

    gcn_out_dim = hidden_dim * (num_layers - 1) + embedding_dim      # 96
    pred_input_dim = edgefeat_dim * embedding_dim                    # 96 (use_edgefeat)
    egat_in_dim = 2 * gcn_out_dim * num_pool_matrix                  # 384 (Eigen_concat_Singular)
    pred_in = pred_input_dim * (len(pool_sizes) + 1)                 # 192

    w1, b1 = linear_init(next(keys), pred_in, pred_hidden)
    w2, b2 = linear_init(next(keys), pred_hidden, label_dim)
    params = {
        "conv_first_w": xavier_relu(next(keys), input_dim, hidden_dim),
        "conv_first_b": jnp.zeros((hidden_dim,), jnp.float32),      # init.constant 0.0
        "conv_block": [(xavier_relu(next(keys), hidden_dim, hidden_dim),
                        jnp.zeros((hidden_dim,), jnp.float32))
                       for _ in range(num_layers - 2)],
        "conv_last_w": xavier_relu(next(keys), hidden_dim, embedding_dim),
        "conv_last_b": jnp.zeros((embedding_dim,), jnp.float32),
        "egat_w": [0.05 * jax.random.normal(next(keys),
                                            (edgefeat_dim, egat_in_dim, embedding_dim),
                                            jnp.float32)
                   for _ in range(len(pool_sizes))],
        "pred_w1": w1, "pred_b1": b1, "pred_w2": w2, "pred_b2": b2,
    }

    # Inputs
    x = jax.random.normal(next(keys), (B, N, input_dim), jnp.float32)
    adj = jax.random.uniform(next(keys), (B, N, N), jnp.float32)
    batch_num_nodes = jnp.array([16, 12], dtype=jnp.int32)
    batch_num_nodes_list = [jnp.array([4, 3], dtype=jnp.int32)]
    # Pool matrices are zero-padded to [B, N, N] (pooled nodes padded to max_num_nodes),
    # matching the mask of size max_num_nodes used by the reference after pooling.
    pool_matrices_list = [[jax.random.uniform(next(keys), (B, N, N), jnp.float32)
                           for _ in range(num_pool_matrix)]]
    edge_pool_matrices_list = [[jax.random.uniform(next(keys), (B, N, N), jnp.float32)
                                for _ in range(num_pool_matrix)]]
    edgefeat_list = [jax.random.uniform(next(keys), (B, N, N, edgefeat_dim), jnp.float32)]
    edgefeat_mask_list = [(jax.random.uniform(next(keys), (B, N, N)) > 0.3)
                          .astype(jnp.float32)]

    fwd = jax.jit(functools.partial(
        edgefeat_gat_svd_encoder_forward,
        edge_pool_weight=0.5, eigen_concat_singular=True,
        egat_alpha=0.2, use_mask=True))

    y_pred = fwd(params, x, adj, edgefeat_list, edgefeat_mask_list,
                 batch_num_nodes, batch_num_nodes_list,
                 pool_matrices_list, edge_pool_matrices_list)
    jax.block_until_ready(y_pred)
    assert y_pred.shape == (B, label_dim), y_pred.shape
    print("KERNEL_OK")
</pallas_src>

<mosaic_0001>
module attributes {stable_mosaic.version = 11 : i64} {
  func.func @_fused_forward_kernel(%arg0: memref<32x4xf32, #tpu.memory_space<vmem>>, %arg1: memref<32x32xf32, #tpu.memory_space<vmem>>, %arg2: memref<32x1xf32, #tpu.memory_space<vmem>>, %arg3: memref<4x32xf32, #tpu.memory_space<vmem>>, %arg4: memref<1x32xf32, #tpu.memory_space<vmem>>, %arg5: memref<1x32x32xf32, #tpu.memory_space<vmem>>, %arg6: memref<1x1x32xf32, #tpu.memory_space<vmem>>, %arg7: memref<32x32xf32, #tpu.memory_space<vmem>>, %arg8: memref<1x32xf32, #tpu.memory_space<vmem>>, %arg9: memref<4x32x32xf32, #tpu.memory_space<vmem>>, %arg10: memref<4x96x96xf32, #tpu.memory_space<vmem>>, %arg11: memref<96x16xf32, #tpu.memory_space<vmem>>, %arg12: memref<96x16xf32, #tpu.memory_space<vmem>>, %arg13: memref<32x1xf32, #tpu.memory_space<vmem>>, %arg14: memref<192x50xf32, #tpu.memory_space<vmem>>, %arg15: memref<1x50xf32, #tpu.memory_space<vmem>>, %arg16: memref<50x6xf32, #tpu.memory_space<vmem>>, %arg17: memref<1x6xf32, #tpu.memory_space<vmem>>, %arg18: memref<2x6xf32, #tpu.memory_space<vmem>>, %arg19: memref<32x96xf32, #tpu.memory_space<vmem>>) attributes {dimension_semantics = [], scalar_prefetch = 0 : i64, scratch_operands = 1 : i64, tpu.core_type = #tpu.core_type<tc>} {
    %c0 = arith.constant 0 : index
    %c0_0 = arith.constant 0 : index
    %0 = vector.load %arg1[%c0, %c0_0] : memref<32x32xf32, #tpu.memory_space<vmem>>, vector<32x32xf32>
    %c0_1 = arith.constant 0 : index
    %c0_2 = arith.constant 0 : index
    %1 = vector.load %arg0[%c0_1, %c0_2] : memref<32x4xf32, #tpu.memory_space<vmem>>, vector<32x4xf32>
    %c0_3 = arith.constant 0 : index
    %c0_4 = arith.constant 0 : index
    %2 = vector.load %arg3[%c0_3, %c0_4] : memref<4x32xf32, #tpu.memory_space<vmem>>, vector<4x32xf32>
    %c0_5 = arith.constant 0 : index
    %c0_6 = arith.constant 0 : index
    %3 = vector.load %arg4[%c0_5, %c0_6] : memref<1x32xf32, #tpu.memory_space<vmem>>, vector<1x32xf32>
    %cst = arith.constant dense<0.000000e+00> : vector<32x4xf32>
    %4 = tpu.matmul %0, %1, %cst {dimension_numbers = #tpu.dot_dimension_numbers<[1], [0], [0], [1], [0, 0, 1, 1], [], []>} : vector<32x32xf32>, vector<32x4xf32>, vector<32x4xf32> -> vector<32x4xf32>
    %cst_7 = arith.constant dense<0.000000e+00> : vector<32x32xf32>
    %5 = tpu.matmul %4, %2, %cst_7 {dimension_numbers = #tpu.dot_dimension_numbers<[1], [0], [0], [1], [0, 0, 1, 1], [], []>} : vector<32x4xf32>, vector<4x32xf32>, vector<32x32xf32> -> vector<32x32xf32>
    %6 = vector.broadcast %3 : vector<1x32xf32> to vector<32x32xf32>
    %7 = arith.addf %5, %6 : vector<32x32xf32>
    %8 = arith.mulf %7, %7 : vector<32x32xf32>
    %cst_8 = arith.constant dense<0.000000e+00> : vector<32xf32>
    %9 = vector.multi_reduction <add>, %8, %cst_8 [1] : vector<32x32xf32> to vector<32xf32>
    %10 = vector.shape_cast %9 : vector<32xf32> to vector<32x1xf32>
    %cst_9 = arith.constant 1.000000e-24 : f32
    %11 = vector.broadcast %cst_9 : f32 to vector<32x1xf32>
    %12 = arith.maximumf %10, %11 : vector<32x1xf32>
    %13 = math.rsqrt %12 : vector<32x1xf32>
    %14 = vector.broadcast %13 : vector<32x1xf32> to vector<32x32xf32>
    %15 = arith.mulf %7, %14 : vector<32x32xf32>
    %cst_10 = arith.constant 0.000000e+00 : f32
    %16 = vector.broadcast %cst_10 : f32 to vector<32x32xf32>
    %17 = arith.maximumf %15, %16 : vector<32x32xf32>
    %cst_11 = arith.constant dense<0.000000e+00> : vector<32xf32>
    %18 = vector.multi_reduction <add>, %17, %cst_11 [1] : vector<32x32xf32> to vector<32xf32>
    %19 = vector.shape_cast %18 : vector<32xf32> to vector<32x1xf32>
    %20 = vector.extract_strided_slice %19 {offsets = [0, 0], sizes = [16, 1], strides = [1, 1]} : vector<32x1xf32> to vector<16x1xf32>
    %21 = vector.extract_strided_slice %19 {offsets = [16, 0], sizes = [16, 1], strides = [1, 1]} : vector<32x1xf32> to vector<16x1xf32>
    %22 = arith.addf %20, %21 : vector<16x1xf32>
    %23 = tpu.concatenate %22, %22 in 0 : vector<16x1xf32>, vector<16x1xf32> -> vector<32x1xf32>
    %cst_12 = arith.constant 1.562500e-02 : f32
    %24 = vector.broadcast %cst_12 : f32 to vector<32x1xf32>
    %25 = arith.mulf %23, %24 : vector<32x1xf32>
    %26 = vector.broadcast %25 : vector<32x1xf32> to vector<32x32xf32>
    %27 = arith.subf %17, %26 : vector<32x32xf32>
    %28 = arith.mulf %27, %27 : vector<32x32xf32>
    %cst_13 = arith.constant dense<0.000000e+00> : vector<32xf32>
    %29 = vector.multi_reduction <add>, %28, %cst_13 [1] : vector<32x32xf32> to vector<32xf32>
    %30 = vector.shape_cast %29 : vector<32xf32> to vector<32x1xf32>
    %31 = vector.extract_strided_slice %30 {offsets = [0, 0], sizes = [16, 1], strides = [1, 1]} : vector<32x1xf32> to vector<16x1xf32>
    %32 = vector.extract_strided_slice %30 {offsets = [16, 0], sizes = [16, 1], strides = [1, 1]} : vector<32x1xf32> to vector<16x1xf32>
    %33 = arith.addf %31, %32 : vector<16x1xf32>
    %34 = tpu.concatenate %33, %33 in 0 : vector<16x1xf32>, vector<16x1xf32> -> vector<32x1xf32>
    %cst_14 = arith.constant 1.562500e-02 : f32
    %35 = vector.broadcast %cst_14 : f32 to vector<32x1xf32>
    %36 = arith.mulf %34, %35 : vector<32x1xf32>
    %cst_15 = arith.constant 9.99999974E-6 : f32
    %37 = vector.broadcast %cst_15 : f32 to vector<32x1xf32>
    %38 = arith.addf %36, %37 : vector<32x1xf32>
    %39 = math.rsqrt %38 : vector<32x1xf32>
    %40 = vector.broadcast %39 : vector<32x1xf32> to vector<32x32xf32>
    %41 = arith.mulf %27, %40 : vector<32x32xf32>
    %c0_16 = arith.constant 0 : index
    %c0_17 = arith.constant 0 : index
    %42 = vector.load %arg19[%c0_16, %c0_17] : memref<32x96xf32, #tpu.memory_space<vmem>>, vector<32x32xf32>
    tpu.vector_store %arg19[%c0_16, %c0_17], %41 {strides = array<i32>} : memref<32x96xf32, #tpu.memory_space<vmem>>, vector<32x32xf32>,
    %c0_18 = arith.constant 0 : index
    %c0_19 = arith.constant 0 : index
    %c0_20 = arith.constant 0 : index
    %43 = vector.load %arg5[%c0_18, %c0_19, %c0_20] : memref<1x32x32xf32, #tpu.memory_space<vmem>>, vector<1x32x32xf32>
    %44 = vector.shape_cast %43 : vector<1x32x32xf32> to vector<32x32xf32>
    %c0_21 = arith.constant 0 : index
    %c0_22 = arith.constant 0 : index
    %c0_23 = arith.constant 0 : index
    %45 = vector.load %arg6[%c0_21, %c0_22, %c0_23] : memref<1x1x32xf32, #tpu.memory_space<vmem>>, vector<1x1x32xf32>
    %46 = vector.shape_cast %45 : vector<1x1x32xf32> to vector<1x32xf32>
    %cst_24 = arith.constant dense<0.000000e+00> : vector<32x32xf32>
    %47 = tpu.matmul %0, %41, %cst_24 {dimension_numbers = #tpu.dot_dimension_numbers<[1], [0], [0], [1], [0, 0, 1, 1], [], []>} : vector<32x32xf32>, vector<32x32xf32>, vector<32x32xf32> -> vector<32x32xf32>
    %cst_25 = arith.constant dense<0.000000e+00> : vector<32x32xf32>
    %48 = tpu.matmul %47, %44, %cst_25 {dimension_numbers = #tpu.dot_dimension_numbers<[1], [0], [0], [1], [0, 0, 1, 1], [], []>} : vector<32x32xf32>, vector<32x32xf32>, vector<32x32xf32> -> vector<32x32xf32>
    %49 = vector.broadcast %46 : vector<1x32xf32> to vector<32x32xf32>
    %50 = arith.addf %48, %49 : vector<32x32xf32>
    %51 = arith.mulf %50, %50 : vector<32x32xf32>
    %cst_26 = arith.constant dense<0.000000e+00> : vector<32xf32>
    %52 = vector.multi_reduction <add>, %51, %cst_26 [1] : vector<32x32xf32> to vector<32xf32>
    %53 = vector.shape_cast %52 : vector<32xf32> to vector<32x1xf32>
    %cst_27 = arith.constant 1.000000e-24 : f32
    %54 = vector.broadcast %cst_27 : f32 to vector<32x1xf32>
    %55 = arith.maximumf %53, %54 : vector<32x1xf32>
    %56 = math.rsqrt %55 : vector<32x1xf32>
    %57 = vector.broadcast %56 : vector<32x1xf32> to vector<32x32xf32>
    %58 = arith.mulf %50, %57 : vector<32x32xf32>
    %cst_28 = arith.constant 0.000000e+00 : f32
    %59 = vector.broadcast %cst_28 : f32 to vector<32x32xf32>
    %60 = arith.maximumf %58, %59 : vector<32x32xf32>
    %cst_29 = arith.constant dense<0.000000e+00> : vector<32xf32>
    %61 = vector.multi_reduction <add>, %60, %cst_29 [1] : vector<32x32xf32> to vector<32xf32>
    %62 = vector.shape_cast %61 : vector<32xf32> to vector<32x1xf32>
    %63 = vector.extract_strided_slice %62 {offsets = [0, 0], sizes = [16, 1], strides = [1, 1]} : vector<32x1xf32> to vector<16x1xf32>
    %64 = vector.extract_strided_slice %62 {offsets = [16, 0], sizes = [16, 1], strides = [1, 1]} : vector<32x1xf32> to vector<16x1xf32>
    %65 = arith.addf %63, %64 : vector<16x1xf32>
    %66 = tpu.concatenate %65, %65 in 0 : vector<16x1xf32>, vector<16x1xf32> -> vector<32x1xf32>
    %cst_30 = arith.constant 1.562500e-02 : f32
    %67 = vector.broadcast %cst_30 : f32 to vector<32x1xf32>
    %68 = arith.mulf %66, %67 : vector<32x1xf32>
    %69 = vector.broadcast %68 : vector<32x1xf32> to vector<32x32xf32>
    %70 = arith.subf %60, %69 : vector<32x32xf32>
    %71 = arith.mulf %70, %70 : vector<32x32xf32>
    %cst_31 = arith.constant dense<0.000000e+00> : vector<32xf32>
    %72 = vector.multi_reduction <add>, %71, %cst_31 [1] : vector<32x32xf32> to vector<32xf32>
    %73 = vector.shape_cast %72 : vector<32xf32> to vector<32x1xf32>
    %74 = vector.extract_strided_slice %73 {offsets = [0, 0], sizes = [16, 1], strides = [1, 1]} : vector<32x1xf32> to vector<16x1xf32>
    %75 = vector.extract_strided_slice %73 {offsets = [16, 0], sizes = [16, 1], strides = [1, 1]} : vector<32x1xf32> to vector<16x1xf32>
    %76 = arith.addf %74, %75 : vector<16x1xf32>
    %77 = tpu.concatenate %76, %76 in 0 : vector<16x1xf32>, vector<16x1xf32> -> vector<32x1xf32>
    %cst_32 = arith.constant 1.562500e-02 : f32
    %78 = vector.broadcast %cst_32 : f32 to vector<32x1xf32>
    %79 = arith.mulf %77, %78 : vector<32x1xf32>
    %cst_33 = arith.constant 9.99999974E-6 : f32
    %80 = vector.broadcast %cst_33 : f32 to vector<32x1xf32>
    %81 = arith.addf %79, %80 : vector<32x1xf32>
    %82 = math.rsqrt %81 : vector<32x1xf32>
    %83 = vector.broadcast %82 : vector<32x1xf32> to vector<32x32xf32>
    %84 = arith.mulf %70, %83 : vector<32x32xf32>
    %c0_34 = arith.constant 0 : index
    %c32 = arith.constant 32 : index
    %85 = vector.load %arg19[%c0_34, %c32] : memref<32x96xf32, #tpu.memory_space<vmem>>, vector<32x32xf32>
    tpu.vector_store %arg19[%c0_34, %c32], %84 {strides = array<i32>} : memref<32x96xf32, #tpu.memory_space<vmem>>, vector<32x32xf32>,
    %c0_35 = arith.constant 0 : index
    %c0_36 = arith.constant 0 : index
    %86 = vector.load %arg7[%c0_35, %c0_36] : memref<32x32xf32, #tpu.memory_space<vmem>>, vector<32x32xf32>
    %c0_37 = arith.constant 0 : index
    %c0_38 = arith.constant 0 : index
    %87 = vector.load %arg8[%c0_37, %c0_38] : memref<1x32xf32, #tpu.memory_space<vmem>>, vector<1x32xf32>
    %cst_39 = arith.constant dense<0.000000e+00> : vector<32x32xf32>
    %88 = tpu.matmul %0, %84, %cst_39 {dimension_numbers = #tpu.dot_dimension_numbers<[1], [0], [0], [1], [0, 0, 1, 1], [], []>} : vector<32x32xf32>, vector<32x32xf32>, vector<32x32xf32> -> vector<32x32xf32>
    %cst_40 = arith.constant dense<0.000000e+00> : vector<32x32xf32>
    %89 = tpu.matmul %88, %86, %cst_40 {dimension_numbers = #tpu.dot_dimension_numbers<[1], [0], [0], [1], [0, 0, 1, 1], [], []>} : vector<32x32xf32>, vector<32x32xf32>, vector<32x32xf32> -> vector<32x32xf32>
    %90 = vector.broadcast %87 : vector<1x32xf32> to vector<32x32xf32>
    %91 = arith.addf %89, %90 : vector<32x32xf32>
    %92 = arith.mulf %91, %91 : vector<32x32xf32>
    %cst_41 = arith.constant dense<0.000000e+00> : vector<32xf32>
    %93 = vector.multi_reduction <add>, %92, %cst_41 [1] : vector<32x32xf32> to vector<32xf32>
    %94 = vector.shape_cast %93 : vector<32xf32> to vector<32x1xf32>
    %cst_42 = arith.constant 1.000000e-24 : f32
    %95 = vector.broadcast %cst_42 : f32 to vector<32x1xf32>
    %96 = arith.maximumf %94, %95 : vector<32x1xf32>
    %97 = math.rsqrt %96 : vector<32x1xf32>
    %98 = vector.broadcast %97 : vector<32x1xf32> to vector<32x32xf32>
    %99 = arith.mulf %91, %98 : vector<32x32xf32>
    %c0_43 = arith.constant 0 : index
    %c64 = arith.constant 64 : index
    %100 = vector.load %arg19[%c0_43, %c64] : memref<32x96xf32, #tpu.memory_space<vmem>>, vector<32x32xf32>
    tpu.vector_store %arg19[%c0_43, %c64], %99 {strides = array<i32>} : memref<32x96xf32, #tpu.memory_space<vmem>>, vector<32x32xf32>,
    %c0_44 = arith.constant 0 : index
    %c0_45 = arith.constant 0 : index
    %101 = vector.load %arg19[%c0_44, %c0_45] : memref<32x96xf32, #tpu.memory_space<vmem>>, vector<32x96xf32>
    %c0_46 = arith.constant 0 : index
    %c0_47 = arith.constant 0 : index
    %102 = vector.load %arg2[%c0_46, %c0_47] : memref<32x1xf32, #tpu.memory_space<vmem>>, vector<32x1xf32>
    %103 = vector.broadcast %102 : vector<32x1xf32> to vector<32x96xf32>
    %104 = arith.mulf %101, %103 : vector<32x96xf32>
    %105 = vector.extract_strided_slice %104 {offsets = [0, 0], sizes = [16, 96], strides = [1, 1]} : vector<32x96xf32> to vector<16x96xf32>
    %cst_48 = arith.constant dense<0xFF800000> : vector<96xf32>
    %106 = vector.multi_reduction <maximumf>, %105, %cst_48 [0] : vector<16x96xf32> to vector<96xf32>
    %107 = vector.shape_cast %106 : vector<96xf32> to vector<1x96xf32>
    %108 = vector.extract_strided_slice %104 {offsets = [16, 0], sizes = [16, 96], strides = [1, 1]} : vector<32x96xf32> to vector<16x96xf32>
    %cst_49 = arith.constant dense<0xFF800000> : vector<96xf32>
    %109 = vector.multi_reduction <maximumf>, %108, %cst_49 [0] : vector<16x96xf32> to vector<96xf32>
    %110 = vector.shape_cast %109 : vector<96xf32> to vector<1x96xf32>
    %c0_50 = arith.constant 0 : index
    %c0_51 = arith.constant 0 : index
    %c0_52 = arith.constant 0 : index
    %111 = vector.load %arg9[%c0_50, %c0_51, %c0_52] : memref<4x32x32xf32, #tpu.memory_space<vmem>>, vector<1x32x32xf32>
    %112 = vector.shape_cast %111 : vector<1x32x32xf32> to vector<32x32xf32>
    %cst_53 = arith.constant dense<0.000000e+00> : vector<32x96xf32>
    %113 = tpu.matmul %112, %104, %cst_53 {dimension_numbers = #tpu.dot_dimension_numbers<[1], [0], [0], [1], [0, 0, 1, 1], [], []>} : vector<32x32xf32>, vector<32x96xf32>, vector<32x96xf32> -> vector<32x96xf32>
    %c0_54 = arith.constant 0 : index
    %c0_55 = arith.constant 0 : index
    %c0_56 = arith.constant 0 : index
    %114 = vector.load %arg10[%c0_54, %c0_55, %c0_56] : memref<4x96x96xf32, #tpu.memory_space<vmem>>, vector<1x96x96xf32>
    %115 = vector.shape_cast %114 : vector<1x96x96xf32> to vector<96x96xf32>
    %cst_57 = arith.constant dense<0.000000e+00> : vector<32x96xf32>
    %116 = tpu.matmul %113, %115, %cst_57 {dimension_numbers = #tpu.dot_dimension_numbers<[1], [0], [0], [1], [0, 0, 1, 1], [], []>} : vector<32x96xf32>, vector<96x96xf32>, vector<32x96xf32> -> vector<32x96xf32>
    %c1 = arith.constant 1 : index
    %c0_58 = arith.constant 0 : index
    %c0_59 = arith.constant 0 : index
    %117 = vector.load %arg9[%c1, %c0_58, %c0_59] : memref<4x32x32xf32, #tpu.memory_space<vmem>>, vector<1x32x32xf32>
    %118 = vector.shape_cast %117 : vector<1x32x32xf32> to vector<32x32xf32>
    %cst_60 = arith.constant dense<0.000000e+00> : vector<32x96xf32>
    %119 = tpu.matmul %118, %104, %cst_60 {dimension_numbers = #tpu.dot_dimension_numbers<[1], [0], [0], [1], [0, 0, 1, 1], [], []>} : vector<32x32xf32>, vector<32x96xf32>, vector<32x96xf32> -> vector<32x96xf32>
    %c1_61 = arith.constant 1 : index
    %c0_62 = arith.constant 0 : index
    %c0_63 = arith.constant 0 : index
    %120 = vector.load %arg10[%c1_61, %c0_62, %c0_63] : memref<4x96x96xf32, #tpu.memory_space<vmem>>, vector<1x96x96xf32>
    %121 = vector.shape_cast %120 : vector<1x96x96xf32> to vector<96x96xf32>
    %cst_64 = arith.constant dense<0.000000e+00> : vector<32x96xf32>
    %122 = tpu.matmul %119, %121, %cst_64 {dimension_numbers = #tpu.dot_dimension_numbers<[1], [0], [0], [1], [0, 0, 1, 1], [], []>} : vector<32x96xf32>, vector<96x96xf32>, vector<32x96xf32> -> vector<32x96xf32>
    %123 = arith.addf %116, %122 : vector<32x96xf32>
    %c2 = arith.constant 2 : index
    %c0_65 = arith.constant 0 : index
    %c0_66 = arith.constant 0 : index
    %124 = vector.load %arg9[%c2, %c0_65, %c0_66] : memref<4x32x32xf32, #tpu.memory_space<vmem>>, vector<1x32x32xf32>
    %125 = vector.shape_cast %124 : vector<1x32x32xf32> to vector<32x32xf32>
    %cst_67 = arith.constant dense<0.000000e+00> : vector<32x96xf32>
    %126 = tpu.matmul %125, %104, %cst_67 {dimension_numbers = #tpu.dot_dimension_numbers<[1], [0], [0], [1], [0, 0, 1, 1], [], []>} : vector<32x32xf32>, vector<32x96xf32>, vector<32x96xf32> -> vector<32x96xf32>
    %c2_68 = arith.constant 2 : index
    %c0_69 = arith.constant 0 : index
    %c0_70 = arith.constant 0 : index
    %127 = vector.load %arg10[%c2_68, %c0_69, %c0_70] : memref<4x96x96xf32, #tpu.memory_space<vmem>>, vector<1x96x96xf32>
    %128 = vector.shape_cast %127 : vector<1x96x96xf32> to vector<96x96xf32>
    %cst_71 = arith.constant dense<0.000000e+00> : vector<32x96xf32>
    %129 = tpu.matmul %126, %128, %cst_71 {dimension_numbers = #tpu.dot_dimension_numbers<[1], [0], [0], [1], [0, 0, 1, 1], [], []>} : vector<32x96xf32>, vector<96x96xf32>, vector<32x96xf32> -> vector<32x96xf32>
    %130 = arith.addf %123, %129 : vector<32x96xf32>
    %c3 = arith.constant 3 : index
    %c0_72 = arith.constant 0 : index
    %c0_73 = arith.constant 0 : index
    %131 = vector.load %arg9[%c3, %c0_72, %c0_73] : memref<4x32x32xf32, #tpu.memory_space<vmem>>, vector<1x32x32xf32>
    %132 = vector.shape_cast %131 : vector<1x32x32xf32> to vector<32x32xf32>
    %cst_74 = arith.constant dense<0.000000e+00> : vector<32x96xf32>
    %133 = tpu.matmul %132, %104, %cst_74 {dimension_numbers = #tpu.dot_dimension_numbers<[1], [0], [0], [1], [0, 0, 1, 1], [], []>} : vector<32x32xf32>, vector<32x96xf32>, vector<32x96xf32> -> vector<32x96xf32>
    %c3_75 = arith.constant 3 : index
    %c0_76 = arith.constant 0 : index
    %c0_77 = arith.constant 0 : index
    %134 = vector.load %arg10[%c3_75, %c0_76, %c0_77] : memref<4x96x96xf32, #tpu.memory_space<vmem>>, vector<1x96x96xf32>
    %135 = vector.shape_cast %134 : vector<1x96x96xf32> to vector<96x96xf32>
    %cst_78 = arith.constant dense<0.000000e+00> : vector<32x96xf32>
    %136 = tpu.matmul %133, %135, %cst_78 {dimension_numbers = #tpu.dot_dimension_numbers<[1], [0], [0], [1], [0, 0, 1, 1], [], []>} : vector<32x96xf32>, vector<96x96xf32>, vector<32x96xf32> -> vector<32x96xf32>
    %137 = arith.addf %130, %136 : vector<32x96xf32>
    %c0_79 = arith.constant 0 : index
    %c0_80 = arith.constant 0 : index
    %138 = vector.load %arg11[%c0_79, %c0_80] : memref<96x16xf32, #tpu.memory_space<vmem>>, vector<96x16xf32>
    %c0_81 = arith.constant 0 : index
    %c0_82 = arith.constant 0 : index
    %139 = vector.load %arg12[%c0_81, %c0_82] : memref<96x16xf32, #tpu.memory_space<vmem>>, vector<96x16xf32>
    %cst_83 = arith.constant 0.000000e+00 : f32
    %140 = vector.broadcast %cst_83 : f32 to vector<96x16xf32>
    %141 = arith.cmpf ogt, %138, %140 : vector<96x16xf32>
    %cst_84 = arith.constant 2.000000e-01 : f32
    %142 = vector.broadcast %cst_84 : f32 to vector<96x16xf32>
    %143 = arith.mulf %142, %138 : vector<96x16xf32>
    %144 = arith.select %141, %138, %143 : vector<96x16xi1>, vector<96x16xf32>
    %cst_85 = arith.constant 0.000000e+00 : f32
    %145 = vector.broadcast %cst_85 : f32 to vector<96x16xf32>
    %146 = arith.cmpf ogt, %139, %145 : vector<96x16xf32>
    %cst_86 = arith.constant -1.000000e+09 : f32
    %147 = vector.broadcast %cst_86 : f32 to vector<96x16xf32>
    %148 = arith.select %146, %144, %147 : vector<96x16xi1>, vector<96x16xf32>
    %cst_87 = arith.constant dense<0xFF800000> : vector<96xf32>
    %149 = vector.multi_reduction <maximumf>, %148, %cst_87 [1] : vector<96x16xf32> to vector<96xf32>
    %150 = vector.shape_cast %149 : vector<96xf32> to vector<96x1xf32>
    %151 = vector.broadcast %150 : vector<96x1xf32> to vector<96x16xf32>
    %152 = arith.subf %148, %151 : vector<96x16xf32>
    %153 = math.exp %152 : vector<96x16xf32>
    %cst_88 = arith.constant dense<0.000000e+00> : vector<96xf32>
    %154 = vector.multi_reduction <add>, %153, %cst_88 [1] : vector<96x16xf32> to vector<96xf32>
    %155 = vector.shape_cast %154 : vector<96xf32> to vector<96x1xf32>
    %156 = tpu.reciprocal %155 {approx = true} : vector<96x1xf32> -> vector<96x1xf32>
    %157 = vector.broadcast %156 : vector<96x1xf32> to vector<96x16xf32>
    %158 = arith.mulf %153, %157 : vector<96x16xf32>
    %159 = tpu.iota {dimensions = array<i32: 1>} : vector<1x96xi32>
    %c0_i32 = arith.constant 0 : i32
    %160 = vector.broadcast %c0_i32 : i32 to vector<1x96xi32>
    %161 = arith.cmpi sge, %159, %160 : vector<1x96xi32>
    %c32_i32 = arith.constant 32 : i32
    %162 = vector.broadcast %c32_i32 : i32 to vector<1x96xi32>
    %163 = arith.cmpi slt, %159, %162 : vector<1x96xi32>
    %164 = arith.andi %161, %163 : vector<1x96xi1>
    %165 = arith.extui %164 : vector<1x96xi1> to vector<1x96xi32>
    %166 = arith.sitofp %165 : vector<1x96xi32> to vector<1x96xf32>
    %c32_i32_89 = arith.constant 32 : i32
    %167 = vector.broadcast %c32_i32_89 : i32 to vector<1x96xi32>
    %168 = arith.cmpi sge, %159, %167 : vector<1x96xi32>
    %c64_i32 = arith.constant 64 : i32
    %169 = vector.broadcast %c64_i32 : i32 to vector<1x96xi32>
    %170 = arith.cmpi slt, %159, %169 : vector<1x96xi32>
    %171 = arith.andi %168, %170 : vector<1x96xi1>
    %172 = arith.extui %171 : vector<1x96xi1> to vector<1x96xi32>
    %173 = arith.sitofp %172 : vector<1x96xi32> to vector<1x96xf32>
    %c64_i32_90 = arith.constant 64 : i32
    %174 = vector.broadcast %c64_i32_90 : i32 to vector<1x96xi32>
    %175 = arith.cmpi sge, %159, %174 : vector<1x96xi32>
    %c96_i32 = arith.constant 96 : i32
    %176 = vector.broadcast %c96_i32 : i32 to vector<1x96xi32>
    %177 = arith.cmpi slt, %159, %176 : vector<1x96xi32>
    %178 = arith.andi %175, %177 : vector<1x96xi1>
    %179 = arith.extui %178 : vector<1x96xi1> to vector<1x96xi32>
    %180 = arith.sitofp %179 : vector<1x96xi32> to vector<1x96xf32>
    %c0_91 = arith.constant 0 : index
    %c0_92 = arith.constant 0 : index
    %181 = vector.load %arg13[%c0_91, %c0_92] : memref<32x1xf32, #tpu.memory_space<vmem>>, vector<32x1xf32>
    %182 = vector.extract_strided_slice %137 {offsets = [0, 0], sizes = [16, 96], strides = [1, 1]} : vector<32x96xf32> to vector<16x96xf32>
    %183 = vector.extract_strided_slice %158 {offsets = [0, 0], sizes = [16, 16], strides = [1, 1]} : vector<96x16xf32> to vector<16x16xf32>
    %184 = vector.broadcast %166 : vector<1x96xf32> to vector<16x96xf32>
    %185 = arith.mulf %182, %184 : vector<16x96xf32>
    %cst_93 = arith.constant dense<0.000000e+00> : vector<16x96xf32>
    %186 = tpu.matmul %183, %185, %cst_93 {dimension_numbers = #tpu.dot_dimension_numbers<[1], [0], [0], [1], [0, 0, 1, 1], [], []>} : vector<16x16xf32>, vector<16x96xf32>, vector<16x96xf32> -> vector<16x96xf32>
    %187 = vector.extract_strided_slice %158 {offsets = [16, 0], sizes = [16, 16], strides = [1, 1]} : vector<96x16xf32> to vector<16x16xf32>
    %188 = vector.broadcast %173 : vector<1x96xf32> to vector<16x96xf32>
    %189 = arith.mulf %182, %188 : vector<16x96xf32>
    %cst_94 = arith.constant dense<0.000000e+00> : vector<16x96xf32>
    %190 = tpu.matmul %187, %189, %cst_94 {dimension_numbers = #tpu.dot_dimension_numbers<[1], [0], [0], [1], [0, 0, 1, 1], [], []>} : vector<16x16xf32>, vector<16x96xf32>, vector<16x96xf32> -> vector<16x96xf32>
    %191 = arith.addf %186, %190 : vector<16x96xf32>
    %192 = vector.extract_strided_slice %158 {offsets = [32, 0], sizes = [16, 16], strides = [1, 1]} : vector<96x16xf32> to vector<16x16xf32>
    %193 = vector.broadcast %180 : vector<1x96xf32> to vector<16x96xf32>
    %194 = arith.mulf %182, %193 : vector<16x96xf32>
    %cst_95 = arith.constant dense<0.000000e+00> : vector<16x96xf32>
    %195 = tpu.matmul %192, %194, %cst_95 {dimension_numbers = #tpu.dot_dimension_numbers<[1], [0], [0], [1], [0, 0, 1, 1], [], []>} : vector<16x16xf32>, vector<16x96xf32>, vector<16x96xf32> -> vector<16x96xf32>
    %196 = arith.addf %191, %195 : vector<16x96xf32>
    %197 = vector.extract_strided_slice %137 {offsets = [16, 0], sizes = [16, 96], strides = [1, 1]} : vector<32x96xf32> to vector<16x96xf32>
    %198 = vector.extract_strided_slice %158 {offsets = [48, 0], sizes = [16, 16], strides = [1, 1]} : vector<96x16xf32> to vector<16x16xf32>
    %199 = vector.broadcast %166 : vector<1x96xf32> to vector<16x96xf32>
    %200 = arith.mulf %197, %199 : vector<16x96xf32>
    %cst_96 = arith.constant dense<0.000000e+00> : vector<16x96xf32>
    %201 = tpu.matmul %198, %200, %cst_96 {dimension_numbers = #tpu.dot_dimension_numbers<[1], [0], [0], [1], [0, 0, 1, 1], [], []>} : vector<16x16xf32>, vector<16x96xf32>, vector<16x96xf32> -> vector<16x96xf32>
    %202 = vector.extract_strided_slice %158 {offsets = [64, 0], sizes = [16, 16], strides = [1, 1]} : vector<96x16xf32> to vector<16x16xf32>
    %203 = vector.broadcast %173 : vector<1x96xf32> to vector<16x96xf32>
    %204 = arith.mulf %197, %203 : vector<16x96xf32>
    %cst_97 = arith.constant dense<0.000000e+00> : vector<16x96xf32>
    %205 = tpu.matmul %202, %204, %cst_97 {dimension_numbers = #tpu.dot_dimension_numbers<[1], [0], [0], [1], [0, 0, 1, 1], [], []>} : vector<16x16xf32>, vector<16x96xf32>, vector<16x96xf32> -> vector<16x96xf32>
    %206 = arith.addf %201, %205 : vector<16x96xf32>
    %207 = vector.extract_strided_slice %158 {offsets = [80, 0], sizes = [16, 16], strides = [1, 1]} : vector<96x16xf32> to vector<16x16xf32>
    %208 = vector.broadcast %180 : vector<1x96xf32> to vector<16x96xf32>
    %209 = arith.mulf %197, %208 : vector<16x96xf32>
    %cst_98 = arith.constant dense<0.000000e+00> : vector<16x96xf32>
    %210 = tpu.matmul %207, %209, %cst_98 {dimension_numbers = #tpu.dot_dimension_numbers<[1], [0], [0], [1], [0, 0, 1, 1], [], []>} : vector<16x16xf32>, vector<16x96xf32>, vector<16x96xf32> -> vector<16x96xf32>
    %211 = arith.addf %206, %210 : vector<16x96xf32>
    %212 = tpu.concatenate %196, %211 in 0 : vector<16x96xf32>, vector<16x96xf32> -> vector<32x96xf32>
    %213 = vector.broadcast %181 : vector<32x1xf32> to vector<32x96xf32>
    %214 = arith.mulf %212, %213 : vector<32x96xf32>
    %215 = vector.extract_strided_slice %214 {offsets = [0, 0], sizes = [16, 96], strides = [1, 1]} : vector<32x96xf32> to vector<16x96xf32>
    %cst_99 = arith.constant dense<0xFF800000> : vector<96xf32>
    %216 = vector.multi_reduction <maximumf>, %215, %cst_99 [0] : vector<16x96xf32> to vector<96xf32>
    %217 = vector.shape_cast %216 : vector<96xf32> to vector<1x96xf32>
    %218 = vector.extract_strided_slice %214 {offsets = [16, 0], sizes = [16, 96], strides = [1, 1]} : vector<32x96xf32> to vector<16x96xf32>
    %cst_100 = arith.constant dense<0xFF800000> : vector<96xf32>
    %219 = vector.multi_reduction <maximumf>, %218, %cst_100 [0] : vector<16x96xf32> to vector<96xf32>
    %220 = vector.shape_cast %219 : vector<96xf32> to vector<1x96xf32>
    %c0_101 = arith.constant 0 : index
    %c0_102 = arith.constant 0 : index
    %221 = vector.load %arg14[%c0_101, %c0_102] : memref<192x50xf32, #tpu.memory_space<vmem>>, vector<96x50xf32>
    %c96 = arith.constant 96 : index
    %c0_103 = arith.constant 0 : index
    %222 = vector.load %arg14[%c96, %c0_103] : memref<192x50xf32, #tpu.memory_space<vmem>>, vector<96x50xf32>
    %c0_104 = arith.constant 0 : index
    %c0_105 = arith.constant 0 : index
    %223 = vector.load %arg15[%c0_104, %c0_105] : memref<1x50xf32, #tpu.memory_space<vmem>>, vector<1x50xf32>
    %c0_106 = arith.constant 0 : index
    %c0_107 = arith.constant 0 : index
    %224 = vector.load %arg16[%c0_106, %c0_107] : memref<50x6xf32, #tpu.memory_space<vmem>>, vector<50x6xf32>
    %c0_108 = arith.constant 0 : index
    %c0_109 = arith.constant 0 : index
    %225 = vector.load %arg17[%c0_108, %c0_109] : memref<1x6xf32, #tpu.memory_space<vmem>>, vector<1x6xf32>
    %cst_110 = arith.constant dense<0.000000e+00> : vector<1x50xf32>
    %226 = tpu.matmul %107, %221, %cst_110 {dimension_numbers = #tpu.dot_dimension_numbers<[1], [0], [0], [1], [0, 0, 1, 1], [], []>} : vector<1x96xf32>, vector<96x50xf32>, vector<1x50xf32> -> vector<1x50xf32>
    %227 = arith.addf %223, %226 : vector<1x50xf32>
    %cst_111 = arith.constant dense<0.000000e+00> : vector<1x50xf32>
    %228 = tpu.matmul %217, %222, %cst_111 {dimension_numbers = #tpu.dot_dimension_numbers<[1], [0], [0], [1], [0, 0, 1, 1], [], []>} : vector<1x96xf32>, vector<96x50xf32>, vector<1x50xf32> -> vector<1x50xf32>
    %229 = arith.addf %227, %228 : vector<1x50xf32>
    %cst_112 = arith.constant 0.000000e+00 : f32
    %230 = vector.broadcast %cst_112 : f32 to vector<1x50xf32>
    %231 = arith.maximumf %229, %230 : vector<1x50xf32>
    %cst_113 = arith.constant dense<0.000000e+00> : vector<1x6xf32>
    %232 = tpu.matmul %231, %224, %cst_113 {dimension_numbers = #tpu.dot_dimension_numbers<[1], [0], [0], [1], [0, 0, 1, 1], [], []>} : vector<1x50xf32>, vector<50x6xf32>, vector<1x6xf32> -> vector<1x6xf32>
    %233 = arith.addf %232, %225 : vector<1x6xf32>
    %c0_114 = arith.constant 0 : index
    %c0_115 = arith.constant 0 : index
    %234 = vector.load %arg18[%c0_114, %c0_115] : memref<2x6xf32, #tpu.memory_space<vmem>>, vector<1x6xf32>
    tpu.vector_store %arg18[%c0_114, %c0_115], %233 {strides = array<i32>} : memref<2x6xf32, #tpu.memory_space<vmem>>, vector<1x6xf32>,
    %cst_116 = arith.constant dense<0.000000e+00> : vector<1x50xf32>
    %235 = tpu.matmul %110, %221, %cst_116 {dimension_numbers = #tpu.dot_dimension_numbers<[1], [0], [0], [1], [0, 0, 1, 1], [], []>} : vector<1x96xf32>, vector<96x50xf32>, vector<1x50xf32> -> vector<1x50xf32>
    %236 = arith.addf %223, %235 : vector<1x50xf32>
    %cst_117 = arith.constant dense<0.000000e+00> : vector<1x50xf32>
    %237 = tpu.matmul %220, %222, %cst_117 {dimension_numbers = #tpu.dot_dimension_numbers<[1], [0], [0], [1], [0, 0, 1, 1], [], []>} : vector<1x96xf32>, vector<96x50xf32>, vector<1x50xf32> -> vector<1x50xf32>
    %238 = arith.addf %236, %237 : vector<1x50xf32>
    %cst_118 = arith.constant 0.000000e+00 : f32
    %239 = vector.broadcast %cst_118 : f32 to vector<1x50xf32>
    %240 = arith.maximumf %238, %239 : vector<1x50xf32>
    %cst_119 = arith.constant dense<0.000000e+00> : vector<1x6xf32>
    %241 = tpu.matmul %240, %224, %cst_119 {dimension_numbers = #tpu.dot_dimension_numbers<[1], [0], [0], [1], [0, 0, 1, 1], [], []>} : vector<1x50xf32>, vector<50x6xf32>, vector<1x6xf32> -> vector<1x6xf32>
    %242 = arith.addf %241, %225 : vector<1x6xf32>
    %c1_120 = arith.constant 1 : index
    %c0_121 = arith.constant 0 : index
    %243 = vector.load %arg18[%c1_120, %c0_121] : memref<2x6xf32, #tpu.memory_space<vmem>>, vector<1x6xf32>
    tpu.vector_store %arg18[%c1_120, %c0_121], %242 {strides = array<i32>} : memref<2x6xf32, #tpu.memory_space<vmem>>, vector<1x6xf32>,
    return
  }
}

</mosaic_0001>

<llo_original>
// kernel: edgefeat_gat_svd_encoder_forward.1
$region0: #{edgefeat_gat_svd_encoder_forward.1}
  #allocation0 [shape = 'u32[]', space=smem, size = 0x4, offset = 0x4, fixed_abs, tag = 'smem constant byte address 0x4 - core index']
  #allocation1 [shape = 'u32[144,128]{1,0:T(1,128)}', space=vmem, size = 0x12000, scoped, tag = 'internal scratch']
  #allocation2 [shape = 'f32[32,96]{1,0:T(8,128)}', space=vmem, size = 0x4000, scoped, tag = 'scratch operand']
  %s0 = inlined_call_operand.vmem [shape: f32[32,4], index: 0, kind: input, shape index: {}]
  %s1 = inlined_call_operand.vmem [shape: f32[32,32], index: 1, kind: input, shape index: {}]
  %s2 = inlined_call_operand.vmem [shape: f32[32,1], index: 2, kind: input, shape index: {}]
  %s3 = inlined_call_operand.vmem [shape: f32[4,32], index: 3, kind: input, shape index: {}]
  %s4 = inlined_call_operand.vmem [shape: f32[1,32], index: 4, kind: input, shape index: {}]
  %s5 = inlined_call_operand.vmem [shape: f32[1,32,32], index: 5, kind: input, shape index: {}]
  %s6 = inlined_call_operand.vmem [shape: f32[1,1,32], index: 6, kind: input, shape index: {}]
  %s7 = inlined_call_operand.vmem [shape: f32[32,32], index: 7, kind: input, shape index: {}]
  %s8 = inlined_call_operand.vmem [shape: f32[1,32], index: 8, kind: input, shape index: {}]
  %s9 = inlined_call_operand.vmem [shape: f32[4,32,32], index: 9, kind: input, shape index: {}]
  %s10 = inlined_call_operand.vmem [shape: f32[4,96,96], index: 10, kind: input, shape index: {}]
  %s11 = inlined_call_operand.vmem [shape: f32[96,16], index: 11, kind: input, shape index: {}]
  %s12 = inlined_call_operand.vmem [shape: f32[96,16], index: 12, kind: input, shape index: {}]
  %s13 = inlined_call_operand.vmem [shape: f32[32,1], index: 13, kind: input, shape index: {}]
  %s14 = inlined_call_operand.vmem [shape: f32[192,50], index: 14, kind: input, shape index: {}]
  %s15 = inlined_call_operand.vmem [shape: f32[1,50], index: 15, kind: input, shape index: {}]
  %s16 = inlined_call_operand.vmem [shape: f32[50,6], index: 16, kind: input, shape index: {}]
  %s17 = inlined_call_operand.vmem [shape: f32[1,6], index: 17, kind: input, shape index: {}]
  %s18 = inlined_call_operand.hbm [shape: f32[2,6], index: 18, kind: output, shape index: {}]
  %s19 = sld [smem:[#allocation0]]
  $region82: #{edgefeat_gat_svd_encoder_forward.1} parent=0
    _
  %s21 = ssub.s32 1, %s19
  %s22 = scalar_select 0, %s21, %s19
  $region1: #{edgefeat_gat_svd_encoder_forward.1} parent=0
    #allocation3 [shape = 'u8[1024]{0}', space=vmem, size = 0x400, scoped, tag = 'output window, operand 0, single buffered']
    #allocation4 [shape = 's32[1]{0}', space=sflag, size = 0x4, scoped, tag = 'scoped memory for edgefeat_gat_svd_encoder_forward.1']
    %23 = vsyncpa [#allocation4], 0
    // Predicated region
    $region2: #{edgefeat_gat_svd_encoder_forward.1} parent=1 // pred_check
      _
    $region3: #{edgefeat_gat_svd_encoder_forward.1} parent=1 // pred_check_branch
      %25 = sbr.rel (0) target = $region5
    $region4: #{edgefeat_gat_svd_encoder_forward.1} parent=1 // pred_region
      _
    $region5: #{edgefeat_gat_svd_encoder_forward.1} parent=1 // pred_fallthru
      _
    // Predicated region
    $region6: #{edgefeat_gat_svd_encoder_forward.1} parent=1 // pred_check
      _
    $region7: #{edgefeat_gat_svd_encoder_forward.1} parent=1 // pred_check_branch
      %27 = sbr.rel (0) target = $region9
    $region8: #{edgefeat_gat_svd_encoder_forward.1} parent=1 // pred_region
      _
    $region9: #{edgefeat_gat_svd_encoder_forward.1} parent=1 // pred_fallthru
      _
    // Predicated region
    $region10: #{edgefeat_gat_svd_encoder_forward.1} parent=1 // pred_check
      _
    $region11: #{edgefeat_gat_svd_encoder_forward.1} parent=1 // pred_check_branch
      %29 = sbr.rel (0) target = $region13
    $region12: #{edgefeat_gat_svd_encoder_forward.1} parent=1 // pred_region
      _
    $region13: #{edgefeat_gat_svd_encoder_forward.1} parent=1 // pred_fallthru
      _
    // Predicated region
    $region14: #{edgefeat_gat_svd_encoder_forward.1} parent=1 // pred_check
      _
    $region15: #{edgefeat_gat_svd_encoder_forward.1} parent=1 // pred_check_branch
      %31 = sbr.rel (0) target = $region17
    $region16: #{edgefeat_gat_svd_encoder_forward.1} parent=1 // pred_region
      _
    $region17: #{edgefeat_gat_svd_encoder_forward.1} parent=1 // pred_fallthru
      _
    // Predicated region
    $region18: #{edgefeat_gat_svd_encoder_forward.1} parent=1 // pred_check
      _
    $region19: #{edgefeat_gat_svd_encoder_forward.1} parent=1 // pred_check_branch
      %33 = sbr.rel (0) target = $region21
    $region20: #{edgefeat_gat_svd_encoder_forward.1} parent=1 // pred_region
      _
    $region21: #{edgefeat_gat_svd_encoder_forward.1} parent=1 // pred_fallthru
      _
    // Predicated region
    $region22: #{edgefeat_gat_svd_encoder_forward.1} parent=1 // pred_check
      _
    $region23: #{edgefeat_gat_svd_encoder_forward.1} parent=1 // pred_check_branch
      %35 = sbr.rel (0) target = $region25
    $region24: #{edgefeat_gat_svd_encoder_forward.1} parent=1 // pred_region
      _
    $region25: #{edgefeat_gat_svd_encoder_forward.1} parent=1 // pred_fallthru
      _
    // Predicated region
    $region26: #{edgefeat_gat_svd_encoder_forward.1} parent=1 // pred_check
      _
    $region27: #{edgefeat_gat_svd_encoder_forward.1} parent=1 // pred_check_branch
      %37 = sbr.rel (0) target = $region29
    $region28: #{edgefeat_gat_svd_encoder_forward.1} parent=1 // pred_region
      _
    $region29: #{edgefeat_gat_svd_encoder_forward.1} parent=1 // pred_fallthru
      _
    // Predicated region
    $region30: #{edgefeat_gat_svd_encoder_forward.1} parent=1 // pred_check
      _
    $region31: #{edgefeat_gat_svd_encoder_forward.1} parent=1 // pred_check_branch
      %39 = sbr.rel (0) target = $region33
    $region32: #{edgefeat_gat_svd_encoder_forward.1} parent=1 // pred_region
      _
    $region33: #{edgefeat_gat_svd_encoder_forward.1} parent=1 // pred_fallthru
      _
    // Predicated region
    $region34: #{edgefeat_gat_svd_encoder_forward.1} parent=1 // pred_check
      _
    $region35: #{edgefeat_gat_svd_encoder_forward.1} parent=1 // pred_check_branch
      %41 = sbr.rel (0) target = $region37
    $region36: #{edgefeat_gat_svd_encoder_forward.1} parent=1 // pred_region
      _
    $region37: #{edgefeat_gat_svd_encoder_forward.1} parent=1 // pred_fallthru
      _
    // Predicated region
    $region38: #{edgefeat_gat_svd_encoder_forward.1} parent=1 // pred_check
      _
    $region39: #{edgefeat_gat_svd_encoder_forward.1} parent=1 // pred_check_branch
      %43 = sbr.rel (0) target = $region41
    $region40: #{edgefeat_gat_svd_encoder_forward.1} parent=1 // pred_region
      _
    $region41: #{edgefeat_gat_svd_encoder_forward.1} parent=1 // pred_fallthru
      _
    // Predicated region
    $region42: #{edgefeat_gat_svd_encoder_forward.1} parent=1 // pred_check
      _
    $region43: #{edgefeat_gat_svd_encoder_forward.1} parent=1 // pred_check_branch
      %45 = sbr.rel (0) target = $region45
    $region44: #{edgefeat_gat_svd_encoder_forward.1} parent=1 // pred_region
      _
    $region45: #{edgefeat_gat_svd_encoder_forward.1} parent=1 // pred_fallthru
      _
    // Predicated region
    $region46: #{edgefeat_gat_svd_encoder_forward.1} parent=1 // pred_check
      _
    $region47: #{edgefeat_gat_svd_encoder_forward.1} parent=1 // pred_check_branch
      %47 = sbr.rel (0) target = $region49
    $region48: #{edgefeat_gat_svd_encoder_forward.1} parent=1 // pred_region
      _
    $region49: #{edgefeat_gat_svd_encoder_forward.1} parent=1 // pred_fallthru
      _
    // Predicated region
    $region50: #{edgefeat_gat_svd_encoder_forward.1} parent=1 // pred_check
      _
    $region51: #{edgefeat_gat_svd_encoder_forward.1} parent=1 // pred_check_branch
      %49 = sbr.rel (0) target = $region53
    $region52: #{edgefeat_gat_svd_encoder_forward.1} parent=1 // pred_region
      _
    $region53: #{edgefeat_gat_svd_encoder_forward.1} parent=1 // pred_fallthru
      _
    // Predicated region
    $region54: #{edgefeat_gat_svd_encoder_forward.1} parent=1 // pred_check
      _
    $region55: #{edgefeat_gat_svd_encoder_forward.1} parent=1 // pred_check_branch
      %51 = sbr.rel (0) target = $region57
    $region56: #{edgefeat_gat_svd_encoder_forward.1} parent=1 // pred_region
      _
    $region57: #{edgefeat_gat_svd_encoder_forward.1} parent=1 // pred_fallthru
      _
    // Predicated region
    $region58: #{edgefeat_gat_svd_encoder_forward.1} parent=1 // pred_check
      _
    $region59: #{edgefeat_gat_svd_encoder_forward.1} parent=1 // pred_check_branch
      %53 = sbr.rel (0) target = $region61
    $region60: #{edgefeat_gat_svd_encoder_forward.1} parent=1 // pred_region
      _
    $region61: #{edgefeat_gat_svd_encoder_forward.1} parent=1 // pred_fallthru
      _
    // Predicated region
    $region62: #{edgefeat_gat_svd_encoder_forward.1} parent=1 // pred_check
      _
    $region63: #{edgefeat_gat_svd_encoder_forward.1} parent=1 // pred_check_branch
      %55 = sbr.rel (0) target = $region65
    $region64: #{edgefeat_gat_svd_encoder_forward.1} parent=1 // pred_region
      _
    $region65: #{edgefeat_gat_svd_encoder_forward.1} parent=1 // pred_fallthru
      _
    // Predicated region
    $region66: #{edgefeat_gat_svd_encoder_forward.1} parent=1 // pred_check
      _
    $region67: #{edgefeat_gat_svd_encoder_forward.1} parent=1 // pred_check_branch
      %57 = sbr.rel (0) target = $region69
    $region68: #{edgefeat_gat_svd_encoder_forward.1} parent=1 // pred_region
      _
    $region69: #{edgefeat_gat_svd_encoder_forward.1} parent=1 // pred_fallthru
      _
    // Predicated region
    $region70: #{edgefeat_gat_svd_encoder_forward.1} parent=1 // pred_check
      _
    $region71: #{edgefeat_gat_svd_encoder_forward.1} parent=1 // pred_check_branch
      %59 = sbr.rel (0) target = $region73
    $region72: #{edgefeat_gat_svd_encoder_forward.1} parent=1 // pred_region
      _
    $region73: #{edgefeat_gat_svd_encoder_forward.1} parent=1 // pred_fallthru
      _
    %v60 = vld [vmem:[%s1] sm:$0xff]
    %v61 = vld [vmem:[%s1 + $0x8] sm:$0xff]
    %v62 = vld [vmem:[%s1 + $0x10] sm:$0xff]
    %v63 = vld [vmem:[%s1 + $0x18] sm:$0xff]
    %v64 = vld [vmem:[%s0] sm:$0xff]
    %v65 = vld [vmem:[%s0 + $0x8] sm:$0xff]
    %v66 = vld [vmem:[%s0 + $0x10] sm:$0xff]
    %v67 = vld [vmem:[%s0 + $0x18] sm:$0xff]
    %v68 = vld [vmem:[%s3] sm:$0xf]
    %v69 = vld [vmem:[%s4] sm:$0x1]
    %vm70 = vcmask 261120
    %v72 = vsel %vm70, %v60, 0
    %v75 = vsel %vm70, %v61, 0
    %v78 = vsel %vm70, %v62, 0
    %v81 = vsel %vm70, %v63, 0
    %83 = vmatprep.subr.mxu0 0.0
    %84 = vmatpush1.msra.mxu0 0.0
    %85 = vmatprep.subr.mxu0 0.0
    %86 = vmatpush1.msra.mxu0 0.0
    %87 = vmatprep.subr.mxu0 0.0
    %88 = vmatpush1.msra.mxu0 0.0
    %89 = vmatprep.subr.mxu0 0.0
    %90 = vmatpush1.msra.mxu0 0.0
    %91 = vmatprep.subr.mxu0 0.0
    %92 = vmatpush1.msra.mxu0 0.0
    %93 = vmatprep.subr.mxu0 0.0
    %94 = vmatpush1.msra.mxu0 0.0
    %95 = vmatprep.subr.mxu0 0.0
    %96 = vmatpush1.msra.mxu0 0.0
    %97 = vmatprep.subr.mxu0 0.0
    %98 = vmatpush1.msra.mxu0 0.0
    %99 = vmatprep.subr.mxu0 0.0
    %100 = vmatpush1.msra.mxu0 0.0
    %101 = vmatprep.subr.mxu0 0.0
    %102 = vmatpush1.msra.mxu0 0.0
    %103 = vmatprep.subr.mxu0 0.0
    %104 = vmatpush1.msra.mxu0 0.0
    %105 = vmatprep.subr.mxu0 0.0
    %106 = vmatpush1.msra.mxu0 0.0
    %107 = vmatprep.subr.mxu0 0.0
    %108 = vmatpush1.msra.mxu0 %v67
    %109 = vmatprep.subr.mxu0 0.0
    %110 = vmatpush1.msra.mxu0 %v66
    %111 = vmatprep.subr.mxu0 0.0
    %112 = vmatpush1.msra.mxu0 %v65
    %113 = vmatprep.subr.mxu0 0.0
    %114 = vmatpush1.msra.mxu0 %v64
    %115 = vmatprep.subr.mxu0 0.0
    %116 = vmatpush2.msra.mxu0 0.0
    %117 = vmatprep.subr.mxu0 0.0
    %118 = vmatpush2.msra.mxu0 0.0
    %119 = vmatprep.subr.mxu0 0.0
    %120 = vmatpush2.msra.mxu0 0.0
    %121 = vmatprep.subr.mxu0 0.0
    %122 = vmatpush2.msra.mxu0 0.0
    %123 = vmatprep.subr.mxu0 0.0
    %124 = vmatpush2.msra.mxu0 0.0
    %125 = vmatprep.subr.mxu0 0.0
    %126 = vmatpush2.msra.mxu0 0.0
    %127 = vmatprep.subr.mxu0 0.0
    %128 = vmatpush2.msra.mxu0 0.0
    %129 = vmatprep.subr.mxu0 0.0
    %130 = vmatpush2.msra.mxu0 0.0
    %131 = vmatprep.subr.mxu0 0.0
    %132 = vmatpush2.msra.mxu0 0.0
    %133 = vmatprep.subr.mxu0 0.0
    %134 = vmatpush2.msra.mxu0 0.0
    %135 = vmatprep.subr.mxu0 0.0
    %136 = vmatpush2.msra.mxu0 0.0
    %137 = vmatprep.subr.mxu0 0.0
    %138 = vmatpush2.msra.mxu0 0.0
    %139 = vmatprep.subr.mxu0 0.0
    %140 = vmatpush2.msra.mxu0 0.0
    %141 = vmatprep.subr.mxu0 0.0
    %142 = vmatpush2.msra.mxu0 0.0
    %143 = vmatprep.subr.mxu0 0.0
    %144 = vmatpush2.msra.mxu0 0.0
    %145 = vmatprep.subr.mxu0 0.0
    %146 = vmatpush2.msra.mxu0 0.0
    %147 = vmatprep.mubr.f32.mxu0 0.0
    %148 = vmatmul.mubr.f32.gmra.mxu0 %v72
    %v149 = vpop.f32.mrf.mxu0
    %v150 = vadd.f32 0.0, %v149
    %v151 = vpop.f32.mrf.mxu0
    %152 = vmatprep.mubr.f32.mxu0 0.0
    %153 = vmatmul.mubr.f32.gmra.mxu0 %v75
    %v154 = vpop.f32.mrf.mxu0
    %v155 = vadd.f32 0.0, %v154
    %v156 = vpop.f32.mrf.mxu0
    %157 = vmatprep.mubr.f32.mxu0 0.0
    %158 = vmatmul.mubr.f32.gmra.mxu0 %v78
    %v159 = vpop.f32.mrf.mxu0
    %v160 = vadd.f32 0.0, %v159
    %v161 = vpop.f32.mrf.mxu0
    %162 = vmatprep.mubr.f32.mxu0 0.0
    %163 = vmatmul.mubr.f32.gmra.mxu0 %v81
    %v164 = vpop.f32.mrf.mxu0
    %v165 = vadd.f32 0.0, %v164
    %v166 = vpop.f32.mrf.mxu0
    %167 = vdwg.mxu0
    %v169 = vlaneseq
    %v170 = vshrl.u32 %v169, 7
    %v171 = vsub.s32 0, %v170
    %v172 = vrot.slane %v69, %v171
    %vm174 = vcmask 31744
    %v176 = vsel %vm174, %v150, 0
    %v179 = vsel %vm174, %v155, 0
    %v182 = vsel %vm174, %v160, 0
    %v185 = vsel %vm174, %v165, 0
    %vm187 = vcmask 1043456
    %v189 = vsel %vm187, %v68, 0
    %191 = vmatprep.subr.mxu0 0.0
    %192 = vmatpush1.msra.mxu0 0.0
    %193 = vmatprep.subr.mxu0 0.0
    %194 = vmatpush1.msra.mxu0 0.0
    %195 = vmatprep.subr.mxu0 0.0
    %196 = vmatpush1.msra.mxu0 0.0
    %197 = vmatprep.subr.mxu0 0.0
    %198 = vmatpush1.msra.mxu0 0.0
    %199 = vmatprep.subr.mxu0 0.0
    %200 = vmatpush1.msra.mxu0 0.0
    %201 = vmatprep.subr.mxu0 0.0
    %202 = vmatpush1.msra.mxu0 0.0
    %203 = vmatprep.subr.mxu0 0.0
    %204 = vmatpush1.msra.mxu0 0.0
    %205 = vmatprep.subr.mxu0 0.0
    %206 = vmatpush1.msra.mxu0 0.0
    %207 = vmatprep.subr.mxu0 0.0
    %208 = vmatpush1.msra.mxu0 0.0
    %209 = vmatprep.subr.mxu0 0.0
    %210 = vmatpush1.msra.mxu0 0.0
    %211 = vmatprep.subr.mxu0 0.0
    %212 = vmatpush1.msra.mxu0 0.0
    %213 = vmatprep.subr.mxu0 0.0
    %214 = vmatpush1.msra.mxu0 0.0
    %215 = vmatprep.subr.mxu0 0.0
    %216 = vmatpush1.msra.mxu0 0.0
    %217 = vmatprep.subr.mxu0 0.0
    %218 = vmatpush1.msra.mxu0 0.0
    %219 = vmatprep.subr.mxu0 0.0
    %220 = vmatpush1.msra.mxu0 0.0
    %221 = vmatprep.subr.mxu0 0.0
    %222 = vmatpush1.msra.mxu0 %v189
    %223 = vmatprep.subr.mxu0 0.0
    %224 = vmatpush2.msra.mxu0 0.0
    %225 = vmatprep.subr.mxu0 0.0
    %226 = vmatpush2.msra.mxu0 0.0
    %227 = vmatprep.subr.mxu0 0.0
    %228 = vmatpush2.msra.mxu0 0.0
    %229 = vmatprep.subr.mxu0 0.0
    %230 = vmatpush2.msra.mxu0 0.0
    %231 = vmatprep.subr.mxu0 0.0
    %232 = vmatpush2.msra.mxu0 0.0
    %233 = vmatprep.subr.mxu0 0.0
    %234 = vmatpush2.msra.mxu0 0.0
    %235 = vmatprep.subr.mxu0 0.0
    %236 = vmatpush2.msra.mxu0 0.0
    %237 = vmatprep.subr.mxu0 0.0
    %238 = vmatpush2.msra.mxu0 0.0
    %239 = vmatprep.subr.mxu0 0.0
    %240 = vmatpush2.msra.mxu0 0.0
    %241 = vmatprep.subr.mxu0 0.0
    %242 = vmatpush2.msra.mxu0 0.0
    %243 = vmatprep.subr.mxu0 0.0
    %244 = vmatpush2.msra.mxu0 0.0
    %245 = vmatprep.subr.mxu0 0.0
    %246 = vmatpush2.msra.mxu0 0.0
    %247 = vmatprep.subr.mxu0 0.0
    %248 = vmatpush2.msra.mxu0 0.0
    %249 = vmatprep.subr.mxu0 0.0
    %250 = vmatpush2.msra.mxu0 0.0
    %251 = vmatprep.subr.mxu0 0.0
    %252 = vmatpush2.msra.mxu0 0.0
    %253 = vmatprep.subr.mxu0 0.0
    %254 = vmatpush2.msra.mxu0 0.0
    %255 = vmatprep.mubr.f32.mxu0 0.0
    %256 = vmatmul.mubr.f32.gmra.mxu0 %v176
    %v257 = vpop.f32.mrf.mxu0
    %v258 = vadd.f32 %v172, %v257
    %v259 = vpop.f32.mrf.mxu0
    %260 = vmatprep.mubr.f32.mxu0 0.0
    %261 = vmatmul.mubr.f32.gmra.mxu0 %v179
    %v262 = vpop.f32.mrf.mxu0
    %v263 = vadd.f32 %v172, %v262
    %v264 = vpop.f32.mrf.mxu0
    %265 = vmatprep.mubr.f32.mxu0 0.0
    %266 = vmatmul.mubr.f32.gmra.mxu0 %v182
    %v267 = vpop.f32.mrf.mxu0
    %v268 = vadd.f32 %v172, %v267
    %v269 = vpop.f32.mrf.mxu0
    %270 = vmatprep.mubr.f32.mxu0 0.0
    %271 = vmatmul.mubr.f32.gmra.mxu0 %v185
    %v272 = vpop.f32.mrf.mxu0
    %v273 = vadd.f32 %v172, %v272
    %v274 = vpop.f32.mrf.mxu0
    %275 = vdwg.mxu0
    %v276 = vmul.f32 %v258, %v258
    %v277 = vmul.f32 %v263, %v263
    %v278 = vmul.f32 %v268, %v268
    %v279 = vmul.f32 %v273, %v273
    %v280 = vsel %vm70, %v276, 0.0
    %281 = vadd.xlane.f32.xlu0 %v280
    %v282 = vpop.xlane.xlu0 %281
    %v283 = vsel %vm70, %v277, 0.0
    %284 = vadd.xlane.f32.xlu0 %v283
    %v285 = vpop.xlane.xlu0 %284
    %v286 = vsel %vm70, %v278, 0.0
    %287 = vadd.xlane.f32.xlu0 %v286
    %v288 = vpop.xlane.xlu0 %287
    %v289 = vsel %vm70, %v279, 0.0
    %290 = vadd.xlane.f32.xlu0 %v289
    %v291 = vpop.xlane.xlu0 %290
    %v292 = vmax.f32 %v282, 1e-24
    %v293 = vmax.f32 %v285, 1e-24
    %v294 = vmax.f32 %v288, 1e-24
    %v295 = vmax.f32 %v291, 1e-24
    %v296 = vrsqrt.pop %v292
    %v297 = vrsqrt.pop %v293
    %v298 = vrsqrt.pop %v294
    %v299 = vrsqrt.pop %v295
    %v300 = vmul.f32 %v258, %v296
    %v301 = vmul.f32 %v263, %v297
    %v302 = vmul.f32 %v268, %v298
    %v303 = vmul.f32 %v273, %v299
    %v304 = vmax.f32 %v300, 0.0
    %v305 = vmax.f32 %v301, 0.0
    %v306 = vmax.f32 %v302, 0.0
    %v307 = vmax.f32 %v303, 0.0
    %v308 = vsel %vm70, %v304, 0.0
    %309 = vadd.xlane.f32.xlu0 %v308
    %v310 = vpop.xlane.xlu0 %309
    %v311 = vsel %vm70, %v305, 0.0
    %312 = vadd.xlane.f32.xlu0 %v311
    %v313 = vpop.xlane.xlu0 %312
    %v314 = vsel %vm70, %v306, 0.0
    %315 = vadd.xlane.f32.xlu0 %v314
    %v316 = vpop.xlane.xlu0 %315
    %v317 = vsel %vm70, %v307, 0.0
    %318 = vadd.xlane.f32.xlu0 %v317
    %v319 = vpop.xlane.xlu0 %318
    %v320 = vadd.f32 %v310, %v316
    %v321 = vadd.f32 %v313, %v319
    %v322 = vmul.f32 %v320, 0.015625
    %v323 = vmul.f32 %v321, 0.015625
    %325 = vset.pattern.permute.xlu0 0
    %326 = vperm.xlu0 %325, %v322
    %v327 = vpop.permute.xlu0 %326
    %330 = vset.pattern.permute.xlu0 0
    %331 = vperm.xlu0 %330, %v323
    %v332 = vpop.permute.xlu0 %331
    %v334 = vsub.f32 %v304, %v327
    %v335 = vsub.f32 %v305, %v332
    %v336 = vsub.f32 %v306, %v327
    %v337 = vsub.f32 %v307, %v332
    %v338 = vmul.f32 %v334, %v334
    %v339 = vmul.f32 %v335, %v335
    %v340 = vmul.f32 %v336, %v336
    %v341 = vmul.f32 %v337, %v337
    %v342 = vsel %vm70, %v338, 0.0
    %343 = vadd.xlane.f32.xlu0 %v342
    %v344 = vpop.xlane.xlu0 %343
    %v345 = vsel %vm70, %v339, 0.0
    %346 = vadd.xlane.f32.xlu0 %v345
    %v347 = vpop.xlane.xlu0 %346
    %v348 = vsel %vm70, %v340, 0.0
    %349 = vadd.xlane.f32.xlu0 %v348
    %v350 = vpop.xlane.xlu0 %349
    %v351 = vsel %vm70, %v341, 0.0
    %352 = vadd.xlane.f32.xlu0 %v351
    %v353 = vpop.xlane.xlu0 %352
    %v354 = vadd.f32 %v344, %v350
    %v355 = vadd.f32 %v347, %v353
    %v356 = vmul.f32 %v354, 0.015625
    %v357 = vmul.f32 %v355, 0.015625
    %v358 = vadd.f32 %v356, 1e-05
    %v359 = vadd.f32 %v357, 1e-05
    %v360 = vrsqrt.pop %v358
    %v361 = vrsqrt.pop %v359
    %363 = vset.pattern.permute.xlu0 0
    %364 = vperm.xlu0 %363, %v360
    %v365 = vpop.permute.xlu0 %364
    %368 = vset.pattern.permute.xlu0 0
    %369 = vperm.xlu0 %368, %v361
    %v370 = vpop.permute.xlu0 %369
    %v372 = vmul.f32 %v334, %v365
    %v373 = vmul.f32 %v335, %v370
    %v374 = vmul.f32 %v336, %v365
    %v375 = vmul.f32 %v337, %v370
    %376 = vst.msk [vmem:[#allocation2] sm:$0xff] %vm70, %v372
    %377 = vst.msk [vmem:[#allocation2 + $0x8] sm:$0xff] %vm70, %v373
    %378 = vst.msk [vmem:[#allocation2 + $0x10] sm:$0xff] %vm70, %v374
    %379 = vst.msk [vmem:[#allocation2 + $0x18] sm:$0xff] %vm70, %v375
    %v380 = vld [vmem:[%s5] sm:$0xff]
    %v381 = vld [vmem:[%s5 + $0x8] sm:$0xff]
    %v382 = vld [vmem:[%s5 + $0x10] sm:$0xff]
    %v383 = vld [vmem:[%s5 + $0x18] sm:$0xff]
    %v384 = vld [vmem:[%s6] sm:$0x1]
    %385 = vmatprep.subr.mxu0 0.0
    %386 = vmatpush1.msra.mxu0 0.0
    %387 = vmatprep.subr.mxu0 0.0
    %388 = vmatpush1.msra.mxu0 0.0
    %389 = vmatprep.subr.mxu0 0.0
    %390 = vmatpush1.msra.mxu0 0.0
    %391 = vmatprep.subr.mxu0 0.0
    %392 = vmatpush1.msra.mxu0 0.0
    %393 = vmatprep.subr.mxu0 0.0
    %394 = vmatpush1.msra.mxu0 0.0
    %395 = vmatprep.subr.mxu0 0.0
    %396 = vmatpush1.msra.mxu0 0.0
    %397 = vmatprep.subr.mxu0 0.0
    %398 = vmatpush1.msra.mxu0 0.0
    %399 = vmatprep.subr.mxu0 0.0
    %400 = vmatpush1.msra.mxu0 0.0
    %401 = vmatprep.subr.mxu0 0.0
    %402 = vmatpush1.msra.mxu0 0.0
    %403 = vmatprep.subr.mxu0 0.0
    %404 = vmatpush1.msra.mxu0 0.0
    %405 = vmatprep.subr.mxu0 0.0
    %406 = vmatpush1.msra.mxu0 0.0
    %407 = vmatprep.subr.mxu0 0.0
    %408 = vmatpush1.msra.mxu0 0.0
    %409 = vmatprep.subr.mxu0 0.0
    %410 = vmatpush1.msra.mxu0 %v375
    %411 = vmatprep.subr.mxu0 0.0
    %412 = vmatpush1.msra.mxu0 %v374
    %413 = vmatprep.subr.mxu0 0.0
    %414 = vmatpush1.msra.mxu0 %v373
    %415 = vmatprep.subr.mxu0 0.0
    %416 = vmatpush1.msra.mxu0 %v372
    %417 = vmatprep.subr.mxu0 0.0
    %418 = vmatpush2.msra.mxu0 0.0
    %419 = vmatprep.subr.mxu0 0.0
    %420 = vmatpush2.msra.mxu0 0.0
    %421 = vmatprep.subr.mxu0 0.0
    %422 = vmatpush2.msra.mxu0 0.0
    %423 = vmatprep.subr.mxu0 0.0
    %424 = vmatpush2.msra.mxu0 0.0
    %425 = vmatprep.subr.mxu0 0.0
    %426 = vmatpush2.msra.mxu0 0.0
    %427 = vmatprep.subr.mxu0 0.0
    %428 = vmatpush2.msra.mxu0 0.0
    %429 = vmatprep.subr.mxu0 0.0
    %430 = vmatpush2.msra.mxu0 0.0
    %431 = vmatprep.subr.mxu0 0.0
    %432 = vmatpush2.msra.mxu0 0.0
    %433 = vmatprep.subr.mxu0 0.0
    %434 = vmatpush2.msra.mxu0 0.0
    %435 = vmatprep.subr.mxu0 0.0
    %436 = vmatpush2.msra.mxu0 0.0
    %437 = vmatprep.subr.mxu0 0.0
    %438 = vmatpush2.msra.mxu0 0.0
    %439 = vmatprep.subr.mxu0 0.0
    %440 = vmatpush2.msra.mxu0 0.0
    %441 = vmatprep.subr.mxu0 0.0
    %442 = vmatpush2.msra.mxu0 0.0
    %443 = vmatprep.subr.mxu0 0.0
    %444 = vmatpush2.msra.mxu0 0.0
    %445 = vmatprep.subr.mxu0 0.0
    %446 = vmatpush2.msra.mxu0 0.0
    %447 = vmatprep.subr.mxu0 0.0
    %448 = vmatpush2.msra.mxu0 0.0
    %449 = vmatprep.mubr.f32.mxu0 0.0
    %450 = vmatmul.mubr.f32.gmra.mxu0 %v72
    %v451 = vpop.f32.mrf.mxu0
    %v452 = vadd.f32 0.0, %v451
    %v453 = vpop.f32.mrf.mxu0
    %454 = vmatprep.mubr.f32.mxu0 0.0
    %455 = vmatmul.mubr.f32.gmra.mxu0 %v75
    %v456 = vpop.f32.mrf.mxu0
    %v457 = vadd.f32 0.0, %v456
    %v458 = vpop.f32.mrf.mxu0
    %459 = vmatprep.mubr.f32.mxu0 0.0
    %460 = vmatmul.mubr.f32.gmra.mxu0 %v78
    %v461 = vpop.f32.mrf.mxu0
    %v462 = vadd.f32 0.0, %v461
    %v463 = vpop.f32.mrf.mxu0
    %464 = vmatprep.mubr.f32.mxu0 0.0
    %465 = vmatmul.mubr.f32.gmra.mxu0 %v81
    %v466 = vpop.f32.mrf.mxu0
    %v467 = vadd.f32 0.0, %v466
    %v468 = vpop.f32.mrf.mxu0
    %469 = vdwg.mxu0
    %v471 = vlaneseq
    %v472 = vshrl.u32 %v471, 7
    %v473 = vsub.s32 0, %v472
    %v474 = vrot.slane %v384, %v473
    %v477 = vsel %vm70, %v452, 0
    %v480 = vsel %vm70, %v457, 0
    %v483 = vsel %vm70, %v462, 0
    %v486 = vsel %vm70, %v467, 0
    %488 = vmatprep.subr.mxu0 0.0
    %489 = vmatpush1.msra.mxu0 0.0
    %490 = vmatprep.subr.mxu0 0.0
    %491 = vmatpush1.msra.mxu0 0.0
    %492 = vmatprep.subr.mxu0 0.0
    %493 = vmatpush1.msra.mxu0 0.0
    %494 = vmatprep.subr.mxu0 0.0
    %495 = vmatpush1.msra.mxu0 0.0
    %496 = vmatprep.subr.mxu0 0.0
    %497 = vmatpush1.msra.mxu0 0.0
    %498 = vmatprep.subr.mxu0 0.0
    %499 = vmatpush1.msra.mxu0 0.0
    %500 = vmatprep.subr.mxu0 0.0
    %501 = vmatpush1.msra.mxu0 0.0
    %502 = vmatprep.subr.mxu0 0.0
    %503 = vmatpush1.msra.mxu0 0.0
    %504 = vmatprep.subr.mxu0 0.0
    %505 = vmatpush1.msra.mxu0 0.0
    %506 = vmatprep.subr.mxu0 0.0
    %507 = vmatpush1.msra.mxu0 0.0
    %508 = vmatprep.subr.mxu0 0.0
    %509 = vmatpush1.msra.mxu0 0.0
    %510 = vmatprep.subr.mxu0 0.0
    %511 = vmatpush1.msra.mxu0 0.0
    %512 = vmatprep.subr.mxu0 0.0
    %513 = vmatpush1.msra.mxu0 %v383
    %514 = vmatprep.subr.mxu0 0.0
    %515 = vmatpush1.msra.mxu0 %v382
    %516 = vmatprep.subr.mxu0 0.0
    %517 = vmatpush1.msra.mxu0 %v381
    %518 = vmatprep.subr.mxu0 0.0
    %519 = vmatpush1.msra.mxu0 %v380
    %520 = vmatprep.subr.mxu0 0.0
    %521 = vmatpush2.msra.mxu0 0.0
    %522 = vmatprep.subr.mxu0 0.0
    %523 = vmatpush2.msra.mxu0 0.0
    %524 = vmatprep.subr.mxu0 0.0
    %525 = vmatpush2.msra.mxu0 0.0
    %526 = vmatprep.subr.mxu0 0.0
    %527 = vmatpush2.msra.mxu0 0.0
    %528 = vmatprep.subr.mxu0 0.0
    %529 = vmatpush2.msra.mxu0 0.0
    %530 = vmatprep.subr.mxu0 0.0
    %531 = vmatpush2.msra.mxu0 0.0
    %532 = vmatprep.subr.mxu0 0.0
    %533 = vmatpush2.msra.mxu0 0.0
    %534 = vmatprep.subr.mxu0 0.0
    %535 = vmatpush2.msra.mxu0 0.0
    %536 = vmatprep.subr.mxu0 0.0
    %537 = vmatpush2.msra.mxu0 0.0
    %538 = vmatprep.subr.mxu0 0.0
    %539 = vmatpush2.msra.mxu0 0.0
    %540 = vmatprep.subr.mxu0 0.0
    %541 = vmatpush2.msra.mxu0 0.0
    %542 = vmatprep.subr.mxu0 0.0
    %543 = vmatpush2.msra.mxu0 0.0
    %544 = vmatprep.subr.mxu0 0.0
    %545 = vmatpush2.msra.mxu0 0.0
    %546 = vmatprep.subr.mxu0 0.0
    %547 = vmatpush2.msra.mxu0 0.0
    %548 = vmatprep.subr.mxu0 0.0
    %549 = vmatpush2.msra.mxu0 0.0
    %550 = vmatprep.subr.mxu0 0.0
    %551 = vmatpush2.msra.mxu0 0.0
    %552 = vmatprep.mubr.f32.mxu0 0.0
    %553 = vmatmul.mubr.f32.gmra.mxu0 %v477
    %v554 = vpop.f32.mrf.mxu0
    %v555 = vadd.f32 %v474, %v554
    %v556 = vpop.f32.mrf.mxu0
    %557 = vmatprep.mubr.f32.mxu0 0.0
    %558 = vmatmul.mubr.f32.gmra.mxu0 %v480
    %v559 = vpop.f32.mrf.mxu0
    %v560 = vadd.f32 %v474, %v559
    %v561 = vpop.f32.mrf.mxu0
    %562 = vmatprep.mubr.f32.mxu0 0.0
    %563 = vmatmul.mubr.f32.gmra.mxu0 %v483
    %v564 = vpop.f32.mrf.mxu0
    %v565 = vadd.f32 %v474, %v564
    %v566 = vpop.f32.mrf.mxu0
    %567 = vmatprep.mubr.f32.mxu0 0.0
    %568 = vmatmul.mubr.f32.gmra.mxu0 %v486
    %v569 = vpop.f32.mrf.mxu0
    %v570 = vadd.f32 %v474, %v569
    %v571 = vpop.f32.mrf.mxu0
    %572 = vdwg.mxu0
    %v573 = vmul.f32 %v555, %v555
    %v574 = vmul.f32 %v560, %v560
    %v575 = vmul.f32 %v565, %v565
    %v576 = vmul.f32 %v570, %v570
    %v577 = vsel %vm70, %v573, 0.0
    %578 = vadd.xlane.f32.xlu0 %v577
    %v579 = vpop.xlane.xlu0 %578
    %v580 = vsel %vm70, %v574, 0.0
    %581 = vadd.xlane.f32.xlu0 %v580
    %v582 = vpop.xlane.xlu0 %581
    %v583 = vsel %vm70, %v575, 0.0
    %584 = vadd.xlane.f32.xlu0 %v583
    %v585 = vpop.xlane.xlu0 %584
    %v586 = vsel %vm70, %v576, 0.0
    %587 = vadd.xlane.f32.xlu0 %v586
    %v588 = vpop.xlane.xlu0 %587
    %v589 = vmax.f32 %v579, 1e-24
    %v590 = vmax.f32 %v582, 1e-24
    %v591 = vmax.f32 %v585, 1e-24
    %v592 = vmax.f32 %v588, 1e-24
    %v593 = vrsqrt.pop %v589
    %v594 = vrsqrt.pop %v590
    %v595 = vrsqrt.pop %v591
    %v596 = vrsqrt.pop %v592
    %v597 = vmul.f32 %v555, %v593
    %v598 = vmul.f32 %v560, %v594
    %v599 = vmul.f32 %v565, %v595
    %v600 = vmul.f32 %v570, %v596
    %v601 = vmax.f32 %v597, 0.0
    %v602 = vmax.f32 %v598, 0.0
    %v603 = vmax.f32 %v599, 0.0
    %v604 = vmax.f32 %v600, 0.0
    %v605 = vsel %vm70, %v601, 0.0
    %606 = vadd.xlane.f32.xlu0 %v605
    %v607 = vpop.xlane.xlu0 %606
    %v608 = vsel %vm70, %v602, 0.0
    %609 = vadd.xlane.f32.xlu0 %v608
    %v610 = vpop.xlane.xlu0 %609
    %v611 = vsel %vm70, %v603, 0.0
    %612 = vadd.xlane.f32.xlu0 %v611
    %v613 = vpop.xlane.xlu0 %612
    %v614 = vsel %vm70, %v604, 0.0
    %615 = vadd.xlane.f32.xlu0 %v614
    %v616 = vpop.xlane.xlu0 %615
    %v617 = vadd.f32 %v607, %v613
    %v618 = vadd.f32 %v610, %v616
    %v619 = vmul.f32 %v617, 0.015625
    %v620 = vmul.f32 %v618, 0.015625
    %622 = vset.pattern.permute.xlu0 0
    %623 = vperm.xlu0 %622, %v619
    %v624 = vpop.permute.xlu0 %623
    %627 = vset.pattern.permute.xlu0 0
    %628 = vperm.xlu0 %627, %v620
    %v629 = vpop.permute.xlu0 %628
    %v631 = vsub.f32 %v601, %v624
    %v632 = vsub.f32 %v602, %v629
    %v633 = vsub.f32 %v603, %v624
    %v634 = vsub.f32 %v604, %v629
    %v635 = vmul.f32 %v631, %v631
    %v636 = vmul.f32 %v632, %v632
    %v637 = vmul.f32 %v633, %v633
    %v638 = vmul.f32 %v634, %v634
    %v639 = vsel %vm70, %v635, 0.0
    %640 = vadd.xlane.f32.xlu0 %v639
    %v641 = vpop.xlane.xlu0 %640
    %v642 = vsel %vm70, %v636, 0.0
    %643 = vadd.xlane.f32.xlu0 %v642
    %v644 = vpop.xlane.xlu0 %643
    %v645 = vsel %vm70, %v637, 0.0
    %646 = vadd.xlane.f32.xlu0 %v645
    %v647 = vpop.xlane.xlu0 %646
    %v648 = vsel %vm70, %v638, 0.0
    %649 = vadd.xlane.f32.xlu0 %v648
    %v650 = vpop.xlane.xlu0 %649
    %v651 = vadd.f32 %v641, %v647
    %v652 = vadd.f32 %v644, %v650
    %v653 = vmul.f32 %v651, 0.015625
    %v654 = vmul.f32 %v652, 0.015625
    %v655 = vadd.f32 %v653, 1e-05
    %v656 = vadd.f32 %v654, 1e-05
    %v657 = vrsqrt.pop %v655
    %v658 = vrsqrt.pop %v656
    %660 = vset.pattern.permute.xlu0 0
    %661 = vperm.xlu0 %660, %v657
    %v662 = vpop.permute.xlu0 %661
    %665 = vset.pattern.permute.xlu0 0
    %666 = vperm.xlu0 %665, %v658
    %v667 = vpop.permute.xlu0 %666
    %v669 = vmul.f32 %v631, %v662
    %v670 = vmul.f32 %v632, %v667
    %v671 = vmul.f32 %v633, %v662
    %v672 = vmul.f32 %v634, %v667
    %677 = vrot.lane.b32.xlu0 %v669, 32
    %v678 = vpop.permute.xlu0 %677
    %679 = vrot.lane.b32.xlu0 %v670, 32
    %v680 = vpop.permute.xlu0 %679
    %681 = vrot.lane.b32.xlu0 %v671, 32
    %v682 = vpop.permute.xlu0 %681
    %683 = vrot.lane.b32.xlu0 %v672, 32
    %v684 = vpop.permute.xlu0 %683
    %vm689 = vcmask 523520
    %690 = vst.msk [vmem:[#allocation2] sm:$0xff] %vm689, %v678
    %691 = vst.msk [vmem:[#allocation2 + $0x8] sm:$0xff] %vm689, %v680
    %692 = vst.msk [vmem:[#allocation2 + $0x10] sm:$0xff] %vm689, %v682
    %693 = vst.msk [vmem:[#allocation2 + $0x18] sm:$0xff] %vm689, %v684
    %v694 = vld [vmem:[%s7] sm:$0xff]
    %v695 = vld [vmem:[%s7 + $0x8] sm:$0xff]
    %v696 = vld [vmem:[%s7 + $0x10] sm:$0xff]
    %v697 = vld [vmem:[%s7 + $0x18] sm:$0xff]
    %v698 = vld [vmem:[%s8] sm:$0x1]
    %699 = vmatprep.subr.mxu0 0.0
    %700 = vmatpush1.msra.mxu0 0.0
    %701 = vmatprep.subr.mxu0 0.0
    %702 = vmatpush1.msra.mxu0 0.0
    %703 = vmatprep.subr.mxu0 0.0
    %704 = vmatpush1.msra.mxu0 0.0
    %705 = vmatprep.subr.mxu0 0.0
    %706 = vmatpush1.msra.mxu0 0.0
    %707 = vmatprep.subr.mxu0 0.0
    %708 = vmatpush1.msra.mxu0 0.0
    %709 = vmatprep.subr.mxu0 0.0
    %710 = vmatpush1.msra.mxu0 0.0
    %711 = vmatprep.subr.mxu0 0.0
    %712 = vmatpush1.msra.mxu0 0.0
    %713 = vmatprep.subr.mxu0 0.0
    %714 = vmatpush1.msra.mxu0 0.0
    %715 = vmatprep.subr.mxu0 0.0
    %716 = vmatpush1.msra.mxu0 0.0
    %717 = vmatprep.subr.mxu0 0.0
    %718 = vmatpush1.msra.mxu0 0.0
    %719 = vmatprep.subr.mxu0 0.0
    %720 = vmatpush1.msra.mxu0 0.0
    %721 = vmatprep.subr.mxu0 0.0
    %722 = vmatpush1.msra.mxu0 0.0
    %723 = vmatprep.subr.mxu0 0.0
    %724 = vmatpush1.msra.mxu0 %v672
    %725 = vmatprep.subr.mxu0 0.0
    %726 = vmatpush1.msra.mxu0 %v671
    %727 = vmatprep.subr.mxu0 0.0
    %728 = vmatpush1.msra.mxu0 %v670
    %729 = vmatprep.subr.mxu0 0.0
    %730 = vmatpush1.msra.mxu0 %v669
    %731 = vmatprep.subr.mxu0 0.0
    %732 = vmatpush2.msra.mxu0 0.0
    %733 = vmatprep.subr.mxu0 0.0
    %734 = vmatpush2.msra.mxu0 0.0
    %735 = vmatprep.subr.mxu0 0.0
    %736 = vmatpush2.msra.mxu0 0.0
    %737 = vmatprep.subr.mxu0 0.0
    %738 = vmatpush2.msra.mxu0 0.0
    %739 = vmatprep.subr.mxu0 0.0
    %740 = vmatpush2.msra.mxu0 0.0
    %741 = vmatprep.subr.mxu0 0.0
    %742 = vmatpush2.msra.mxu0 0.0
    %743 = vmatprep.subr.mxu0 0.0
    %744 = vmatpush2.msra.mxu0 0.0
    %745 = vmatprep.subr.mxu0 0.0
    %746 = vmatpush2.msra.mxu0 0.0
    %747 = vmatprep.subr.mxu0 0.0
    %748 = vmatpush2.msra.mxu0 0.0
    %749 = vmatprep.subr.mxu0 0.0
    %750 = vmatpush2.msra.mxu0 0.0
    %751 = vmatprep.subr.mxu0 0.0
    %752 = vmatpush2.msra.mxu0 0.0
    %753 = vmatprep.subr.mxu0 0.0
    %754 = vmatpush2.msra.mxu0 0.0
    %755 = vmatprep.subr.mxu0 0.0
    %756 = vmatpush2.msra.mxu0 0.0
    %757 = vmatprep.subr.mxu0 0.0
    %758 = vmatpush2.msra.mxu0 0.0
    %759 = vmatprep.subr.mxu0 0.0
    %760 = vmatpush2.msra.mxu0 0.0
    %761 = vmatprep.subr.mxu0 0.0
    %762 = vmatpush2.msra.mxu0 0.0
    %763 = vmatprep.mubr.f32.mxu0 0.0
    %764 = vmatmul.mubr.f32.gmra.mxu0 %v72
    %v765 = vpop.f32.mrf.mxu0
    %v766 = vadd.f32 0.0, %v765
    %v767 = vpop.f32.mrf.mxu0
    %768 = vmatprep.mubr.f32.mxu0 0.0
    %769 = vmatmul.mubr.f32.gmra.mxu0 %v75
    %v770 = vpop.f32.mrf.mxu0
    %v771 = vadd.f32 0.0, %v770
    %v772 = vpop.f32.mrf.mxu0
    %773 = vmatprep.mubr.f32.mxu0 0.0
    %774 = vmatmul.mubr.f32.gmra.mxu0 %v78
    %v775 = vpop.f32.mrf.mxu0
    %v776 = vadd.f32 0.0, %v775
    %v777 = vpop.f32.mrf.mxu0
    %778 = vmatprep.mubr.f32.mxu0 0.0
    %779 = vmatmul.mubr.f32.gmra.mxu0 %v81
    %v780 = vpop.f32.mrf.mxu0
    %v781 = vadd.f32 0.0, %v780
    %v782 = vpop.f32.mrf.mxu0
    %783 = vdwg.mxu0
    %v785 = vlaneseq
    %v786 = vshrl.u32 %v785, 7
    %v787 = vsub.s32 0, %v786
    %v788 = vrot.slane %v698, %v787
    %v791 = vsel %vm70, %v766, 0
    %v794 = vsel %vm70, %v771, 0
    %v797 = vsel %vm70, %v776, 0
    %v800 = vsel %vm70, %v781, 0
    %802 = vmatprep.subr.mxu0 0.0
    %803 = vmatpush1.msra.mxu0 0.0
    %804 = vmatprep.subr.mxu0 0.0
    %805 = vmatpush1.msra.mxu0 0.0
    %806 = vmatprep.subr.mxu0 0.0
    %807 = vmatpush1.msra.mxu0 0.0
    %808 = vmatprep.subr.mxu0 0.0
    %809 = vmatpush1.msra.mxu0 0.0
    %810 = vmatprep.subr.mxu0 0.0
    %811 = vmatpush1.msra.mxu0 0.0
    %812 = vmatprep.subr.mxu0 0.0
    %813 = vmatpush1.msra.mxu0 0.0
    %814 = vmatprep.subr.mxu0 0.0
    %815 = vmatpush1.msra.mxu0 0.0
    %816 = vmatprep.subr.mxu0 0.0
    %817 = vmatpush1.msra.mxu0 0.0
    %818 = vmatprep.subr.mxu0 0.0
    %819 = vmatpush1.msra.mxu0 0.0
    %820 = vmatprep.subr.mxu0 0.0
    %821 = vmatpush1.msra.mxu0 0.0
    %822 = vmatprep.subr.mxu0 0.0
    %823 = vmatpush1.msra.mxu0 0.0
    %824 = vmatprep.subr.mxu0 0.0
    %825 = vmatpush1.msra.mxu0 0.0
    %826 = vmatprep.subr.mxu0 0.0
    %827 = vmatpush1.msra.mxu0 %v697
    %828 = vmatprep.subr.mxu0 0.0
    %829 = vmatpush1.msra.mxu0 %v696
    %830 = vmatprep.subr.mxu0 0.0
    %831 = vmatpush1.msra.mxu0 %v695
    %832 = vmatprep.subr.mxu0 0.0
    %833 = vmatpush1.msra.mxu0 %v694
    %834 = vmatprep.subr.mxu0 0.0
    %835 = vmatpush2.msra.mxu0 0.0
    %836 = vmatprep.subr.mxu0 0.0
    %837 = vmatpush2.msra.mxu0 0.0
    %838 = vmatprep.subr.mxu0 0.0
    %839 = vmatpush2.msra.mxu0 0.0
    %840 = vmatprep.subr.mxu0 0.0
    %841 = vmatpush2.msra.mxu0 0.0
    %842 = vmatprep.subr.mxu0 0.0
    %843 = vmatpush2.msra.mxu0 0.0
    %844 = vmatprep.subr.mxu0 0.0
    %845 = vmatpush2.msra.mxu0 0.0
    %846 = vmatprep.subr.mxu0 0.0
    %847 = vmatpush2.msra.mxu0 0.0
    %848 = vmatprep.subr.mxu0 0.0
    %849 = vmatpush2.msra.mxu0 0.0
    %850 = vmatprep.subr.mxu0 0.0
    %851 = vmatpush2.msra.mxu0 0.0
    %852 = vmatprep.subr.mxu0 0.0
    %853 = vmatpush2.msra.mxu0 0.0
    %854 = vmatprep.subr.mxu0 0.0
    %855 = vmatpush2.msra.mxu0 0.0
    %856 = vmatprep.subr.mxu0 0.0
    %857 = vmatpush2.msra.mxu0 0.0
    %858 = vmatprep.subr.mxu0 0.0
    %859 = vmatpush2.msra.mxu0 0.0
    %860 = vmatprep.subr.mxu0 0.0
    %861 = vmatpush2.msra.mxu0 0.0
    %862 = vmatprep.subr.mxu0 0.0
    %863 = vmatpush2.msra.mxu0 0.0
    %864 = vmatprep.subr.mxu0 0.0
    %865 = vmatpush2.msra.mxu0 0.0
    %866 = vmatprep.mubr.f32.mxu0 0.0
    %867 = vmatmul.mubr.f32.gmra.mxu0 %v791
    %v868 = vpop.f32.mrf.mxu0
    %v869 = vadd.f32 %v788, %v868
    %v870 = vpop.f32.mrf.mxu0
    %871 = vmatprep.mubr.f32.mxu0 0.0
    %872 = vmatmul.mubr.f32.gmra.mxu0 %v794
    %v873 = vpop.f32.mrf.mxu0
    %v874 = vadd.f32 %v788, %v873
    %v875 = vpop.f32.mrf.mxu0
    %876 = vmatprep.mubr.f32.mxu0 0.0
    %877 = vmatmul.mubr.f32.gmra.mxu0 %v797
    %v878 = vpop.f32.mrf.mxu0
    %v879 = vadd.f32 %v788, %v878
    %v880 = vpop.f32.mrf.mxu0
    %881 = vmatprep.mubr.f32.mxu0 0.0
    %882 = vmatmul.mubr.f32.gmra.mxu0 %v800
    %v883 = vpop.f32.mrf.mxu0
    %v884 = vadd.f32 %v788, %v883
    %v885 = vpop.f32.mrf.mxu0
    %886 = vdwg.mxu0
    %v887 = vmul.f32 %v869, %v869
    %v888 = vmul.f32 %v874, %v874
    %v889 = vmul.f32 %v879, %v879
    %v890 = vmul.f32 %v884, %v884
    %v891 = vsel %vm70, %v887, 0.0
    %892 = vadd.xlane.f32.xlu0 %v891
    %v893 = vpop.xlane.xlu0 %892
    %v894 = vsel %vm70, %v888, 0.0
    %895 = vadd.xlane.f32.xlu0 %v894
    %v896 = vpop.xlane.xlu0 %895
    %v897 = vsel %vm70, %v889, 0.0
    %898 = vadd.xlane.f32.xlu0 %v897
    %v899 = vpop.xlane.xlu0 %898
    %v900 = vsel %vm70, %v890, 0.0
    %901 = vadd.xlane.f32.xlu0 %v900
    %v902 = vpop.xlane.xlu0 %901
    %v903 = vmax.f32 %v893, 1e-24
    %v904 = vmax.f32 %v896, 1e-24
    %v905 = vmax.f32 %v899, 1e-24
    %v906 = vmax.f32 %v902, 1e-24
    %v907 = vrsqrt.pop %v903
    %v908 = vrsqrt.pop %v904
    %v909 = vrsqrt.pop %v905
    %v910 = vrsqrt.pop %v906
    %v911 = vmul.f32 %v869, %v907
    %v912 = vmul.f32 %v874, %v908
    %v913 = vmul.f32 %v879, %v909
    %v914 = vmul.f32 %v884, %v910
    %919 = vrot.lane.b32.xlu0 %v911, 64
    %v920 = vpop.permute.xlu0 %919
    %921 = vrot.lane.b32.xlu0 %v912, 64
    %v922 = vpop.permute.xlu0 %921
    %923 = vrot.lane.b32.xlu0 %v913, 64
    %v924 = vpop.permute.xlu0 %923
    %925 = vrot.lane.b32.xlu0 %v914, 64
    %v926 = vpop.permute.xlu0 %925
    %vm931 = vcmask 785920
    %932 = vst.msk [vmem:[#allocation2] sm:$0xff] %vm931, %v920
    %933 = vst.msk [vmem:[#allocation2 + $0x8] sm:$0xff] %vm931, %v922
    %934 = vst.msk [vmem:[#allocation2 + $0x10] sm:$0xff] %vm931, %v924
    %935 = vst.msk [vmem:[#allocation2 + $0x18] sm:$0xff] %vm931, %v926
    %v936 = vld [vmem:[#allocation2] sm:$0xff]
    %v937 = vld [vmem:[#allocation2 + $0x8] sm:$0xff]
    %v938 = vld [vmem:[#allocation2 + $0x10] sm:$0xff]
    %v939 = vld [vmem:[#allocation2 + $0x18] sm:$0xff]
    %v940 = vld [vmem:[%s2] sm:$0xff]
    %v941 = vld [vmem:[%s2 + $0x8] sm:$0xff]
    %v942 = vld [vmem:[%s2 + $0x10] sm:$0xff]
    %v943 = vld [vmem:[%s2 + $0x18] sm:$0xff]
    %945 = vset.pattern.permute.xlu0 0
    %946 = vperm.xlu0 %945, %v940
    %v947 = vpop.permute.xlu0 %946
    %950 = vset.pattern.permute.xlu0 0
    %951 = vperm.xlu0 %950, %v941
    %v952 = vpop.permute.xlu0 %951
    %955 = vset.pattern.permute.xlu0 0
    %956 = vperm.xlu0 %955, %v942
    %v957 = vpop.permute.xlu0 %956
    %960 = vset.pattern.permute.xlu0 0
    %961 = vperm.xlu0 %960, %v943
    %v962 = vpop.permute.xlu0 %961
    %v964 = vmul.f32 %v936, %v947
    %v965 = vmul.f32 %v937, %v952
    %v966 = vmul.f32 %v938, %v957
    %v967 = vmul.f32 %v939, %v962
    %vm968 = vcmask 785408
    %v969 = vsel %vm968, %v964, -inf
    %v970 = vsel %vm968, %v965, -inf
    %v971 = vmax.f32 %v969, %v970
    %v972 = vrot.slane %v971, 4
    %v973 = vmax.f32 %v971, %v972
    %v974 = vrot.slane %v973, 2
    %v975 = vmax.f32 %v973, %v974
    %v976 = vrot.slane %v975, 1
    %v977 = vmax.f32 %v975, %v976
    %v978 = vsel %vm968, %v966, -inf
    %v979 = vsel %vm968, %v967, -inf
    %v980 = vmax.f32 %v978, %v979
    %v981 = vrot.slane %v980, 4
    %v982 = vmax.f32 %v980, %v981
    %v983 = vrot.slane %v982, 2
    %v984 = vmax.f32 %v982, %v983
    %v985 = vrot.slane %v984, 1
    %v986 = vmax.f32 %v984, %v985
    %v987 = vld [vmem:[%s9] sm:$0xff]
    %v988 = vld [vmem:[%s9 + $0x8] sm:$0xff]
    %v989 = vld [vmem:[%s9 + $0x10] sm:$0xff]
    %v990 = vld [vmem:[%s9 + $0x18] sm:$0xff]
    %v992 = vsel %vm70, %v987, 0
    %v995 = vsel %vm70, %v988, 0
    %v998 = vsel %vm70, %v989, 0
    %v1001 = vsel %vm70, %v990, 0
    %1003 = vmatprep.subr.mxu0 0.0
    %1004 = vmatpush1.msra.mxu0 0.0
    %1005 = vmatprep.subr.mxu0 0.0
    %1006 = vmatpush1.msra.mxu0 0.0
    %1007 = vmatprep.subr.mxu0 0.0
    %1008 = vmatpush1.msra.mxu0 0.0
    %1009 = vmatprep.subr.mxu0 0.0
    %1010 = vmatpush1.msra.mxu0 0.0
    %1011 = vmatprep.subr.mxu0 0.0
    %1012 = vmatpush1.msra.mxu0 0.0
    %1013 = vmatprep.subr.mxu0 0.0
    %1014 = vmatpush1.msra.mxu0 0.0
    %1015 = vmatprep.subr.mxu0 0.0
    %1016 = vmatpush1.msra.mxu0 0.0
    %1017 = vmatprep.subr.mxu0 0.0
    %1018 = vmatpush1.msra.mxu0 0.0
    %1019 = vmatprep.subr.mxu0 0.0
    %1020 = vmatpush1.msra.mxu0 0.0
    %1021 = vmatprep.subr.mxu0 0.0
    %1022 = vmatpush1.msra.mxu0 0.0
    %1023 = vmatprep.subr.mxu0 0.0
    %1024 = vmatpush1.msra.mxu0 0.0
    %1025 = vmatprep.subr.mxu0 0.0
    %1026 = vmatpush1.msra.mxu0 0.0
    %1027 = vmatprep.subr.mxu0 0.0
    %1028 = vmatpush1.msra.mxu0 %v967
    %1029 = vmatprep.subr.mxu0 0.0
    %1030 = vmatpush1.msra.mxu0 %v966
    %1031 = vmatprep.subr.mxu0 0.0
    %1032 = vmatpush1.msra.mxu0 %v965
    %1033 = vmatprep.subr.mxu0 0.0
    %1034 = vmatpush1.msra.mxu0 %v964
    %1035 = vmatprep.subr.mxu0 0.0
    %1036 = vmatpush2.msra.mxu0 0.0
    %1037 = vmatprep.subr.mxu0 0.0
    %1038 = vmatpush2.msra.mxu0 0.0
    %1039 = vmatprep.subr.mxu0 0.0
    %1040 = vmatpush2.msra.mxu0 0.0
    %1041 = vmatprep.subr.mxu0 0.0
    %1042 = vmatpush2.msra.mxu0 0.0
    %1043 = vmatprep.subr.mxu0 0.0
    %1044 = vmatpush2.msra.mxu0 0.0
    %1045 = vmatprep.subr.mxu0 0.0
    %1046 = vmatpush2.msra.mxu0 0.0
    %1047 = vmatprep.subr.mxu0 0.0
    %1048 = vmatpush2.msra.mxu0 0.0
    %1049 = vmatprep.subr.mxu0 0.0
    %1050 = vmatpush2.msra.mxu0 0.0
    %1051 = vmatprep.subr.mxu0 0.0
    %1052 = vmatpush2.msra.mxu0 0.0
    %1053 = vmatprep.subr.mxu0 0.0
    %1054 = vmatpush2.msra.mxu0 0.0
    %1055 = vmatprep.subr.mxu0 0.0
    %1056 = vmatpush2.msra.mxu0 0.0
    %1057 = vmatprep.subr.mxu0 0.0
    %1058 = vmatpush2.msra.mxu0 0.0
    %1059 = vmatprep.subr.mxu0 0.0
    %1060 = vmatpush2.msra.mxu0 0.0
    %1061 = vmatprep.subr.mxu0 0.0
    %1062 = vmatpush2.msra.mxu0 0.0
    %1063 = vmatprep.subr.mxu0 0.0
    %1064 = vmatpush2.msra.mxu0 0.0
    %1065 = vmatprep.subr.mxu0 0.0
    %1066 = vmatpush2.msra.mxu0 0.0
    %1067 = vmatprep.mubr.f32.mxu0 0.0
    %1068 = vmatmul.mubr.f32.gmra.mxu0 %v992
    %v1069 = vpop.f32.mrf.mxu0
    %v1070 = vadd.f32 0.0, %v1069
    %v1071 = vpop.f32.mrf.mxu0
    %1072 = vmatprep.mubr.f32.mxu0 0.0
    %1073 = vmatmul.mubr.f32.gmra.mxu0 %v995
    %v1074 = vpop.f32.mrf.mxu0
    %v1075 = vadd.f32 0.0, %v1074
    %v1076 = vpop.f32.mrf.mxu0
    %1077 = vmatprep.mubr.f32.mxu0 0.0
    %1078 = vmatmul.mubr.f32.gmra.mxu0 %v998
    %v1079 = vpop.f32.mrf.mxu0
    %v1080 = vadd.f32 0.0, %v1079
    %v1081 = vpop.f32.mrf.mxu0
    %1082 = vmatprep.mubr.f32.mxu0 0.0
    %1083 = vmatmul.mubr.f32.gmra.mxu0 %v1001
    %v1084 = vpop.f32.mrf.mxu0
    %v1085 = vadd.f32 0.0, %v1084
    %v1086 = vpop.f32.mrf.mxu0
    %1087 = vdwg.mxu0
    %v1088 = vld [vmem:[%s10] sm:$0xff]
    %v1089 = vld [vmem:[%s10 + $0x8] sm:$0xff]
    %v1090 = vld [vmem:[%s10 + $0x10] sm:$0xff]
    %v1091 = vld [vmem:[%s10 + $0x18] sm:$0xff]
    %v1092 = vld [vmem:[%s10 + $0x20] sm:$0xff]
    %v1093 = vld [vmem:[%s10 + $0x28] sm:$0xff]
    %v1094 = vld [vmem:[%s10 + $0x30] sm:$0xff]
    %v1095 = vld [vmem:[%s10 + $0x38] sm:$0xff]
    %v1096 = vld [vmem:[%s10 + $0x40] sm:$0xff]
    %v1097 = vld [vmem:[%s10 + $0x48] sm:$0xff]
    %v1098 = vld [vmem:[%s10 + $0x50] sm:$0xff]
    %v1099 = vld [vmem:[%s10 + $0x58] sm:$0xff]
    %s1100 = scalar_lea.vmem %s9, 32
    %v1101 = vld [vmem:[%s1100] sm:$0xff]
    %v1102 = vld [vmem:[%s1100 + $0x8] sm:$0xff]
    %v1103 = vld [vmem:[%s1100 + $0x10] sm:$0xff]
    %v1104 = vld [vmem:[%s1100 + $0x18] sm:$0xff]
    %v1106 = vsel %vm70, %v1101, 0
    %v1109 = vsel %vm70, %v1102, 0
    %v1112 = vsel %vm70, %v1103, 0
    %v1115 = vsel %vm70, %v1104, 0
    %1117 = vmatprep.subr.mxu0 0.0
    %1118 = vmatpush1.msra.mxu0 0.0
    %1119 = vmatprep.subr.mxu0 0.0
    %1120 = vmatpush1.msra.mxu0 0.0
    %1121 = vmatprep.subr.mxu0 0.0
    %1122 = vmatpush1.msra.mxu0 0.0
    %1123 = vmatprep.subr.mxu0 0.0
    %1124 = vmatpush1.msra.mxu0 0.0
    %1125 = vmatprep.subr.mxu0 0.0
    %1126 = vmatpush1.msra.mxu0 0.0
    %1127 = vmatprep.subr.mxu0 0.0
    %1128 = vmatpush1.msra.mxu0 0.0
    %1129 = vmatprep.subr.mxu0 0.0
    %1130 = vmatpush1.msra.mxu0 0.0
    %1131 = vmatprep.subr.mxu0 0.0
    %1132 = vmatpush1.msra.mxu0 0.0
    %1133 = vmatprep.subr.mxu0 0.0
    %1134 = vmatpush1.msra.mxu0 0.0
    %1135 = vmatprep.subr.mxu0 0.0
    %1136 = vmatpush1.msra.mxu0 0.0
    %1137 = vmatprep.subr.mxu0 0.0
    %1138 = vmatpush1.msra.mxu0 0.0
    %1139 = vmatprep.subr.mxu0 0.0
    %1140 = vmatpush1.msra.mxu0 0.0
    %1141 = vmatprep.subr.mxu0 0.0
    %1142 = vmatpush1.msra.mxu0 %v967
    %1143 = vmatprep.subr.mxu0 0.0
    %1144 = vmatpush1.msra.mxu0 %v966
    %1145 = vmatprep.subr.mxu0 0.0
    %1146 = vmatpush1.msra.mxu0 %v965
    %1147 = vmatprep.subr.mxu0 0.0
    %1148 = vmatpush1.msra.mxu0 %v964
    %1149 = vmatprep.subr.mxu0 0.0
    %1150 = vmatpush2.msra.mxu0 0.0
    %1151 = vmatprep.subr.mxu0 0.0
    %1152 = vmatpush2.msra.mxu0 0.0
    %1153 = vmatprep.subr.mxu0 0.0
    %1154 = vmatpush2.msra.mxu0 0.0
    %1155 = vmatprep.subr.mxu0 0.0
    %1156 = vmatpush2.msra.mxu0 0.0
    %1157 = vmatprep.subr.mxu0 0.0
    %1158 = vmatpush2.msra.mxu0 0.0
    %1159 = vmatprep.subr.mxu0 0.0
    %1160 = vmatpush2.msra.mxu0 0.0
    %1161 = vmatprep.subr.mxu0 0.0
    %1162 = vmatpush2.msra.mxu0 0.0
    %1163 = vmatprep.subr.mxu0 0.0
    %1164 = vmatpush2.msra.mxu0 0.0
    %1165 = vmatprep.subr.mxu0 0.0
    %1166 = vmatpush2.msra.mxu0 0.0
    %1167 = vmatprep.subr.mxu0 0.0
    %1168 = vmatpush2.msra.mxu0 0.0
    %1169 = vmatprep.subr.mxu0 0.0
    %1170 = vmatpush2.msra.mxu0 0.0
    %1171 = vmatprep.subr.mxu0 0.0
    %1172 = vmatpush2.msra.mxu0 0.0
    %1173 = vmatprep.subr.mxu0 0.0
    %1174 = vmatpush2.msra.mxu0 0.0
    %1175 = vmatprep.subr.mxu0 0.0
    %1176 = vmatpush2.msra.mxu0 0.0
    %1177 = vmatprep.subr.mxu0 0.0
    %1178 = vmatpush2.msra.mxu0 0.0
    %1179 = vmatprep.subr.mxu0 0.0
    %1180 = vmatpush2.msra.mxu0 0.0
    %1181 = vmatprep.mubr.f32.mxu0 0.0
    %1182 = vmatmul.mubr.f32.gmra.mxu0 %v1106
    %v1183 = vpop.f32.mrf.mxu0
    %v1184 = vadd.f32 0.0, %v1183
    %v1185 = vpop.f32.mrf.mxu0
    %1186 = vmatprep.mubr.f32.mxu0 0.0
    %1187 = vmatmul.mubr.f32.gmra.mxu0 %v1109
    %v1188 = vpop.f32.mrf.mxu0
    %v1189 = vadd.f32 0.0, %v1188
    %v1190 = vpop.f32.mrf.mxu0
    %1191 = vmatprep.mubr.f32.mxu0 0.0
    %1192 = vmatmul.mubr.f32.gmra.mxu0 %v1112
    %v1193 = vpop.f32.mrf.mxu0
    %v1194 = vadd.f32 0.0, %v1193
    %v1195 = vpop.f32.mrf.mxu0
    %1196 = vmatprep.mubr.f32.mxu0 0.0
    %1197 = vmatmul.mubr.f32.gmra.mxu0 %v1115
    %v1198 = vpop.f32.mrf.mxu0
    %v1199 = vadd.f32 0.0, %v1198
    %v1200 = vpop.f32.mrf.mxu0
    %1201 = vdwg.mxu0
    %s1202 = scalar_lea.vmem %s10, 96
    %v1203 = vld [vmem:[%s1202] sm:$0xff]
    %v1204 = vld [vmem:[%s1202 + $0x8] sm:$0xff]
    %v1205 = vld [vmem:[%s1202 + $0x10] sm:$0xff]
    %v1206 = vld [vmem:[%s1202 + $0x18] sm:$0xff]
    %v1207 = vld [vmem:[%s1202 + $0x20] sm:$0xff]
    %v1208 = vld [vmem:[%s1202 + $0x28] sm:$0xff]
    %v1209 = vld [vmem:[%s1202 + $0x30] sm:$0xff]
    %v1210 = vld [vmem:[%s1202 + $0x38] sm:$0xff]
    %v1211 = vld [vmem:[%s1202 + $0x40] sm:$0xff]
    %v1212 = vld [vmem:[%s1202 + $0x48] sm:$0xff]
    %v1213 = vld [vmem:[%s1202 + $0x50] sm:$0xff]
    %v1214 = vld [vmem:[%s1202 + $0x58] sm:$0xff]
    %v1216 = vsel %vm968, %v1184, 0
    %v1219 = vsel %vm968, %v1189, 0
    %v1222 = vsel %vm968, %v1194, 0
    %v1225 = vsel %vm968, %v1199, 0
    %1227 = vmatprep.subr.mxu0 0.0
    %1228 = vmatpush1.msra.mxu0 0.0
    %1229 = vmatprep.subr.mxu0 0.0
    %1230 = vmatpush1.msra.mxu0 0.0
    %1231 = vmatprep.subr.mxu0 0.0
    %1232 = vmatpush1.msra.mxu0 0.0
    %1233 = vmatprep.subr.mxu0 0.0
    %1234 = vmatpush1.msra.mxu0 0.0
    %1235 = vmatprep.subr.mxu0 0.0
    %1236 = vmatpush1.msra.mxu0 %v1214
    %1237 = vmatprep.subr.mxu0 0.0
    %1238 = vmatpush1.msra.mxu0 %v1213
    %1239 = vmatprep.subr.mxu0 0.0
    %1240 = vmatpush1.msra.mxu0 %v1212
    %1241 = vmatprep.subr.mxu0 0.0
    %1242 = vmatpush1.msra.mxu0 %v1211
    %1243 = vmatprep.subr.mxu0 0.0
    %1244 = vmatpush1.msra.mxu0 %v1210
    %1245 = vmatprep.subr.mxu0 0.0
    %1246 = vmatpush1.msra.mxu0 %v1209
    %1247 = vmatprep.subr.mxu0 0.0
    %1248 = vmatpush1.msra.mxu0 %v1208
    %1249 = vmatprep.subr.mxu0 0.0
    %1250 = vmatpush1.msra.mxu0 %v1207
    %1251 = vmatprep.subr.mxu0 0.0
    %1252 = vmatpush1.msra.mxu0 %v1206
    %1253 = vmatprep.subr.mxu0 0.0
    %1254 = vmatpush1.msra.mxu0 %v1205
    %1255 = vmatprep.subr.mxu0 0.0
    %1256 = vmatpush1.msra.mxu0 %v1204
    %1257 = vmatprep.subr.mxu0 0.0
    %1258 = vmatpush1.msra.mxu0 %v1203
    %1259 = vmatprep.subr.mxu0 0.0
    %1260 = vmatpush2.msra.mxu0 0.0
    %1261 = vmatprep.subr.mxu0 0.0
    %1262 = vmatpush2.msra.mxu0 0.0
    %1263 = vmatprep.subr.mxu0 0.0
    %1264 = vmatpush2.msra.mxu0 0.0
    %1265 = vmatprep.subr.mxu0 0.0
    %1266 = vmatpush2.msra.mxu0 0.0
    %1267 = vmatprep.subr.mxu0 0.0
    %1268 = vmatpush2.msra.mxu0 0.0
    %1269 = vmatprep.subr.mxu0 0.0
    %1270 = vmatpush2.msra.mxu0 0.0
    %1271 = vmatprep.subr.mxu0 0.0
    %1272 = vmatpush2.msra.mxu0 0.0
    %1273 = vmatprep.subr.mxu0 0.0
    %1274 = vmatpush2.msra.mxu0 0.0
    %1275 = vmatprep.subr.mxu0 0.0
    %1276 = vmatpush2.msra.mxu0 0.0
    %1277 = vmatprep.subr.mxu0 0.0
    %1278 = vmatpush2.msra.mxu0 0.0
    %1279 = vmatprep.subr.mxu0 0.0
    %1280 = vmatpush2.msra.mxu0 0.0
    %1281 = vmatprep.subr.mxu0 0.0
    %1282 = vmatpush2.msra.mxu0 0.0
    %1283 = vmatprep.subr.mxu0 0.0
    %1284 = vmatpush2.msra.mxu0 0.0
    %1285 = vmatprep.subr.mxu0 0.0
    %1286 = vmatpush2.msra.mxu0 0.0
    %1287 = vmatprep.subr.mxu0 0.0
    %1288 = vmatpush2.msra.mxu0 0.0
    %1289 = vmatprep.subr.mxu0 0.0
    %1290 = vmatpush2.msra.mxu0 0.0
    %1291 = vmatprep.mubr.f32.mxu0 0.0
    %1292 = vmatmul.mubr.f32.gmra.mxu0 %v1216
    %v1293 = vpop.f32.mrf.mxu0
    %v1294 = vadd.f32 0.0, %v1293
    %v1295 = vpop.f32.mrf.mxu0
    %1296 = vmatprep.mubr.f32.mxu0 0.0
    %1297 = vmatmul.mubr.f32.gmra.mxu0 %v1219
    %v1298 = vpop.f32.mrf.mxu0
    %v1299 = vadd.f32 0.0, %v1298
    %v1300 = vpop.f32.mrf.mxu0
    %1301 = vmatprep.mubr.f32.mxu0 0.0
    %1302 = vmatmul.mubr.f32.gmra.mxu0 %v1222
    %v1303 = vpop.f32.mrf.mxu0
    %v1304 = vadd.f32 0.0, %v1303
    %v1305 = vpop.f32.mrf.mxu0
    %1306 = vmatprep.mubr.f32.mxu0 0.0
    %1307 = vmatmul.mubr.f32.gmra.mxu0 %v1225
    %v1308 = vpop.f32.mrf.mxu0
    %v1309 = vadd.f32 0.0, %v1308
    %v1310 = vpop.f32.mrf.mxu0
    %1311 = vdwg.mxu0
    %v1313 = vsel %vm968, %v1070, 0
    %v1316 = vsel %vm968, %v1075, 0
    %v1319 = vsel %vm968, %v1080, 0
    %v1322 = vsel %vm968, %v1085, 0
    %1324 = vmatprep.subr.mxu0 0.0
    %1325 = vmatpush1.msra.mxu0 0.0
    %1326 = vmatprep.subr.mxu0 0.0
    %1327 = vmatpush1.msra.mxu0 0.0
    %1328 = vmatprep.subr.mxu0 0.0
    %1329 = vmatpush1.msra.mxu0 0.0
    %1330 = vmatprep.subr.mxu0 0.0
    %1331 = vmatpush1.msra.mxu0 0.0
    %1332 = vmatprep.subr.mxu0 0.0
    %1333 = vmatpush1.msra.mxu0 %v1099
    %1334 = vmatprep.subr.mxu0 0.0
    %1335 = vmatpush1.msra.mxu0 %v1098
    %1336 = vmatprep.subr.mxu0 0.0
    %1337 = vmatpush1.msra.mxu0 %v1097
    %1338 = vmatprep.subr.mxu0 0.0
    %1339 = vmatpush1.msra.mxu0 %v1096
    %1340 = vmatprep.subr.mxu0 0.0
    %1341 = vmatpush1.msra.mxu0 %v1095
    %1342 = vmatprep.subr.mxu0 0.0
    %1343 = vmatpush1.msra.mxu0 %v1094
    %1344 = vmatprep.subr.mxu0 0.0
    %1345 = vmatpush1.msra.mxu0 %v1093
    %1346 = vmatprep.subr.mxu0 0.0
    %1347 = vmatpush1.msra.mxu0 %v1092
    %1348 = vmatprep.subr.mxu0 0.0
    %1349 = vmatpush1.msra.mxu0 %v1091
    %1350 = vmatprep.subr.mxu0 0.0
    %1351 = vmatpush1.msra.mxu0 %v1090
    %1352 = vmatprep.subr.mxu0 0.0
    %1353 = vmatpush1.msra.mxu0 %v1089
    %1354 = vmatprep.subr.mxu0 0.0
    %1355 = vmatpush1.msra.mxu0 %v1088
    %1356 = vmatprep.subr.mxu0 0.0
    %1357 = vmatpush2.msra.mxu0 0.0
    %1358 = vmatprep.subr.mxu0 0.0
    %1359 = vmatpush2.msra.mxu0 0.0
    %1360 = vmatprep.subr.mxu0 0.0
    %1361 = vmatpush2.msra.mxu0 0.0
    %1362 = vmatprep.subr.mxu0 0.0
    %1363 = vmatpush2.msra.mxu0 0.0
    %1364 = vmatprep.subr.mxu0 0.0
    %1365 = vmatpush2.msra.mxu0 0.0
    %1366 = vmatprep.subr.mxu0 0.0
    %1367 = vmatpush2.msra.mxu0 0.0
    %1368 = vmatprep.subr.mxu0 0.0
    %1369 = vmatpush2.msra.mxu0 0.0
    %1370 = vmatprep.subr.mxu0 0.0
    %1371 = vmatpush2.msra.mxu0 0.0
    %1372 = vmatprep.subr.mxu0 0.0
    %1373 = vmatpush2.msra.mxu0 0.0
    %1374 = vmatprep.subr.mxu0 0.0
    %1375 = vmatpush2.msra.mxu0 0.0
    %1376 = vmatprep.subr.mxu0 0.0
    %1377 = vmatpush2.msra.mxu0 0.0
    %1378 = vmatprep.subr.mxu0 0.0
    %1379 = vmatpush2.msra.mxu0 0.0
    %1380 = vmatprep.subr.mxu0 0.0
    %1381 = vmatpush2.msra.mxu0 0.0
    %1382 = vmatprep.subr.mxu0 0.0
    %1383 = vmatpush2.msra.mxu0 0.0
    %1384 = vmatprep.subr.mxu0 0.0
    %1385 = vmatpush2.msra.mxu0 0.0
    %1386 = vmatprep.subr.mxu0 0.0
    %1387 = vmatpush2.msra.mxu0 0.0
    %1388 = vmatprep.mubr.f32.mxu0 0.0
    %1389 = vmatmul.mubr.f32.gmra.mxu0 %v1313
    %v1390 = vpop.f32.mrf.mxu0
    %v1391 = vadd.f32 %v1294, %v1390
    %v1392 = vpop.f32.mrf.mxu0
    %1393 = vmatprep.mubr.f32.mxu0 0.0
    %1394 = vmatmul.mubr.f32.gmra.mxu0 %v1316
    %v1395 = vpop.f32.mrf.mxu0
    %v1396 = vadd.f32 %v1299, %v1395
    %v1397 = vpop.f32.mrf.mxu0
    %1398 = vmatprep.mubr.f32.mxu0 0.0
    %1399 = vmatmul.mubr.f32.gmra.mxu0 %v1319
    %v1400 = vpop.f32.mrf.mxu0
    %v1401 = vadd.f32 %v1304, %v1400
    %v1402 = vpop.f32.mrf.mxu0
    %1403 = vmatprep.mubr.f32.mxu0 0.0
    %1404 = vmatmul.mubr.f32.gmra.mxu0 %v1322
    %v1405 = vpop.f32.mrf.mxu0
    %v1406 = vadd.f32 %v1309, %v1405
    %v1407 = vpop.f32.mrf.mxu0
    %1408 = vdwg.mxu0
    %s1409 = scalar_lea.vmem %s9, 64
    %v1410 = vld [vmem:[%s1409] sm:$0xff]
    %v1411 = vld [vmem:[%s1409 + $0x8] sm:$0xff]
    %v1412 = vld [vmem:[%s1409 + $0x10] sm:$0xff]
    %v1413 = vld [vmem:[%s1409 + $0x18] sm:$0xff]
    %v1415 = vsel %vm70, %v1410, 0
    %v1418 = vsel %vm70, %v1411, 0
    %v1421 = vsel %vm70, %v1412, 0
    %v1424 = vsel %vm70, %v1413, 0
    %1426 = vmatprep.subr.mxu0 0.0
    %1427 = vmatpush1.msra.mxu0 0.0
    %1428 = vmatprep.subr.mxu0 0.0
    %1429 = vmatpush1.msra.mxu0 0.0
    %1430 = vmatprep.subr.mxu0 0.0
    %1431 = vmatpush1.msra.mxu0 0.0
    %1432 = vmatprep.subr.mxu0 0.0
    %1433 = vmatpush1.msra.mxu0 0.0
    %1434 = vmatprep.subr.mxu0 0.0
    %1435 = vmatpush1.msra.mxu0 0.0
    %1436 = vmatprep.subr.mxu0 0.0
    %1437 = vmatpush1.msra.mxu0 0.0
    %1438 = vmatprep.subr.mxu0 0.0
    %1439 = vmatpush1.msra.mxu0 0.0
    %1440 = vmatprep.subr.mxu0 0.0
    %1441 = vmatpush1.msra.mxu0 0.0
    %1442 = vmatprep.subr.mxu0 0.0
    %1443 = vmatpush1.msra.mxu0 0.0
    %1444 = vmatprep.subr.mxu0 0.0
    %1445 = vmatpush1.msra.mxu0 0.0
    %1446 = vmatprep.subr.mxu0 0.0
    %1447 = vmatpush1.msra.mxu0 0.0
    %1448 = vmatprep.subr.mxu0 0.0
    %1449 = vmatpush1.msra.mxu0 0.0
    %1450 = vmatprep.subr.mxu0 0.0
    %1451 = vmatpush1.msra.mxu0 %v967
    %1452 = vmatprep.subr.mxu0 0.0
    %1453 = vmatpush1.msra.mxu0 %v966
    %1454 = vmatprep.subr.mxu0 0.0
    %1455 = vmatpush1.msra.mxu0 %v965
    %1456 = vmatprep.subr.mxu0 0.0
    %1457 = vmatpush1.msra.mxu0 %v964
    %1458 = vmatprep.subr.mxu0 0.0
    %1459 = vmatpush2.msra.mxu0 0.0
    %1460 = vmatprep.subr.mxu0 0.0
    %1461 = vmatpush2.msra.mxu0 0.0
    %1462 = vmatprep.subr.mxu0 0.0
    %1463 = vmatpush2.msra.mxu0 0.0
    %1464 = vmatprep.subr.mxu0 0.0
    %1465 = vmatpush2.msra.mxu0 0.0
    %1466 = vmatprep.subr.mxu0 0.0
    %1467 = vmatpush2.msra.mxu0 0.0
    %1468 = vmatprep.subr.mxu0 0.0
    %1469 = vmatpush2.msra.mxu0 0.0
    %1470 = vmatprep.subr.mxu0 0.0
    %1471 = vmatpush2.msra.mxu0 0.0
    %1472 = vmatprep.subr.mxu0 0.0
    %1473 = vmatpush2.msra.mxu0 0.0
    %1474 = vmatprep.subr.mxu0 0.0
    %1475 = vmatpush2.msra.mxu0 0.0
    %1476 = vmatprep.subr.mxu0 0.0
    %1477 = vmatpush2.msra.mxu0 0.0
    %1478 = vmatprep.subr.mxu0 0.0
    %1479 = vmatpush2.msra.mxu0 0.0
    %1480 = vmatprep.subr.mxu0 0.0
    %1481 = vmatpush2.msra.mxu0 0.0
    %1482 = vmatprep.subr.mxu0 0.0
    %1483 = vmatpush2.msra.mxu0 0.0
    %1484 = vmatprep.subr.mxu0 0.0
    %1485 = vmatpush2.msra.mxu0 0.0
    %1486 = vmatprep.subr.mxu0 0.0
    %1487 = vmatpush2.msra.mxu0 0.0
    %1488 = vmatprep.subr.mxu0 0.0
    %1489 = vmatpush2.msra.mxu0 0.0
    %1490 = vmatprep.mubr.f32.mxu0 0.0
    %1491 = vmatmul.mubr.f32.gmra.mxu0 %v1415
    %v1492 = vpop.f32.mrf.mxu0
    %v1493 = vadd.f32 0.0, %v1492
    %v1494 = vpop.f32.mrf.mxu0
    %1495 = vmatprep.mubr.f32.mxu0 0.0
    %1496 = vmatmul.mubr.f32.gmra.mxu0 %v1418
    %v1497 = vpop.f32.mrf.mxu0
    %v1498 = vadd.f32 0.0, %v1497
    %v1499 = vpop.f32.mrf.mxu0
    %1500 = vmatprep.mubr.f32.mxu0 0.0
    %1501 = vmatmul.mubr.f32.gmra.mxu0 %v1421
    %v1502 = vpop.f32.mrf.mxu0
    %v1503 = vadd.f32 0.0, %v1502
    %v1504 = vpop.f32.mrf.mxu0
    %1505 = vmatprep.mubr.f32.mxu0 0.0
    %1506 = vmatmul.mubr.f32.gmra.mxu0 %v1424
    %v1507 = vpop.f32.mrf.mxu0
    %v1508 = vadd.f32 0.0, %v1507
    %v1509 = vpop.f32.mrf.mxu0
    %1510 = vdwg.mxu0
    %s1511 = scalar_lea.vmem %s10, 192
    %v1512 = vld [vmem:[%s1511] sm:$0xff]
    %v1513 = vld [vmem:[%s1511 + $0x8] sm:$0xff]
    %v1514 = vld [vmem:[%s1511 + $0x10] sm:$0xff]
    %v1515 = vld [vmem:[%s1511 + $0x18] sm:$0xff]
    %v1516 = vld [vmem:[%s1511 + $0x20] sm:$0xff]
    %v1517 = vld [vmem:[%s1511 + $0x28] sm:$0xff]
    %v1518 = vld [vmem:[%s1511 + $0x30] sm:$0xff]
    %v1519 = vld [vmem:[%s1511 + $0x38] sm:$0xff]
    %v1520 = vld [vmem:[%s1511 + $0x40] sm:$0xff]
    %v1521 = vld [vmem:[%s1511 + $0x48] sm:$0xff]
    %v1522 = vld [vmem:[%s1511 + $0x50] sm:$0xff]
    %v1523 = vld [vmem:[%s1511 + $0x58] sm:$0xff]
    %v1525 = vsel %vm968, %v1493, 0
    %v1528 = vsel %vm968, %v1498, 0
    %v1531 = vsel %vm968, %v1503, 0
    %v1534 = vsel %vm968, %v1508, 0
    %1536 = vmatprep.subr.mxu0 0.0
    %1537 = vmatpush1.msra.mxu0 0.0
    %1538 = vmatprep.subr.mxu0 0.0
    %1539 = vmatpush1.msra.mxu0 0.0
    %1540 = vmatprep.subr.mxu0 0.0
    %1541 = vmatpush1.msra.mxu0 0.0
    %1542 = vmatprep.subr.mxu0 0.0
    %1543 = vmatpush1.msra.mxu0 0.0
    %1544 = vmatprep.subr.mxu0 0.0
    %1545 = vmatpush1.msra.mxu0 %v1523
    %1546 = vmatprep.subr.mxu0 0.0
    %1547 = vmatpush1.msra.mxu0 %v1522
    %1548 = vmatprep.subr.mxu0 0.0
    %1549 = vmatpush1.msra.mxu0 %v1521
    %1550 = vmatprep.subr.mxu0 0.0
    %1551 = vmatpush1.msra.mxu0 %v1520
    %1552 = vmatprep.subr.mxu0 0.0
    %1553 = vmatpush1.msra.mxu0 %v1519
    %1554 = vmatprep.subr.mxu0 0.0
    %1555 = vmatpush1.msra.mxu0 %v1518
    %1556 = vmatprep.subr.mxu0 0.0
    %1557 = vmatpush1.msra.mxu0 %v1517
    %1558 = vmatprep.subr.mxu0 0.0
    %1559 = vmatpush1.msra.mxu0 %v1516
    %1560 = vmatprep.subr.mxu0 0.0
    %1561 = vmatpush1.msra.mxu0 %v1515
    %1562 = vmatprep.subr.mxu0 0.0
    %1563 = vmatpush1.msra.mxu0 %v1514
    %1564 = vmatprep.subr.mxu0 0.0
    %1565 = vmatpush1.msra.mxu0 %v1513
    %1566 = vmatprep.subr.mxu0 0.0
    %1567 = vmatpush1.msra.mxu0 %v1512
    %1568 = vmatprep.subr.mxu0 0.0
    %1569 = vmatpush2.msra.mxu0 0.0
    %1570 = vmatprep.subr.mxu0 0.0
    %1571 = vmatpush2.msra.mxu0 0.0
    %1572 = vmatprep.subr.mxu0 0.0
    %1573 = vmatpush2.msra.mxu0 0.0
    %1574 = vmatprep.subr.mxu0 0.0
    %1575 = vmatpush2.msra.mxu0 0.0
    %1576 = vmatprep.subr.mxu0 0.0
    %1577 = vmatpush2.msra.mxu0 0.0
    %1578 = vmatprep.subr.mxu0 0.0
    %1579 = vmatpush2.msra.mxu0 0.0
    %1580 = vmatprep.subr.mxu0 0.0
    %1581 = vmatpush2.msra.mxu0 0.0
    %1582 = vmatprep.subr.mxu0 0.0
    %1583 = vmatpush2.msra.mxu0 0.0
    %1584 = vmatprep.subr.mxu0 0.0
    %1585 = vmatpush2.msra.mxu0 0.0
    %1586 = vmatprep.subr.mxu0 0.0
    %1587 = vmatpush2.msra.mxu0 0.0
    %1588 = vmatprep.subr.mxu0 0.0
    %1589 = vmatpush2.msra.mxu0 0.0
    %1590 = vmatprep.subr.mxu0 0.0
    %1591 = vmatpush2.msra.mxu0 0.0
    %1592 = vmatprep.subr.mxu0 0.0
    %1593 = vmatpush2.msra.mxu0 0.0
    %1594 = vmatprep.subr.mxu0 0.0
    %1595 = vmatpush2.msra.mxu0 0.0
    %1596 = vmatprep.subr.mxu0 0.0
    %1597 = vmatpush2.msra.mxu0 0.0
    %1598 = vmatprep.subr.mxu0 0.0
    %1599 = vmatpush2.msra.mxu0 0.0
    %1600 = vmatprep.mubr.f32.mxu0 0.0
    %1601 = vmatmul.mubr.f32.gmra.mxu0 %v1525
    %v1602 = vpop.f32.mrf.mxu0
    %v1603 = vadd.f32 0.0, %v1602
    %v1604 = vpop.f32.mrf.mxu0
    %1605 = vmatprep.mubr.f32.mxu0 0.0
    %1606 = vmatmul.mubr.f32.gmra.mxu0 %v1528
    %v1607 = vpop.f32.mrf.mxu0
    %v1608 = vadd.f32 0.0, %v1607
    %v1609 = vpop.f32.mrf.mxu0
    %1610 = vmatprep.mubr.f32.mxu0 0.0
    %1611 = vmatmul.mubr.f32.gmra.mxu0 %v1531
    %v1612 = vpop.f32.mrf.mxu0
    %v1613 = vadd.f32 0.0, %v1612
    %v1614 = vpop.f32.mrf.mxu0
    %1615 = vmatprep.mubr.f32.mxu0 0.0
    %1616 = vmatmul.mubr.f32.gmra.mxu0 %v1534
    %v1617 = vpop.f32.mrf.mxu0
    %v1618 = vadd.f32 0.0, %v1617
    %v1619 = vpop.f32.mrf.mxu0
    %1620 = vdwg.mxu0
    %v1621 = vadd.f32 %v1391, %v1603
    %v1622 = vadd.f32 %v1396, %v1608
    %v1623 = vadd.f32 %v1401, %v1613
    %v1624 = vadd.f32 %v1406, %v1618
    %s1625 = scalar_lea.vmem %s9, 96
    %v1626 = vld [vmem:[%s1625] sm:$0xff]
    %v1627 = vld [vmem:[%s1625 + $0x8] sm:$0xff]
    %v1628 = vld [vmem:[%s1625 + $0x10] sm:$0xff]
    %v1629 = vld [vmem:[%s1625 + $0x18] sm:$0xff]
    %v1631 = vsel %vm70, %v1626, 0
    %v1634 = vsel %vm70, %v1627, 0
    %v1637 = vsel %vm70, %v1628, 0
    %v1640 = vsel %vm70, %v1629, 0
    %1642 = vmatprep.subr.mxu0 0.0
    %1643 = vmatpush1.msra.mxu0 0.0
    %1644 = vmatprep.subr.mxu0 0.0
    %1645 = vmatpush1.msra.mxu0 0.0
    %1646 = vmatprep.subr.mxu0 0.0
    %1647 = vmatpush1.msra.mxu0 0.0
    %1648 = vmatprep.subr.mxu0 0.0
    %1649 = vmatpush1.msra.mxu0 0.0
    %1650 = vmatprep.subr.mxu0 0.0
    %1651 = vmatpush1.msra.mxu0 0.0
    %1652 = vmatprep.subr.mxu0 0.0
    %1653 = vmatpush1.msra.mxu0 0.0
    %1654 = vmatprep.subr.mxu0 0.0
    %1655 = vmatpush1.msra.mxu0 0.0
    %1656 = vmatprep.subr.mxu0 0.0
    %1657 = vmatpush1.msra.mxu0 0.0
    %1658 = vmatprep.subr.mxu0 0.0
    %1659 = vmatpush1.msra.mxu0 0.0
    %1660 = vmatprep.subr.mxu0 0.0
    %1661 = vmatpush1.msra.mxu0 0.0
    %1662 = vmatprep.subr.mxu0 0.0
    %1663 = vmatpush1.msra.mxu0 0.0
    %1664 = vmatprep.subr.mxu0 0.0
    %1665 = vmatpush1.msra.mxu0 0.0
    %1666 = vmatprep.subr.mxu0 0.0
    %1667 = vmatpush1.msra.mxu0 %v967
    %1668 = vmatprep.subr.mxu0 0.0
    %1669 = vmatpush1.msra.mxu0 %v966
    %1670 = vmatprep.subr.mxu0 0.0
    %1671 = vmatpush1.msra.mxu0 %v965
    %1672 = vmatprep.subr.mxu0 0.0
    %1673 = vmatpush1.msra.mxu0 %v964
    %1674 = vmatprep.subr.mxu0 0.0
    %1675 = vmatpush2.msra.mxu0 0.0
    %1676 = vmatprep.subr.mxu0 0.0
    %1677 = vmatpush2.msra.mxu0 0.0
    %1678 = vmatprep.subr.mxu0 0.0
    %1679 = vmatpush2.msra.mxu0 0.0
    %1680 = vmatprep.subr.mxu0 0.0
    %1681 = vmatpush2.msra.mxu0 0.0
    %1682 = vmatprep.subr.mxu0 0.0
    %1683 = vmatpush2.msra.mxu0 0.0
    %1684 = vmatprep.subr.mxu0 0.0
    %1685 = vmatpush2.msra.mxu0 0.0
    %1686 = vmatprep.subr.mxu0 0.0
    %1687 = vmatpush2.msra.mxu0 0.0
    %1688 = vmatprep.subr.mxu0 0.0
    %1689 = vmatpush2.msra.mxu0 0.0
    %1690 = vmatprep.subr.mxu0 0.0
    %1691 = vmatpush2.msra.mxu0 0.0
    %1692 = vmatprep.subr.mxu0 0.0
    %1693 = vmatpush2.msra.mxu0 0.0
    %1694 = vmatprep.subr.mxu0 0.0
    %1695 = vmatpush2.msra.mxu0 0.0
    %1696 = vmatprep.subr.mxu0 0.0
    %1697 = vmatpush2.msra.mxu0 0.0
    %1698 = vmatprep.subr.mxu0 0.0
    %1699 = vmatpush2.msra.mxu0 0.0
    %1700 = vmatprep.subr.mxu0 0.0
    %1701 = vmatpush2.msra.mxu0 0.0
    %1702 = vmatprep.subr.mxu0 0.0
    %1703 = vmatpush2.msra.mxu0 0.0
    %1704 = vmatprep.subr.mxu0 0.0
    %1705 = vmatpush2.msra.mxu0 0.0
    %1706 = vmatprep.mubr.f32.mxu0 0.0
    %1707 = vmatmul.mubr.f32.gmra.mxu0 %v1631
    %v1708 = vpop.f32.mrf.mxu0
    %v1709 = vadd.f32 0.0, %v1708
    %v1710 = vpop.f32.mrf.mxu0
    %1711 = vmatprep.mubr.f32.mxu0 0.0
    %1712 = vmatmul.mubr.f32.gmra.mxu0 %v1634
    %v1713 = vpop.f32.mrf.mxu0
    %v1714 = vadd.f32 0.0, %v1713
    %v1715 = vpop.f32.mrf.mxu0
    %1716 = vmatprep.mubr.f32.mxu0 0.0
    %1717 = vmatmul.mubr.f32.gmra.mxu0 %v1637
    %v1718 = vpop.f32.mrf.mxu0
    %v1719 = vadd.f32 0.0, %v1718
    %v1720 = vpop.f32.mrf.mxu0
    %1721 = vmatprep.mubr.f32.mxu0 0.0
    %1722 = vmatmul.mubr.f32.gmra.mxu0 %v1640
    %v1723 = vpop.f32.mrf.mxu0
    %v1724 = vadd.f32 0.0, %v1723
    %v1725 = vpop.f32.mrf.mxu0
    %1726 = vdwg.mxu0
    %s1727 = scalar_lea.vmem %s10, 288
    %v1728 = vld [vmem:[%s1727] sm:$0xff]
    %v1729 = vld [vmem:[%s1727 + $0x8] sm:$0xff]
    %v1730 = vld [vmem:[%s1727 + $0x10] sm:$0xff]
    %v1731 = vld [vmem:[%s1727 + $0x18] sm:$0xff]
    %v1732 = vld [vmem:[%s1727 + $0x20] sm:$0xff]
    %v1733 = vld [vmem:[%s1727 + $0x28] sm:$0xff]
    %v1734 = vld [vmem:[%s1727 + $0x30] sm:$0xff]
    %v1735 = vld [vmem:[%s1727 + $0x38] sm:$0xff]
    %v1736 = vld [vmem:[%s1727 + $0x40] sm:$0xff]
    %v1737 = vld [vmem:[%s1727 + $0x48] sm:$0xff]
    %v1738 = vld [vmem:[%s1727 + $0x50] sm:$0xff]
    %v1739 = vld [vmem:[%s1727 + $0x58] sm:$0xff]
    %v1741 = vsel %vm968, %v1709, 0
    %v1744 = vsel %vm968, %v1714, 0
    %v1747 = vsel %vm968, %v1719, 0
    %v1750 = vsel %vm968, %v1724, 0
    %1752 = vmatprep.subr.mxu0 0.0
    %1753 = vmatpush1.msra.mxu0 0.0
    %1754 = vmatprep.subr.mxu0 0.0
    %1755 = vmatpush1.msra.mxu0 0.0
    %1756 = vmatprep.subr.mxu0 0.0
    %1757 = vmatpush1.msra.mxu0 0.0
    %1758 = vmatprep.subr.mxu0 0.0
    %1759 = vmatpush1.msra.mxu0 0.0
    %1760 = vmatprep.subr.mxu0 0.0
    %1761 = vmatpush1.msra.mxu0 %v1739
    %1762 = vmatprep.subr.mxu0 0.0
    %1763 = vmatpush1.msra.mxu0 %v1738
    %1764 = vmatprep.subr.mxu0 0.0
    %1765 = vmatpush1.msra.mxu0 %v1737
    %1766 = vmatprep.subr.mxu0 0.0
    %1767 = vmatpush1.msra.mxu0 %v1736
    %1768 = vmatprep.subr.mxu0 0.0
    %1769 = vmatpush1.msra.mxu0 %v1735
    %1770 = vmatprep.subr.mxu0 0.0
    %1771 = vmatpush1.msra.mxu0 %v1734
    %1772 = vmatprep.subr.mxu0 0.0
    %1773 = vmatpush1.msra.mxu0 %v1733
    %1774 = vmatprep.subr.mxu0 0.0
    %1775 = vmatpush1.msra.mxu0 %v1732
    %1776 = vmatprep.subr.mxu0 0.0
    %1777 = vmatpush1.msra.mxu0 %v1731
    %1778 = vmatprep.subr.mxu0 0.0
    %1779 = vmatpush1.msra.mxu0 %v1730
    %1780 = vmatprep.subr.mxu0 0.0
    %1781 = vmatpush1.msra.mxu0 %v1729
    %1782 = vmatprep.subr.mxu0 0.0
    %1783 = vmatpush1.msra.mxu0 %v1728
    %1784 = vmatprep.subr.mxu0 0.0
    %1785 = vmatpush2.msra.mxu0 0.0
    %1786 = vmatprep.subr.mxu0 0.0
    %1787 = vmatpush2.msra.mxu0 0.0
    %1788 = vmatprep.subr.mxu0 0.0
    %1789 = vmatpush2.msra.mxu0 0.0
    %1790 = vmatprep.subr.mxu0 0.0
    %1791 = vmatpush2.msra.mxu0 0.0
    %1792 = vmatprep.subr.mxu0 0.0
    %1793 = vmatpush2.msra.mxu0 0.0
    %1794 = vmatprep.subr.mxu0 0.0
    %1795 = vmatpush2.msra.mxu0 0.0
    %1796 = vmatprep.subr.mxu0 0.0
    %1797 = vmatpush2.msra.mxu0 0.0
    %1798 = vmatprep.subr.mxu0 0.0
    %1799 = vmatpush2.msra.mxu0 0.0
    %1800 = vmatprep.subr.mxu0 0.0
    %1801 = vmatpush2.msra.mxu0 0.0
    %1802 = vmatprep.subr.mxu0 0.0
    %1803 = vmatpush2.msra.mxu0 0.0
    %1804 = vmatprep.subr.mxu0 0.0
    %1805 = vmatpush2.msra.mxu0 0.0
    %1806 = vmatprep.subr.mxu0 0.0
    %1807 = vmatpush2.msra.mxu0 0.0
    %1808 = vmatprep.subr.mxu0 0.0
    %1809 = vmatpush2.msra.mxu0 0.0
    %1810 = vmatprep.subr.mxu0 0.0
    %1811 = vmatpush2.msra.mxu0 0.0
    %1812 = vmatprep.subr.mxu0 0.0
    %1813 = vmatpush2.msra.mxu0 0.0
    %1814 = vmatprep.subr.mxu0 0.0
    %1815 = vmatpush2.msra.mxu0 0.0
    %1816 = vmatprep.mubr.f32.mxu0 0.0
    %1817 = vmatmul.mubr.f32.gmra.mxu0 %v1741
    %v1818 = vpop.f32.mrf.mxu0
    %v1819 = vadd.f32 0.0, %v1818
    %v1820 = vpop.f32.mrf.mxu0
    %1821 = vmatprep.mubr.f32.mxu0 0.0
    %1822 = vmatmul.mubr.f32.gmra.mxu0 %v1744
    %v1823 = vpop.f32.mrf.mxu0
    %v1824 = vadd.f32 0.0, %v1823
    %v1825 = vpop.f32.mrf.mxu0
    %1826 = vmatprep.mubr.f32.mxu0 0.0
    %1827 = vmatmul.mubr.f32.gmra.mxu0 %v1747
    %v1828 = vpop.f32.mrf.mxu0
    %v1829 = vadd.f32 0.0, %v1828
    %v1830 = vpop.f32.mrf.mxu0
    %1831 = vmatprep.mubr.f32.mxu0 0.0
    %1832 = vmatmul.mubr.f32.gmra.mxu0 %v1750
    %v1833 = vpop.f32.mrf.mxu0
    %v1834 = vadd.f32 0.0, %v1833
    %v1835 = vpop.f32.mrf.mxu0
    %1836 = vdwg.mxu0
    %v1837 = vadd.f32 %v1621, %v1819
    %v1838 = vadd.f32 %v1622, %v1824
    %v1839 = vadd.f32 %v1623, %v1829
    %v1840 = vadd.f32 %v1624, %v1834
    %v1841 = vld [vmem:[%s11] sm:$0xff]
    %v1842 = vld [vmem:[%s11 + $0x8] sm:$0xff]
    %v1843 = vld [vmem:[%s11 + $0x10] sm:$0xff]
    %v1844 = vld [vmem:[%s11 + $0x18] sm:$0xff]
    %v1845 = vld [vmem:[%s11 + $0x20] sm:$0xff]
    %v1846 = vld [vmem:[%s11 + $0x28] sm:$0xff]
    %v1847 = vld [vmem:[%s11 + $0x30] sm:$0xff]
    %v1848 = vld [vmem:[%s11 + $0x38] sm:$0xff]
    %v1849 = vld [vmem:[%s11 + $0x40] sm:$0xff]
    %v1850 = vld [vmem:[%s11 + $0x48] sm:$0xff]
    %v1851 = vld [vmem:[%s11 + $0x50] sm:$0xff]
    %v1852 = vld [vmem:[%s11 + $0x58] sm:$0xff]
    %v1853 = vld [vmem:[%s12] sm:$0xff]
    %v1854 = vld [vmem:[%s12 + $0x8] sm:$0xff]
    %v1855 = vld [vmem:[%s12 + $0x10] sm:$0xff]
    %v1856 = vld [vmem:[%s12 + $0x18] sm:$0xff]
    %v1857 = vld [vmem:[%s12 + $0x20] sm:$0xff]
    %v1858 = vld [vmem:[%s12 + $0x28] sm:$0xff]
    %v1859 = vld [vmem:[%s12 + $0x30] sm:$0xff]
    %v1860 = vld [vmem:[%s12 + $0x38] sm:$0xff]
    %v1861 = vld [vmem:[%s12 + $0x40] sm:$0xff]
    %v1862 = vld [vmem:[%s12 + $0x48] sm:$0xff]
    %v1863 = vld [vmem:[%s12 + $0x50] sm:$0xff]
    %v1864 = vld [vmem:[%s12 + $0x58] sm:$0xff]
    %vm1865 = vcmp.gt.f32.partialorder %v1841, 0.0
    %vm1866 = vcmp.gt.f32.partialorder %v1842, 0.0
    %vm1867 = vcmp.gt.f32.partialorder %v1843, 0.0
    %vm1868 = vcmp.gt.f32.partialorder %v1844, 0.0
    %vm1869 = vcmp.gt.f32.partialorder %v1845, 0.0
    %vm1870 = vcmp.gt.f32.partialorder %v1846, 0.0
    %vm1871 = vcmp.gt.f32.partialorder %v1847, 0.0
    %vm1872 = vcmp.gt.f32.partialorder %v1848, 0.0
    %vm1873 = vcmp.gt.f32.partialorder %v1849, 0.0
    %vm1874 = vcmp.gt.f32.partialorder %v1850, 0.0
    %vm1875 = vcmp.gt.f32.partialorder %v1851, 0.0
    %vm1876 = vcmp.gt.f32.partialorder %v1852, 0.0
    %v1877 = vmul.f32 %v1841, 0.2
    %v1878 = vmul.f32 %v1842, 0.2
    %v1879 = vmul.f32 %v1843, 0.2
    %v1880 = vmul.f32 %v1844, 0.2
    %v1881 = vmul.f32 %v1845, 0.2
    %v1882 = vmul.f32 %v1846, 0.2
    %v1883 = vmul.f32 %v1847, 0.2
    %v1884 = vmul.f32 %v1848, 0.2
    %v1885 = vmul.f32 %v1849, 0.2
    %v1886 = vmul.f32 %v1850, 0.2
    %v1887 = vmul.f32 %v1851, 0.2
    %v1888 = vmul.f32 %v1852, 0.2
    %v1889 = vsel %vm1865, %v1841, %v1877
    %v1890 = vsel %vm1866, %v1842, %v1878
    %v1891 = vsel %vm1867, %v1843, %v1879
    %v1892 = vsel %vm1868, %v1844, %v1880
    %v1893 = vsel %vm1869, %v1845, %v1881
    %v1894 = vsel %vm1870, %v1846, %v1882
    %v1895 = vsel %vm1871, %v1847, %v1883
    %v1896 = vsel %vm1872, %v1848, %v1884
    %v1897 = vsel %vm1873, %v1849, %v1885
    %v1898 = vsel %vm1874, %v1850, %v1886
    %v1899 = vsel %vm1875, %v1851, %v1887
    %v1900 = vsel %vm1876, %v1852, %v1888
    %vm1901 = vcmp.gt.f32.partialorder %v1853, 0.0
    %vm1902 = vcmp.gt.f32.partialorder %v1854, 0.0
    %vm1903 = vcmp.gt.f32.partialorder %v1855, 0.0
    %vm1904 = vcmp.gt.f32.partialorder %v1856, 0.0
    %vm1905 = vcmp.gt.f32.partialorder %v1857, 0.0
    %vm1906 = vcmp.gt.f32.partialorder %v1858, 0.0
    %vm1907 = vcmp.gt.f32.partialorder %v1859, 0.0
    %vm1908 = vcmp.gt.f32.partialorder %v1860, 0.0
    %vm1909 = vcmp.gt.f32.partialorder %v1861, 0.0
    %vm1910 = vcmp.gt.f32.partialorder %v1862, 0.0
    %vm1911 = vcmp.gt.f32.partialorder %v1863, 0.0
    %vm1912 = vcmp.gt.f32.partialorder %v1864, 0.0
    %v1913 = vsel %vm1901, %v1889, -1e+09
    %v1914 = vsel %vm1902, %v1890, -1e+09
    %v1915 = vsel %vm1903, %v1891, -1e+09
    %v1916 = vsel %vm1904, %v1892, -1e+09
    %v1917 = vsel %vm1905, %v1893, -1e+09
    %v1918 = vsel %vm1906, %v1894, -1e+09
    %v1919 = vsel %vm1907, %v1895, -1e+09
    %v1920 = vsel %vm1908, %v1896, -1e+09
    %v1921 = vsel %vm1909, %v1897, -1e+09
    %v1922 = vsel %vm1910, %v1898, -1e+09
    %v1923 = vsel %vm1911, %v1899, -1e+09
    %v1924 = vsel %vm1912, %v1900, -1e+09
    %vm1925 = vcmask 130048
    %v1926 = vsel %vm1925, %v1913, -inf
    %1927 = vmax.xlane.f32.xlu0 %v1926
    %v1928 = vpop.xlane.xlu0 %1927
    %v1929 = vsel %vm1925, %v1914, -inf
    %1930 = vmax.xlane.f32.xlu0 %v1929
    %v1931 = vpop.xlane.xlu0 %1930
    %v1932 = vsel %vm1925, %v1915, -inf
    %1933 = vmax.xlane.f32.xlu0 %v1932
    %v1934 = vpop.xlane.xlu0 %1933
    %v1935 = vsel %vm1925, %v1916, -inf
    %1936 = vmax.xlane.f32.xlu0 %v1935
    %v1937 = vpop.xlane.xlu0 %1936
    %v1938 = vsel %vm1925, %v1917, -inf
    %1939 = vmax.xlane.f32.xlu0 %v1938
    %v1940 = vpop.xlane.xlu0 %1939
    %v1941 = vsel %vm1925, %v1918, -inf
    %1942 = vmax.xlane.f32.xlu0 %v1941
    %v1943 = vpop.xlane.xlu0 %1942
    %v1944 = vsel %vm1925, %v1919, -inf
    %1945 = vmax.xlane.f32.xlu0 %v1944
    %v1946 = vpop.xlane.xlu0 %1945
    %v1947 = vsel %vm1925, %v1920, -inf
    %1948 = vmax.xlane.f32.xlu0 %v1947
    %v1949 = vpop.xlane.xlu0 %1948
    %v1950 = vsel %vm1925, %v1921, -inf
    %1951 = vmax.xlane.f32.xlu0 %v1950
    %v1952 = vpop.xlane.xlu0 %1951
    %v1953 = vsel %vm1925, %v1922, -inf
    %1954 = vmax.xlane.f32.xlu0 %v1953
    %v1955 = vpop.xlane.xlu0 %1954
    %v1956 = vsel %vm1925, %v1923, -inf
    %1957 = vmax.xlane.f32.xlu0 %v1956
    %v1958 = vpop.xlane.xlu0 %1957
    %v1959 = vsel %vm1925, %v1924, -inf
    %1960 = vmax.xlane.f32.xlu0 %v1959
    %v1961 = vpop.xlane.xlu0 %1960
    %v1962 = vsub.f32 %v1913, %v1928
    %v1963 = vsub.f32 %v1914, %v1931
    %v1964 = vsub.f32 %v1915, %v1934
    %v1965 = vsub.f32 %v1916, %v1937
    %v1966 = vsub.f32 %v1917, %v1940
    %v1967 = vsub.f32 %v1918, %v1943
    %v1968 = vsub.f32 %v1919, %v1946
    %v1969 = vsub.f32 %v1920, %v1949
    %v1970 = vsub.f32 %v1921, %v1952
    %v1971 = vsub.f32 %v1922, %v1955
    %v1972 = vsub.f32 %v1923, %v1958
    %v1973 = vsub.f32 %v1924, %v1961
    %v1974 = vmul.f32 %v1962, 1.442695
    %v1975 = vpow.pop %v1974
    %v1976 = vmul.f32 %v1963, 1.442695
    %v1977 = vpow.pop %v1976
    %v1978 = vmul.f32 %v1964, 1.442695
    %v1979 = vpow.pop %v1978
    %v1980 = vmul.f32 %v1965, 1.442695
    %v1981 = vpow.pop %v1980
    %v1982 = vmul.f32 %v1966, 1.442695
    %v1983 = vpow.pop %v1982
    %v1984 = vmul.f32 %v1967, 1.442695
    %v1985 = vpow.pop %v1984
    %v1986 = vmul.f32 %v1968, 1.442695
    %v1987 = vpow.pop %v1986
    %v1988 = vmul.f32 %v1969, 1.442695
    %v1989 = vpow.pop %v1988
    %v1990 = vmul.f32 %v1970, 1.442695
    %v1991 = vpow.pop %v1990
    %v1992 = vmul.f32 %v1971, 1.442695
    %v1993 = vpow.pop %v1992
    %v1994 = vmul.f32 %v1972, 1.442695
    %v1995 = vpow.pop %v1994
    %v1996 = vmul.f32 %v1973, 1.442695
    %v1997 = vpow.pop %v1996
    %v1998 = vsel %vm1925, %v1975, 0.0
    %1999 = vadd.xlane.f32.xlu0 %v1998
    %v2000 = vpop.xlane.xlu0 %1999
    %v2001 = vsel %vm1925, %v1977, 0.0
    %2002 = vadd.xlane.f32.xlu0 %v2001
    %v2003 = vpop.xlane.xlu0 %2002
    %v2004 = vsel %vm1925, %v1979, 0.0
    %2005 = vadd.xlane.f32.xlu0 %v2004
    %v2006 = vpop.xlane.xlu0 %2005
    %v2007 = vsel %vm1925, %v1981, 0.0
    %2008 = vadd.xlane.f32.xlu0 %v2007
    %v2009 = vpop.xlane.xlu0 %2008
    %v2010 = vsel %vm1925, %v1983, 0.0
    %2011 = vadd.xlane.f32.xlu0 %v2010
    %v2012 = vpop.xlane.xlu0 %2011
    %v2013 = vsel %vm1925, %v1985, 0.0
    %2014 = vadd.xlane.f32.xlu0 %v2013
    %v2015 = vpop.xlane.xlu0 %2014
    %v2016 = vsel %vm1925, %v1987, 0.0
    %2017 = vadd.xlane.f32.xlu0 %v2016
    %v2018 = vpop.xlane.xlu0 %2017
    %v2019 = vsel %vm1925, %v1989, 0.0
    %2020 = vadd.xlane.f32.xlu0 %v2019
    %v2021 = vpop.xlane.xlu0 %2020
    %v2022 = vsel %vm1925, %v1991, 0.0
    %2023 = vadd.xlane.f32.xlu0 %v2022
    %v2024 = vpop.xlane.xlu0 %2023
    %v2025 = vsel %vm1925, %v1993, 0.0
    %2026 = vadd.xlane.f32.xlu0 %v2025
    %v2027 = vpop.xlane.xlu0 %2026
    %v2028 = vsel %vm1925, %v1995, 0.0
    %2029 = vadd.xlane.f32.xlu0 %v2028
    %v2030 = vpop.xlane.xlu0 %2029
    %v2031 = vsel %vm1925, %v1997, 0.0
    %2032 = vadd.xlane.f32.xlu0 %v2031
    %v2033 = vpop.xlane.xlu0 %2032
    %v2034 = vrcp.pop %v2000
    %v2035 = vrcp.pop %v2003
    %v2036 = vrcp.pop %v2006
    %v2037 = vrcp.pop %v2009
    %v2038 = vrcp.pop %v2012
    %v2039 = vrcp.pop %v2015
    %v2040 = vrcp.pop %v2018
    %v2041 = vrcp.pop %v2021
    %v2042 = vrcp.pop %v2024
    %v2043 = vrcp.pop %v2027
    %v2044 = vrcp.pop %v2030
    %v2045 = vrcp.pop %v2033
    %v2046 = vmul.f32 %v1975, %v2034
    %v2047 = vmul.f32 %v1977, %v2035
    %v2048 = vmul.f32 %v1979, %v2036
    %v2049 = vmul.f32 %v1981, %v2037
    %v2050 = vmul.f32 %v1983, %v2038
    %v2051 = vmul.f32 %v1985, %v2039
    %v2052 = vmul.f32 %v1987, %v2040
    %v2053 = vmul.f32 %v1989, %v2041
    %v2054 = vmul.f32 %v1991, %v2042
    %v2055 = vmul.f32 %v1993, %v2043
    %v2056 = vmul.f32 %v1995, %v2044
    %v2057 = vmul.f32 %v1997, %v2045
    %v2058 = vlaneseq
    %v2059 = vand.u32 %v2058, 127
    %vm2060 = vcmp.ge.s32.totalorder %v2059, 0
    %vm2061 = vcmp.lt.s32.totalorder %v2059, 32
    %vm2062 = vmand %vm2060, %vm2061
    %v2063 = vsel %vm2062, 1, 0
    %v2064 = vcvt.s32.f32 %v2063
    %vm2065 = vcmp.ge.s32.totalorder %v2059, 32
    %vm2066 = vcmp.lt.s32.totalorder %v2059, 64
    %vm2067 = vmand %vm2065, %vm2066
    %v2068 = vsel %vm2067, 1, 0
    %v2069 = vcvt.s32.f32 %v2068
    %vm2070 = vcmp.ge.s32.totalorder %v2059, 64
    %vm2071 = vcmp.lt.s32.totalorder %v2059, 96
    %vm2072 = vmand %vm2070, %vm2071
    %v2073 = vsel %vm2072, 1, 0
    %v2074 = vcvt.s32.f32 %v2073
    %v2075 = vld [vmem:[%s13] sm:$0xff]
    %v2076 = vld [vmem:[%s13 + $0x8] sm:$0xff]
    %v2077 = vld [vmem:[%s13 + $0x10] sm:$0xff]
    %v2078 = vld [vmem:[%s13 + $0x18] sm:$0xff]
    %v2079 = vmul.f32 %v1837, %v2064
    %v2080 = vmul.f32 %v1838, %v2064
    %v2081 = vmul.f32 %v1837, %v2069
    %v2082 = vmul.f32 %v1838, %v2069
    %v2084 = vsel %vm1925, %v2048, 0
    %v2087 = vsel %vm1925, %v2049, 0
    %2089 = vmatprep.subr.mxu0 0.0
    %2090 = vmatpush1.msra.mxu0 0.0
    %2091 = vmatprep.subr.mxu0 0.0
    %2092 = vmatpush1.msra.mxu0 0.0
    %2093 = vmatprep.subr.mxu0 0.0
    %2094 = vmatpush1.msra.mxu0 0.0
    %2095 = vmatprep.subr.mxu0 0.0
    %2096 = vmatpush1.msra.mxu0 0.0
    %2097 = vmatprep.subr.mxu0 0.0
    %2098 = vmatpush1.msra.mxu0 0.0
    %2099 = vmatprep.subr.mxu0 0.0
    %2100 = vmatpush1.msra.mxu0 0.0
    %2101 = vmatprep.subr.mxu0 0.0
    %2102 = vmatpush1.msra.mxu0 0.0
    %2103 = vmatprep.subr.mxu0 0.0
    %2104 = vmatpush1.msra.mxu0 0.0
    %2105 = vmatprep.subr.mxu0 0.0
    %2106 = vmatpush1.msra.mxu0 0.0
    %2107 = vmatprep.subr.mxu0 0.0
    %2108 = vmatpush1.msra.mxu0 0.0
    %2109 = vmatprep.subr.mxu0 0.0
    %2110 = vmatpush1.msra.mxu0 0.0
    %2111 = vmatprep.subr.mxu0 0.0
    %2112 = vmatpush1.msra.mxu0 0.0
    %2113 = vmatprep.subr.mxu0 0.0
    %2114 = vmatpush1.msra.mxu0 0.0
    %2115 = vmatprep.subr.mxu0 0.0
    %2116 = vmatpush1.msra.mxu0 0.0
    %2117 = vmatprep.subr.mxu0 0.0
    %2118 = vmatpush1.msra.mxu0 %v2082
    %2119 = vmatprep.subr.mxu0 0.0
    %2120 = vmatpush1.msra.mxu0 %v2081
    %2121 = vmatprep.subr.mxu0 0.0
    %2122 = vmatpush2.msra.mxu0 0.0
    %2123 = vmatprep.subr.mxu0 0.0
    %2124 = vmatpush2.msra.mxu0 0.0
    %2125 = vmatprep.subr.mxu0 0.0
    %2126 = vmatpush2.msra.mxu0 0.0
    %2127 = vmatprep.subr.mxu0 0.0
    %2128 = vmatpush2.msra.mxu0 0.0
    %2129 = vmatprep.subr.mxu0 0.0
    %2130 = vmatpush2.msra.mxu0 0.0
    %2131 = vmatprep.subr.mxu0 0.0
    %2132 = vmatpush2.msra.mxu0 0.0
    %2133 = vmatprep.subr.mxu0 0.0
    %2134 = vmatpush2.msra.mxu0 0.0
    %2135 = vmatprep.subr.mxu0 0.0
    %2136 = vmatpush2.msra.mxu0 0.0
    %2137 = vmatprep.subr.mxu0 0.0
    %2138 = vmatpush2.msra.mxu0 0.0
    %2139 = vmatprep.subr.mxu0 0.0
    %2140 = vmatpush2.msra.mxu0 0.0
    %2141 = vmatprep.subr.mxu0 0.0
    %2142 = vmatpush2.msra.mxu0 0.0
    %2143 = vmatprep.subr.mxu0 0.0
    %2144 = vmatpush2.msra.mxu0 0.0
    %2145 = vmatprep.subr.mxu0 0.0
    %2146 = vmatpush2.msra.mxu0 0.0
    %2147 = vmatprep.subr.mxu0 0.0
    %2148 = vmatpush2.msra.mxu0 0.0
    %2149 = vmatprep.subr.mxu0 0.0
    %2150 = vmatpush2.msra.mxu0 0.0
    %2151 = vmatprep.subr.mxu0 0.0
    %2152 = vmatpush2.msra.mxu0 0.0
    %2153 = vmatprep.mubr.f32.mxu0 0.0
    %2154 = vmatmul.mubr.f32.gmra.mxu0 %v2084
    %v2155 = vpop.f32.mrf.mxu0
    %v2156 = vadd.f32 0.0, %v2155
    %v2157 = vpop.f32.mrf.mxu0
    %2158 = vmatprep.mubr.f32.mxu0 0.0
    %2159 = vmatmul.mubr.f32.gmra.mxu0 %v2087
    %v2160 = vpop.f32.mrf.mxu0
    %v2161 = vadd.f32 0.0, %v2160
    %v2162 = vpop.f32.mrf.mxu0
    %2163 = vdwg.mxu0
    %v2165 = vsel %vm1925, %v2046, 0
    %v2168 = vsel %vm1925, %v2047, 0
    %2170 = vmatprep.subr.mxu0 0.0
    %2171 = vmatpush1.msra.mxu0 0.0
    %2172 = vmatprep.subr.mxu0 0.0
    %2173 = vmatpush1.msra.mxu0 0.0
    %2174 = vmatprep.subr.mxu0 0.0
    %2175 = vmatpush1.msra.mxu0 0.0
    %2176 = vmatprep.subr.mxu0 0.0
    %2177 = vmatpush1.msra.mxu0 0.0
    %2178 = vmatprep.subr.mxu0 0.0
    %2179 = vmatpush1.msra.mxu0 0.0
    %2180 = vmatprep.subr.mxu0 0.0
    %2181 = vmatpush1.msra.mxu0 0.0
    %2182 = vmatprep.subr.mxu0 0.0
    %2183 = vmatpush1.msra.mxu0 0.0
    %2184 = vmatprep.subr.mxu0 0.0
    %2185 = vmatpush1.msra.mxu0 0.0
    %2186 = vmatprep.subr.mxu0 0.0
    %2187 = vmatpush1.msra.mxu0 0.0
    %2188 = vmatprep.subr.mxu0 0.0
    %2189 = vmatpush1.msra.mxu0 0.0
    %2190 = vmatprep.subr.mxu0 0.0
    %2191 = vmatpush1.msra.mxu0 0.0
    %2192 = vmatprep.subr.mxu0 0.0
    %2193 = vmatpush1.msra.mxu0 0.0
    %2194 = vmatprep.subr.mxu0 0.0
    %2195 = vmatpush1.msra.mxu0 0.0
    %2196 = vmatprep.subr.mxu0 0.0
    %2197 = vmatpush1.msra.mxu0 0.0
    %2198 = vmatprep.subr.mxu0 0.0
    %2199 = vmatpush1.msra.mxu0 %v2080
    %2200 = vmatprep.subr.mxu0 0.0
    %2201 = vmatpush1.msra.mxu0 %v2079
    %2202 = vmatprep.subr.mxu0 0.0
    %2203 = vmatpush2.msra.mxu0 0.0
    %2204 = vmatprep.subr.mxu0 0.0
    %2205 = vmatpush2.msra.mxu0 0.0
    %2206 = vmatprep.subr.mxu0 0.0
    %2207 = vmatpush2.msra.mxu0 0.0
    %2208 = vmatprep.subr.mxu0 0.0
    %2209 = vmatpush2.msra.mxu0 0.0
    %2210 = vmatprep.subr.mxu0 0.0
    %2211 = vmatpush2.msra.mxu0 0.0
    %2212 = vmatprep.subr.mxu0 0.0
    %2213 = vmatpush2.msra.mxu0 0.0
    %2214 = vmatprep.subr.mxu0 0.0
    %2215 = vmatpush2.msra.mxu0 0.0
    %2216 = vmatprep.subr.mxu0 0.0
    %2217 = vmatpush2.msra.mxu0 0.0
    %2218 = vmatprep.subr.mxu0 0.0
    %2219 = vmatpush2.msra.mxu0 0.0
    %2220 = vmatprep.subr.mxu0 0.0
    %2221 = vmatpush2.msra.mxu0 0.0
    %2222 = vmatprep.subr.mxu0 0.0
    %2223 = vmatpush2.msra.mxu0 0.0
    %2224 = vmatprep.subr.mxu0 0.0
    %2225 = vmatpush2.msra.mxu0 0.0
    %2226 = vmatprep.subr.mxu0 0.0
    %2227 = vmatpush2.msra.mxu0 0.0
    %2228 = vmatprep.subr.mxu0 0.0
    %2229 = vmatpush2.msra.mxu0 0.0
    %2230 = vmatprep.subr.mxu0 0.0
    %2231 = vmatpush2.msra.mxu0 0.0
    %2232 = vmatprep.subr.mxu0 0.0
    %2233 = vmatpush2.msra.mxu0 0.0
    %2234 = vmatprep.mubr.f32.mxu0 0.0
    %2235 = vmatmul.mubr.f32.gmra.mxu0 %v2165
    %v2236 = vpop.f32.mrf.mxu0
    %v2237 = vadd.f32 %v2156, %v2236
    %v2238 = vpop.f32.mrf.mxu0
    %2239 = vmatprep.mubr.f32.mxu0 0.0
    %2240 = vmatmul.mubr.f32.gmra.mxu0 %v2168
    %v2241 = vpop.f32.mrf.mxu0
    %v2242 = vadd.f32 %v2161, %v2241
    %v2243 = vpop.f32.mrf.mxu0
    %2244 = vdwg.mxu0
    %v2245 = vmul.f32 %v1837, %v2074
    %v2246 = vmul.f32 %v1838, %v2074
    %v2248 = vsel %vm1925, %v2050, 0
    %v2251 = vsel %vm1925, %v2051, 0
    %2253 = vmatprep.subr.mxu0 0.0
    %2254 = vmatpush1.msra.mxu0 0.0
    %2255 = vmatprep.subr.mxu0 0.0
    %2256 = vmatpush1.msra.mxu0 0.0
    %2257 = vmatprep.subr.mxu0 0.0
    %2258 = vmatpush1.msra.mxu0 0.0
    %2259 = vmatprep.subr.mxu0 0.0
    %2260 = vmatpush1.msra.mxu0 0.0
    %2261 = vmatprep.subr.mxu0 0.0
    %2262 = vmatpush1.msra.mxu0 0.0
    %2263 = vmatprep.subr.mxu0 0.0
    %2264 = vmatpush1.msra.mxu0 0.0
    %2265 = vmatprep.subr.mxu0 0.0
    %2266 = vmatpush1.msra.mxu0 0.0
    %2267 = vmatprep.subr.mxu0 0.0
    %2268 = vmatpush1.msra.mxu0 0.0
    %2269 = vmatprep.subr.mxu0 0.0
    %2270 = vmatpush1.msra.mxu0 0.0
    %2271 = vmatprep.subr.mxu0 0.0
    %2272 = vmatpush1.msra.mxu0 0.0
    %2273 = vmatprep.subr.mxu0 0.0
    %2274 = vmatpush1.msra.mxu0 0.0
    %2275 = vmatprep.subr.mxu0 0.0
    %2276 = vmatpush1.msra.mxu0 0.0
    %2277 = vmatprep.subr.mxu0 0.0
    %2278 = vmatpush1.msra.mxu0 0.0
    %2279 = vmatprep.subr.mxu0 0.0
    %2280 = vmatpush1.msra.mxu0 0.0
    %2281 = vmatprep.subr.mxu0 0.0
    %2282 = vmatpush1.msra.mxu0 %v2246
    %2283 = vmatprep.subr.mxu0 0.0
    %2284 = vmatpush1.msra.mxu0 %v2245
    %2285 = vmatprep.subr.mxu0 0.0
    %2286 = vmatpush2.msra.mxu0 0.0
    %2287 = vmatprep.subr.mxu0 0.0
    %2288 = vmatpush2.msra.mxu0 0.0
    %2289 = vmatprep.subr.mxu0 0.0
    %2290 = vmatpush2.msra.mxu0 0.0
    %2291 = vmatprep.subr.mxu0 0.0
    %2292 = vmatpush2.msra.mxu0 0.0
    %2293 = vmatprep.subr.mxu0 0.0
    %2294 = vmatpush2.msra.mxu0 0.0
    %2295 = vmatprep.subr.mxu0 0.0
    %2296 = vmatpush2.msra.mxu0 0.0
    %2297 = vmatprep.subr.mxu0 0.0
    %2298 = vmatpush2.msra.mxu0 0.0
    %2299 = vmatprep.subr.mxu0 0.0
    %2300 = vmatpush2.msra.mxu0 0.0
    %2301 = vmatprep.subr.mxu0 0.0
    %2302 = vmatpush2.msra.mxu0 0.0
    %2303 = vmatprep.subr.mxu0 0.0
    %2304 = vmatpush2.msra.mxu0 0.0
    %2305 = vmatprep.subr.mxu0 0.0
    %2306 = vmatpush2.msra.mxu0 0.0
    %2307 = vmatprep.subr.mxu0 0.0
    %2308 = vmatpush2.msra.mxu0 0.0
    %2309 = vmatprep.subr.mxu0 0.0
    %2310 = vmatpush2.msra.mxu0 0.0
    %2311 = vmatprep.subr.mxu0 0.0
    %2312 = vmatpush2.msra.mxu0 0.0
    %2313 = vmatprep.subr.mxu0 0.0
    %2314 = vmatpush2.msra.mxu0 0.0
    %2315 = vmatprep.subr.mxu0 0.0
    %2316 = vmatpush2.msra.mxu0 0.0
    %2317 = vmatprep.mubr.f32.mxu0 0.0
    %2318 = vmatmul.mubr.f32.gmra.mxu0 %v2248
    %v2319 = vpop.f32.mrf.mxu0
    %v2320 = vadd.f32 0.0, %v2319
    %v2321 = vpop.f32.mrf.mxu0
    %2322 = vmatprep.mubr.f32.mxu0 0.0
    %2323 = vmatmul.mubr.f32.gmra.mxu0 %v2251
    %v2324 = vpop.f32.mrf.mxu0
    %v2325 = vadd.f32 0.0, %v2324
    %v2326 = vpop.f32.mrf.mxu0
    %2327 = vdwg.mxu0
    %v2328 = vadd.f32 %v2237, %v2320
    %v2329 = vadd.f32 %v2242, %v2325
    %v2330 = vmul.f32 %v1839, %v2064
    %v2331 = vmul.f32 %v1840, %v2064
    %v2332 = vmul.f32 %v1839, %v2069
    %v2333 = vmul.f32 %v1840, %v2069
    %v2335 = vsel %vm1925, %v2054, 0
    %v2338 = vsel %vm1925, %v2055, 0
    %2340 = vmatprep.subr.mxu0 0.0
    %2341 = vmatpush1.msra.mxu0 0.0
    %2342 = vmatprep.subr.mxu0 0.0
    %2343 = vmatpush1.msra.mxu0 0.0
    %2344 = vmatprep.subr.mxu0 0.0
    %2345 = vmatpush1.msra.mxu0 0.0
    %2346 = vmatprep.subr.mxu0 0.0
    %2347 = vmatpush1.msra.mxu0 0.0
    %2348 = vmatprep.subr.mxu0 0.0
    %2349 = vmatpush1.msra.mxu0 0.0
    %2350 = vmatprep.subr.mxu0 0.0
    %2351 = vmatpush1.msra.mxu0 0.0
    %2352 = vmatprep.subr.mxu0 0.0
    %2353 = vmatpush1.msra.mxu0 0.0
    %2354 = vmatprep.subr.mxu0 0.0
    %2355 = vmatpush1.msra.mxu0 0.0
    %2356 = vmatprep.subr.mxu0 0.0
    %2357 = vmatpush1.msra.mxu0 0.0
    %2358 = vmatprep.subr.mxu0 0.0
    %2359 = vmatpush1.msra.mxu0 0.0
    %2360 = vmatprep.subr.mxu0 0.0
    %2361 = vmatpush1.msra.mxu0 0.0
    %2362 = vmatprep.subr.mxu0 0.0
    %2363 = vmatpush1.msra.mxu0 0.0
    %2364 = vmatprep.subr.mxu0 0.0
    %2365 = vmatpush1.msra.mxu0 0.0
    %2366 = vmatprep.subr.mxu0 0.0
    %2367 = vmatpush1.msra.mxu0 0.0
    %2368 = vmatprep.subr.mxu0 0.0
    %2369 = vmatpush1.msra.mxu0 %v2333
    %2370 = vmatprep.subr.mxu0 0.0
    %2371 = vmatpush1.msra.mxu0 %v2332
    %2372 = vmatprep.subr.mxu0 0.0
    %2373 = vmatpush2.msra.mxu0 0.0
    %2374 = vmatprep.subr.mxu0 0.0
    %2375 = vmatpush2.msra.mxu0 0.0
    %2376 = vmatprep.subr.mxu0 0.0
    %2377 = vmatpush2.msra.mxu0 0.0
    %2378 = vmatprep.subr.mxu0 0.0
    %2379 = vmatpush2.msra.mxu0 0.0
    %2380 = vmatprep.subr.mxu0 0.0
    %2381 = vmatpush2.msra.mxu0 0.0
    %2382 = vmatprep.subr.mxu0 0.0
    %2383 = vmatpush2.msra.mxu0 0.0
    %2384 = vmatprep.subr.mxu0 0.0
    %2385 = vmatpush2.msra.mxu0 0.0
    %2386 = vmatprep.subr.mxu0 0.0
    %2387 = vmatpush2.msra.mxu0 0.0
    %2388 = vmatprep.subr.mxu0 0.0
    %2389 = vmatpush2.msra.mxu0 0.0
    %2390 = vmatprep.subr.mxu0 0.0
    %2391 = vmatpush2.msra.mxu0 0.0
    %2392 = vmatprep.subr.mxu0 0.0
    %2393 = vmatpush2.msra.mxu0 0.0
    %2394 = vmatprep.subr.mxu0 0.0
    %2395 = vmatpush2.msra.mxu0 0.0
    %2396 = vmatprep.subr.mxu0 0.0
    %2397 = vmatpush2.msra.mxu0 0.0
    %2398 = vmatprep.subr.mxu0 0.0
    %2399 = vmatpush2.msra.mxu0 0.0
    %2400 = vmatprep.subr.mxu0 0.0
    %2401 = vmatpush2.msra.mxu0 0.0
    %2402 = vmatprep.subr.mxu0 0.0
    %2403 = vmatpush2.msra.mxu0 0.0
    %2404 = vmatprep.mubr.f32.mxu0 0.0
    %2405 = vmatmul.mubr.f32.gmra.mxu0 %v2335
    %v2406 = vpop.f32.mrf.mxu0
    %v2407 = vadd.f32 0.0, %v2406
    %v2408 = vpop.f32.mrf.mxu0
    %2409 = vmatprep.mubr.f32.mxu0 0.0
    %2410 = vmatmul.mubr.f32.gmra.mxu0 %v2338
    %v2411 = vpop.f32.mrf.mxu0
    %v2412 = vadd.f32 0.0, %v2411
    %v2413 = vpop.f32.mrf.mxu0
    %2414 = vdwg.mxu0
    %v2416 = vsel %vm1925, %v2052, 0
    %v2419 = vsel %vm1925, %v2053, 0
    %2421 = vmatprep.subr.mxu0 0.0
    %2422 = vmatpush1.msra.mxu0 0.0
    %2423 = vmatprep.subr.mxu0 0.0
    %2424 = vmatpush1.msra.mxu0 0.0
    %2425 = vmatprep.subr.mxu0 0.0
    %2426 = vmatpush1.msra.mxu0 0.0
    %2427 = vmatprep.subr.mxu0 0.0
    %2428 = vmatpush1.msra.mxu0 0.0
    %2429 = vmatprep.subr.mxu0 0.0
    %2430 = vmatpush1.msra.mxu0 0.0
    %2431 = vmatprep.subr.mxu0 0.0
    %2432 = vmatpush1.msra.mxu0 0.0
    %2433 = vmatprep.subr.mxu0 0.0
    %2434 = vmatpush1.msra.mxu0 0.0
    %2435 = vmatprep.subr.mxu0 0.0
    %2436 = vmatpush1.msra.mxu0 0.0
    %2437 = vmatprep.subr.mxu0 0.0
    %2438 = vmatpush1.msra.mxu0 0.0
    %2439 = vmatprep.subr.mxu0 0.0
    %2440 = vmatpush1.msra.mxu0 0.0
    %2441 = vmatprep.subr.mxu0 0.0
    %2442 = vmatpush1.msra.mxu0 0.0
    %2443 = vmatprep.subr.mxu0 0.0
    %2444 = vmatpush1.msra.mxu0 0.0
    %2445 = vmatprep.subr.mxu0 0.0
    %2446 = vmatpush1.msra.mxu0 0.0
    %2447 = vmatprep.subr.mxu0 0.0
    %2448 = vmatpush1.msra.mxu0 0.0
    %2449 = vmatprep.subr.mxu0 0.0
    %2450 = vmatpush1.msra.mxu0 %v2331
    %2451 = vmatprep.subr.mxu0 0.0
    %2452 = vmatpush1.msra.mxu0 %v2330
    %2453 = vmatprep.subr.mxu0 0.0
    %2454 = vmatpush2.msra.mxu0 0.0
    %2455 = vmatprep.subr.mxu0 0.0
    %2456 = vmatpush2.msra.mxu0 0.0
    %2457 = vmatprep.subr.mxu0 0.0
    %2458 = vmatpush2.msra.mxu0 0.0
    %2459 = vmatprep.subr.mxu0 0.0
    %2460 = vmatpush2.msra.mxu0 0.0
    %2461 = vmatprep.subr.mxu0 0.0
    %2462 = vmatpush2.msra.mxu0 0.0
    %2463 = vmatprep.subr.mxu0 0.0
    %2464 = vmatpush2.msra.mxu0 0.0
    %2465 = vmatprep.subr.mxu0 0.0
    %2466 = vmatpush2.msra.mxu0 0.0
    %2467 = vmatprep.subr.mxu0 0.0
    %2468 = vmatpush2.msra.mxu0 0.0
    %2469 = vmatprep.subr.mxu0 0.0
    %2470 = vmatpush2.msra.mxu0 0.0
    %2471 = vmatprep.subr.mxu0 0.0
    %2472 = vmatpush2.msra.mxu0 0.0
    %2473 = vmatprep.subr.mxu0 0.0
    %2474 = vmatpush2.msra.mxu0 0.0
    %2475 = vmatprep.subr.mxu0 0.0
    %2476 = vmatpush2.msra.mxu0 0.0
    %2477 = vmatprep.subr.mxu0 0.0
    %2478 = vmatpush2.msra.mxu0 0.0
    %2479 = vmatprep.subr.mxu0 0.0
    %2480 = vmatpush2.msra.mxu0 0.0
    %2481 = vmatprep.subr.mxu0 0.0
    %2482 = vmatpush2.msra.mxu0 0.0
    %2483 = vmatprep.subr.mxu0 0.0
    %2484 = vmatpush2.msra.mxu0 0.0
    %2485 = vmatprep.mubr.f32.mxu0 0.0
    %2486 = vmatmul.mubr.f32.gmra.mxu0 %v2416
    %v2487 = vpop.f32.mrf.mxu0
    %v2488 = vadd.f32 %v2407, %v2487
    %v2489 = vpop.f32.mrf.mxu0
    %2490 = vmatprep.mubr.f32.mxu0 0.0
    %2491 = vmatmul.mubr.f32.gmra.mxu0 %v2419
    %v2492 = vpop.f32.mrf.mxu0
    %v2493 = vadd.f32 %v2412, %v2492
    %v2494 = vpop.f32.mrf.mxu0
    %2495 = vdwg.mxu0
    %v2496 = vmul.f32 %v1839, %v2074
    %v2497 = vmul.f32 %v1840, %v2074
    %v2499 = vsel %vm1925, %v2056, 0
    %v2502 = vsel %vm1925, %v2057, 0
    %2504 = vmatprep.subr.mxu0 0.0
    %2505 = vmatpush1.msra.mxu0 0.0
    %2506 = vmatprep.subr.mxu0 0.0
    %2507 = vmatpush1.msra.mxu0 0.0
    %2508 = vmatprep.subr.mxu0 0.0
    %2509 = vmatpush1.msra.mxu0 0.0
    %2510 = vmatprep.subr.mxu0 0.0
    %2511 = vmatpush1.msra.mxu0 0.0
    %2512 = vmatprep.subr.mxu0 0.0
    %2513 = vmatpush1.msra.mxu0 0.0
    %2514 = vmatprep.subr.mxu0 0.0
    %2515 = vmatpush1.msra.mxu0 0.0
    %2516 = vmatprep.subr.mxu0 0.0
    %2517 = vmatpush1.msra.mxu0 0.0
    %2518 = vmatprep.subr.mxu0 0.0
    %2519 = vmatpush1.msra.mxu0 0.0
    %2520 = vmatprep.subr.mxu0 0.0
    %2521 = vmatpush1.msra.mxu0 0.0
    %2522 = vmatprep.subr.mxu0 0.0
    %2523 = vmatpush1.msra.mxu0 0.0
    %2524 = vmatprep.subr.mxu0 0.0
    %2525 = vmatpush1.msra.mxu0 0.0
    %2526 = vmatprep.subr.mxu0 0.0
    %2527 = vmatpush1.msra.mxu0 0.0
    %2528 = vmatprep.subr.mxu0 0.0
    %2529 = vmatpush1.msra.mxu0 0.0
    %2530 = vmatprep.subr.mxu0 0.0
    %2531 = vmatpush1.msra.mxu0 0.0
    %2532 = vmatprep.subr.mxu0 0.0
    %2533 = vmatpush1.msra.mxu0 %v2497
    %2534 = vmatprep.subr.mxu0 0.0
    %2535 = vmatpush1.msra.mxu0 %v2496
    %2536 = vmatprep.subr.mxu0 0.0
    %2537 = vmatpush2.msra.mxu0 0.0
    %2538 = vmatprep.subr.mxu0 0.0
    %2539 = vmatpush2.msra.mxu0 0.0
    %2540 = vmatprep.subr.mxu0 0.0
    %2541 = vmatpush2.msra.mxu0 0.0
    %2542 = vmatprep.subr.mxu0 0.0
    %2543 = vmatpush2.msra.mxu0 0.0
    %2544 = vmatprep.subr.mxu0 0.0
    %2545 = vmatpush2.msra.mxu0 0.0
    %2546 = vmatprep.subr.mxu0 0.0
    %2547 = vmatpush2.msra.mxu0 0.0
    %2548 = vmatprep.subr.mxu0 0.0
    %2549 = vmatpush2.msra.mxu0 0.0
    %2550 = vmatprep.subr.mxu0 0.0
    %2551 = vmatpush2.msra.mxu0 0.0
    %2552 = vmatprep.subr.mxu0 0.0
    %2553 = vmatpush2.msra.mxu0 0.0
    %2554 = vmatprep.subr.mxu0 0.0
    %2555 = vmatpush2.msra.mxu0 0.0
    %2556 = vmatprep.subr.mxu0 0.0
    %2557 = vmatpush2.msra.mxu0 0.0
    %2558 = vmatprep.subr.mxu0 0.0
    %2559 = vmatpush2.msra.mxu0 0.0
    %2560 = vmatprep.subr.mxu0 0.0
    %2561 = vmatpush2.msra.mxu0 0.0
    %2562 = vmatprep.subr.mxu0 0.0
    %2563 = vmatpush2.msra.mxu0 0.0
    %2564 = vmatprep.subr.mxu0 0.0
    %2565 = vmatpush2.msra.mxu0 0.0
    %2566 = vmatprep.subr.mxu0 0.0
    %2567 = vmatpush2.msra.mxu0 0.0
    %2568 = vmatprep.mubr.f32.mxu0 0.0
    %2569 = vmatmul.mubr.f32.gmra.mxu0 %v2499
    %v2570 = vpop.f32.mrf.mxu0
    %v2571 = vadd.f32 0.0, %v2570
    %v2572 = vpop.f32.mrf.mxu0
    %2573 = vmatprep.mubr.f32.mxu0 0.0
    %2574 = vmatmul.mubr.f32.gmra.mxu0 %v2502
    %v2575 = vpop.f32.mrf.mxu0
    %v2576 = vadd.f32 0.0, %v2575
    %v2577 = vpop.f32.mrf.mxu0
    %2578 = vdwg.mxu0
    %v2579 = vadd.f32 %v2488, %v2571
    %v2580 = vadd.f32 %v2493, %v2576
    %2582 = vset.pattern.permute.xlu0 0
    %2583 = vperm.xlu0 %2582, %v2075
    %v2584 = vpop.permute.xlu0 %2583
    %2587 = vset.pattern.permute.xlu0 0
    %2588 = vperm.xlu0 %2587, %v2076
    %v2589 = vpop.permute.xlu0 %2588
    %2592 = vset.pattern.permute.xlu0 0
    %2593 = vperm.xlu0 %2592, %v2077
    %v2594 = vpop.permute.xlu0 %2593
    %2597 = vset.pattern.permute.xlu0 0
    %2598 = vperm.xlu0 %2597, %v2078
    %v2599 = vpop.permute.xlu0 %2598
    %v2601 = vmul.f32 %v2328, %v2584
    %v2602 = vmul.f32 %v2329, %v2589
    %v2603 = vmul.f32 %v2579, %v2594
    %v2604 = vmul.f32 %v2580, %v2599
    %v2605 = vsel %vm968, %v2601, -inf
    %v2606 = vsel %vm968, %v2602, -inf
    %v2607 = vmax.f32 %v2605, %v2606
    %v2608 = vrot.slane %v2607, 4
    %v2609 = vmax.f32 %v2607, %v2608
    %v2610 = vrot.slane %v2609, 2
    %v2611 = vmax.f32 %v2609, %v2610
    %v2612 = vrot.slane %v2611, 1
    %v2613 = vmax.f32 %v2611, %v2612
    %v2614 = vsel %vm968, %v2603, -inf
    %v2615 = vsel %vm968, %v2604, -inf
    %v2616 = vmax.f32 %v2614, %v2615
    %v2617 = vrot.slane %v2616, 4
    %v2618 = vmax.f32 %v2616, %v2617
    %v2619 = vrot.slane %v2618, 2
    %v2620 = vmax.f32 %v2618, %v2619
    %v2621 = vrot.slane %v2620, 1
    %v2622 = vmax.f32 %v2620, %v2621
    %v2623 = vld [vmem:[%s14] sm:$0xff]
    %v2624 = vld [vmem:[%s14 + $0x8] sm:$0xff]
    %v2625 = vld [vmem:[%s14 + $0x10] sm:$0xff]
    %v2626 = vld [vmem:[%s14 + $0x18] sm:$0xff]
    %v2627 = vld [vmem:[%s14 + $0x20] sm:$0xff]
    %v2628 = vld [vmem:[%s14 + $0x28] sm:$0xff]
    %v2629 = vld [vmem:[%s14 + $0x30] sm:$0xff]
    %v2630 = vld [vmem:[%s14 + $0x38] sm:$0xff]
    %v2631 = vld [vmem:[%s14 + $0x40] sm:$0xff]
    %v2632 = vld [vmem:[%s14 + $0x48] sm:$0xff]
    %v2633 = vld [vmem:[%s14 + $0x50] sm:$0xff]
    %v2634 = vld [vmem:[%s14 + $0x58] sm:$0xff]
    %v2635 = vld [vmem:[%s14 + $0x60] sm:$0xff]
    %v2636 = vld [vmem:[%s14 + $0x68] sm:$0xff]
    %v2637 = vld [vmem:[%s14 + $0x70] sm:$0xff]
    %v2638 = vld [vmem:[%s14 + $0x78] sm:$0xff]
    %v2639 = vld [vmem:[%s14 + $0x80] sm:$0xff]
    %v2640 = vld [vmem:[%s14 + $0x88] sm:$0xff]
    %v2641 = vld [vmem:[%s14 + $0x90] sm:$0xff]
    %v2642 = vld [vmem:[%s14 + $0x98] sm:$0xff]
    %v2643 = vld [vmem:[%s14 + $0xa0] sm:$0xff]
    %v2644 = vld [vmem:[%s14 + $0xa8] sm:$0xff]
    %v2645 = vld [vmem:[%s14 + $0xb0] sm:$0xff]
    %v2646 = vld [vmem:[%s14 + $0xb8] sm:$0xff]
    %v2647 = vld [vmem:[%s15] sm:$0x1]
    %v2648 = vld [vmem:[%s16] sm:$0xff]
    %v2649 = vld [vmem:[%s16 + $0x8] sm:$0xff]
    %v2650 = vld [vmem:[%s16 + $0x10] sm:$0xff]
    %v2651 = vld [vmem:[%s16 + $0x18] sm:$0xff]
    %v2652 = vld [vmem:[%s16 + $0x20] sm:$0xff]
    %v2653 = vld [vmem:[%s16 + $0x28] sm:$0xff]
    %v2654 = vld [vmem:[%s16 + $0x30] sm:$0x3]
    %v2655 = vld [vmem:[%s17] sm:$0x1]
    %v2657 = vsel %vm968, %v977, 0
    %2659 = vmatprep.subr.mxu0 0.0
    %2660 = vmatpush1.msra.mxu0 0.0
    %2661 = vmatprep.subr.mxu0 0.0
    %2662 = vmatpush1.msra.mxu0 0.0
    %2663 = vmatprep.subr.mxu0 0.0
    %2664 = vmatpush1.msra.mxu0 0.0
    %2665 = vmatprep.subr.mxu0 0.0
    %2666 = vmatpush1.msra.mxu0 0.0
    %2667 = vmatprep.subr.mxu0 0.0
    %2668 = vmatpush1.msra.mxu0 %v2634
    %2669 = vmatprep.subr.mxu0 0.0
    %2670 = vmatpush1.msra.mxu0 %v2633
    %2671 = vmatprep.subr.mxu0 0.0
    %2672 = vmatpush1.msra.mxu0 %v2632
    %2673 = vmatprep.subr.mxu0 0.0
    %2674 = vmatpush1.msra.mxu0 %v2631
    %2675 = vmatprep.subr.mxu0 0.0
    %2676 = vmatpush1.msra.mxu0 %v2630
    %2677 = vmatprep.subr.mxu0 0.0
    %2678 = vmatpush1.msra.mxu0 %v2629
    %2679 = vmatprep.subr.mxu0 0.0
    %2680 = vmatpush1.msra.mxu0 %v2628
    %2681 = vmatprep.subr.mxu0 0.0
    %2682 = vmatpush1.msra.mxu0 %v2627
    %2683 = vmatprep.subr.mxu0 0.0
    %2684 = vmatpush1.msra.mxu0 %v2626
    %2685 = vmatprep.subr.mxu0 0.0
    %2686 = vmatpush1.msra.mxu0 %v2625
    %2687 = vmatprep.subr.mxu0 0.0
    %2688 = vmatpush1.msra.mxu0 %v2624
    %2689 = vmatprep.subr.mxu0 0.0
    %2690 = vmatpush1.msra.mxu0 %v2623
    %2691 = vmatprep.subr.mxu0 0.0
    %2692 = vmatpush2.msra.mxu0 0.0
    %2693 = vmatprep.subr.mxu0 0.0
    %2694 = vmatpush2.msra.mxu0 0.0
    %2695 = vmatprep.subr.mxu0 0.0
    %2696 = vmatpush2.msra.mxu0 0.0
    %2697 = vmatprep.subr.mxu0 0.0
    %2698 = vmatpush2.msra.mxu0 0.0
    %2699 = vmatprep.subr.mxu0 0.0
    %2700 = vmatpush2.msra.mxu0 0.0
    %2701 = vmatprep.subr.mxu0 0.0
    %2702 = vmatpush2.msra.mxu0 0.0
    %2703 = vmatprep.subr.mxu0 0.0
    %2704 = vmatpush2.msra.mxu0 0.0
    %2705 = vmatprep.subr.mxu0 0.0
    %2706 = vmatpush2.msra.mxu0 0.0
    %2707 = vmatprep.subr.mxu0 0.0
    %2708 = vmatpush2.msra.mxu0 0.0
    %2709 = vmatprep.subr.mxu0 0.0
    %2710 = vmatpush2.msra.mxu0 0.0
    %2711 = vmatprep.subr.mxu0 0.0
    %2712 = vmatpush2.msra.mxu0 0.0
    %2713 = vmatprep.subr.mxu0 0.0
    %2714 = vmatpush2.msra.mxu0 0.0
    %2715 = vmatprep.subr.mxu0 0.0
    %2716 = vmatpush2.msra.mxu0 0.0
    %2717 = vmatprep.subr.mxu0 0.0
    %2718 = vmatpush2.msra.mxu0 0.0
    %2719 = vmatprep.subr.mxu0 0.0
    %2720 = vmatpush2.msra.mxu0 0.0
    %2721 = vmatprep.subr.mxu0 0.0
    %2722 = vmatpush2.msra.mxu0 0.0
    %2723 = vmatprep.mubr.f32.mxu0 0.0
    %2724 = vmatmul.mubr.f32.gmra.mxu0 %v2657
    %v2725 = vpop.f32.mrf.mxu0
    %v2726 = vadd.f32 0.0, %v2725
    %v2727 = vpop.f32.mrf.mxu0
    %2728 = vdwg.mxu0
    %v2729 = vadd.f32 %v2647, %v2726
    %v2731 = vsel %vm968, %v2613, 0
    %2733 = vmatprep.subr.mxu0 0.0
    %2734 = vmatpush1.msra.mxu0 0.0
    %2735 = vmatprep.subr.mxu0 0.0
    %2736 = vmatpush1.msra.mxu0 0.0
    %2737 = vmatprep.subr.mxu0 0.0
    %2738 = vmatpush1.msra.mxu0 0.0
    %2739 = vmatprep.subr.mxu0 0.0
    %2740 = vmatpush1.msra.mxu0 0.0
    %2741 = vmatprep.subr.mxu0 0.0
    %2742 = vmatpush1.msra.mxu0 %v2646
    %2743 = vmatprep.subr.mxu0 0.0
    %2744 = vmatpush1.msra.mxu0 %v2645
    %2745 = vmatprep.subr.mxu0 0.0
    %2746 = vmatpush1.msra.mxu0 %v2644
    %2747 = vmatprep.subr.mxu0 0.0
    %2748 = vmatpush1.msra.mxu0 %v2643
    %2749 = vmatprep.subr.mxu0 0.0
    %2750 = vmatpush1.msra.mxu0 %v2642
    %2751 = vmatprep.subr.mxu0 0.0
    %2752 = vmatpush1.msra.mxu0 %v2641
    %2753 = vmatprep.subr.mxu0 0.0
    %2754 = vmatpush1.msra.mxu0 %v2640
    %2755 = vmatprep.subr.mxu0 0.0
    %2756 = vmatpush1.msra.mxu0 %v2639
    %2757 = vmatprep.subr.mxu0 0.0
    %2758 = vmatpush1.msra.mxu0 %v2638
    %2759 = vmatprep.subr.mxu0 0.0
    %2760 = vmatpush1.msra.mxu0 %v2637
    %2761 = vmatprep.subr.mxu0 0.0
    %2762 = vmatpush1.msra.mxu0 %v2636
    %2763 = vmatprep.subr.mxu0 0.0
    %2764 = vmatpush1.msra.mxu0 %v2635
    %2765 = vmatprep.subr.mxu0 0.0
    %2766 = vmatpush2.msra.mxu0 0.0
    %2767 = vmatprep.subr.mxu0 0.0
    %2768 = vmatpush2.msra.mxu0 0.0
    %2769 = vmatprep.subr.mxu0 0.0
    %2770 = vmatpush2.msra.mxu0 0.0
    %2771 = vmatprep.subr.mxu0 0.0
    %2772 = vmatpush2.msra.mxu0 0.0
    %2773 = vmatprep.subr.mxu0 0.0
    %2774 = vmatpush2.msra.mxu0 0.0
    %2775 = vmatprep.subr.mxu0 0.0
    %2776 = vmatpush2.msra.mxu0 0.0
    %2777 = vmatprep.subr.mxu0 0.0
    %2778 = vmatpush2.msra.mxu0 0.0
    %2779 = vmatprep.subr.mxu0 0.0
    %2780 = vmatpush2.msra.mxu0 0.0
    %2781 = vmatprep.subr.mxu0 0.0
    %2782 = vmatpush2.msra.mxu0 0.0
    %2783 = vmatprep.subr.mxu0 0.0
    %2784 = vmatpush2.msra.mxu0 0.0
    %2785 = vmatprep.subr.mxu0 0.0
    %2786 = vmatpush2.msra.mxu0 0.0
    %2787 = vmatprep.subr.mxu0 0.0
    %2788 = vmatpush2.msra.mxu0 0.0
    %2789 = vmatprep.subr.mxu0 0.0
    %2790 = vmatpush2.msra.mxu0 0.0
    %2791 = vmatprep.subr.mxu0 0.0
    %2792 = vmatpush2.msra.mxu0 0.0
    %2793 = vmatprep.subr.mxu0 0.0
    %2794 = vmatpush2.msra.mxu0 0.0
    %2795 = vmatprep.subr.mxu0 0.0
    %2796 = vmatpush2.msra.mxu0 0.0
    %2797 = vmatprep.mubr.f32.mxu0 0.0
    %2798 = vmatmul.mubr.f32.gmra.mxu0 %v2731
    %v2799 = vpop.f32.mrf.mxu0
    %v2800 = vadd.f32 0.0, %v2799
    %v2801 = vpop.f32.mrf.mxu0
    %2802 = vdwg.mxu0
    %v2803 = vadd.f32 %v2729, %v2800
    %v2804 = vmax.f32 %v2803, 0.0
    %vm2805 = vcmask 408576
    %v2807 = vsel %vm2805, %v2804, 0
    %vm2809 = vcmask 1041408
    %v2811 = vsel %vm2809, %v2654, 0
    %2813 = vmatprep.subr.mxu0 0.0
    %2814 = vmatpush1.msra.mxu0 0.0
    %2815 = vmatprep.subr.mxu0 0.0
    %2816 = vmatpush1.msra.mxu0 0.0
    %2817 = vmatprep.subr.mxu0 0.0
    %2818 = vmatpush1.msra.mxu0 0.0
    %2819 = vmatprep.subr.mxu0 0.0
    %2820 = vmatpush1.msra.mxu0 0.0
    %2821 = vmatprep.subr.mxu0 0.0
    %2822 = vmatpush1.msra.mxu0 0.0
    %2823 = vmatprep.subr.mxu0 0.0
    %2824 = vmatpush1.msra.mxu0 0.0
    %2825 = vmatprep.subr.mxu0 0.0
    %2826 = vmatpush1.msra.mxu0 0.0
    %2827 = vmatprep.subr.mxu0 0.0
    %2828 = vmatpush1.msra.mxu0 0.0
    %2829 = vmatprep.subr.mxu0 0.0
    %2830 = vmatpush1.msra.mxu0 0.0
    %2831 = vmatprep.subr.mxu0 0.0
    %2832 = vmatpush1.msra.mxu0 %v2811
    %2833 = vmatprep.subr.mxu0 0.0
    %2834 = vmatpush1.msra.mxu0 %v2653
    %2835 = vmatprep.subr.mxu0 0.0
    %2836 = vmatpush1.msra.mxu0 %v2652
    %2837 = vmatprep.subr.mxu0 0.0
    %2838 = vmatpush1.msra.mxu0 %v2651
    %2839 = vmatprep.subr.mxu0 0.0
    %2840 = vmatpush1.msra.mxu0 %v2650
    %2841 = vmatprep.subr.mxu0 0.0
    %2842 = vmatpush1.msra.mxu0 %v2649
    %2843 = vmatprep.subr.mxu0 0.0
    %2844 = vmatpush1.msra.mxu0 %v2648
    %2845 = vmatprep.subr.mxu0 0.0
    %2846 = vmatpush2.msra.mxu0 0.0
    %2847 = vmatprep.subr.mxu0 0.0
    %2848 = vmatpush2.msra.mxu0 0.0
    %2849 = vmatprep.subr.mxu0 0.0
    %2850 = vmatpush2.msra.mxu0 0.0
    %2851 = vmatprep.subr.mxu0 0.0
    %2852 = vmatpush2.msra.mxu0 0.0
    %2853 = vmatprep.subr.mxu0 0.0
    %2854 = vmatpush2.msra.mxu0 0.0
    %2855 = vmatprep.subr.mxu0 0.0
    %2856 = vmatpush2.msra.mxu0 0.0
    %2857 = vmatprep.subr.mxu0 0.0
    %2858 = vmatpush2.msra.mxu0 0.0
    %2859 = vmatprep.subr.mxu0 0.0
    %2860 = vmatpush2.msra.mxu0 0.0
    %2861 = vmatprep.subr.mxu0 0.0
    %2862 = vmatpush2.msra.mxu0 0.0
    %2863 = vmatprep.subr.mxu0 0.0
    %2864 = vmatpush2.msra.mxu0 0.0
    %2865 = vmatprep.subr.mxu0 0.0
    %2866 = vmatpush2.msra.mxu0 0.0
    %2867 = vmatprep.subr.mxu0 0.0
    %2868 = vmatpush2.msra.mxu0 0.0
    %2869 = vmatprep.subr.mxu0 0.0
    %2870 = vmatpush2.msra.mxu0 0.0
    %2871 = vmatprep.subr.mxu0 0.0
    %2872 = vmatpush2.msra.mxu0 0.0
    %2873 = vmatprep.subr.mxu0 0.0
    %2874 = vmatpush2.msra.mxu0 0.0
    %2875 = vmatprep.subr.mxu0 0.0
    %2876 = vmatpush2.msra.mxu0 0.0
    %2877 = vmatprep.mubr.f32.mxu0 0.0
    %2878 = vmatmul.mubr.f32.gmra.mxu0 %v2807
    %v2879 = vpop.f32.mrf.mxu0
    %v2880 = vadd.f32 %v2655, %v2879
    %v2881 = vpop.f32.mrf.mxu0
    %2882 = vdwg.mxu0
    %vm2883 = vcmask 40960
    %2884 = vst.msk [vmem:[#allocation3] sm:$0x1] %vm2883, %v2880
    %v2886 = vsel %vm968, %v986, 0
    %2888 = vmatprep.subr.mxu0 0.0
    %2889 = vmatpush1.msra.mxu0 0.0
    %2890 = vmatprep.subr.mxu0 0.0
    %2891 = vmatpush1.msra.mxu0 0.0
    %2892 = vmatprep.subr.mxu0 0.0
    %2893 = vmatpush1.msra.mxu0 0.0
    %2894 = vmatprep.subr.mxu0 0.0
    %2895 = vmatpush1.msra.mxu0 0.0
    %2896 = vmatprep.subr.mxu0 0.0
    %2897 = vmatpush1.msra.mxu0 %v2634
    %2898 = vmatprep.subr.mxu0 0.0
    %2899 = vmatpush1.msra.mxu0 %v2633
    %2900 = vmatprep.subr.mxu0 0.0
    %2901 = vmatpush1.msra.mxu0 %v2632
    %2902 = vmatprep.subr.mxu0 0.0
    %2903 = vmatpush1.msra.mxu0 %v2631
    %2904 = vmatprep.subr.mxu0 0.0
    %2905 = vmatpush1.msra.mxu0 %v2630
    %2906 = vmatprep.subr.mxu0 0.0
    %2907 = vmatpush1.msra.mxu0 %v2629
    %2908 = vmatprep.subr.mxu0 0.0
    %2909 = vmatpush1.msra.mxu0 %v2628
    %2910 = vmatprep.subr.mxu0 0.0
    %2911 = vmatpush1.msra.mxu0 %v2627
    %2912 = vmatprep.subr.mxu0 0.0
    %2913 = vmatpush1.msra.mxu0 %v2626
    %2914 = vmatprep.subr.mxu0 0.0
    %2915 = vmatpush1.msra.mxu0 %v2625
    %2916 = vmatprep.subr.mxu0 0.0
    %2917 = vmatpush1.msra.mxu0 %v2624
    %2918 = vmatprep.subr.mxu0 0.0
    %2919 = vmatpush1.msra.mxu0 %v2623
    %2920 = vmatprep.subr.mxu0 0.0
    %2921 = vmatpush2.msra.mxu0 0.0
    %2922 = vmatprep.subr.mxu0 0.0
    %2923 = vmatpush2.msra.mxu0 0.0
    %2924 = vmatprep.subr.mxu0 0.0
    %2925 = vmatpush2.msra.mxu0 0.0
    %2926 = vmatprep.subr.mxu0 0.0
    %2927 = vmatpush2.msra.mxu0 0.0
    %2928 = vmatprep.subr.mxu0 0.0
    %2929 = vmatpush2.msra.mxu0 0.0
    %2930 = vmatprep.subr.mxu0 0.0
    %2931 = vmatpush2.msra.mxu0 0.0
    %2932 = vmatprep.subr.mxu0 0.0
    %2933 = vmatpush2.msra.mxu0 0.0
    %2934 = vmatprep.subr.mxu0 0.0
    %2935 = vmatpush2.msra.mxu0 0.0
    %2936 = vmatprep.subr.mxu0 0.0
    %2937 = vmatpush2.msra.mxu0 0.0
    %2938 = vmatprep.subr.mxu0 0.0
    %2939 = vmatpush2.msra.mxu0 0.0
    %2940 = vmatprep.subr.mxu0 0.0
    %2941 = vmatpush2.msra.mxu0 0.0
    %2942 = vmatprep.subr.mxu0 0.0
    %2943 = vmatpush2.msra.mxu0 0.0
    %2944 = vmatprep.subr.mxu0 0.0
    %2945 = vmatpush2.msra.mxu0 0.0
    %2946 = vmatprep.subr.mxu0 0.0
    %2947 = vmatpush2.msra.mxu0 0.0
    %2948 = vmatprep.subr.mxu0 0.0
    %2949 = vmatpush2.msra.mxu0 0.0
    %2950 = vmatprep.subr.mxu0 0.0
    %2951 = vmatpush2.msra.mxu0 0.0
    %2952 = vmatprep.mubr.f32.mxu0 0.0
    %2953 = vmatmul.mubr.f32.gmra.mxu0 %v2886
    %v2954 = vpop.f32.mrf.mxu0
    %v2955 = vadd.f32 0.0, %v2954
    %v2956 = vpop.f32.mrf.mxu0
    %2957 = vdwg.mxu0
    %v2958 = vadd.f32 %v2647, %v2955
    %v2960 = vsel %vm968, %v2622, 0
    %2962 = vmatprep.subr.mxu0 0.0
    %2963 = vmatpush1.msra.mxu0 0.0
    %2964 = vmatprep.subr.mxu0 0.0
    %2965 = vmatpush1.msra.mxu0 0.0
    %2966 = vmatprep.subr.mxu0 0.0
    %2967 = vmatpush1.msra.mxu0 0.0
    %2968 = vmatprep.subr.mxu0 0.0
    %2969 = vmatpush1.msra.mxu0 0.0
    %2970 = vmatprep.subr.mxu0 0.0
    %2971 = vmatpush1.msra.mxu0 %v2646
    %2972 = vmatprep.subr.mxu0 0.0
    %2973 = vmatpush1.msra.mxu0 %v2645
    %2974 = vmatprep.subr.mxu0 0.0
    %2975 = vmatpush1.msra.mxu0 %v2644
    %2976 = vmatprep.subr.mxu0 0.0
    %2977 = vmatpush1.msra.mxu0 %v2643
    %2978 = vmatprep.subr.mxu0 0.0
    %2979 = vmatpush1.msra.mxu0 %v2642
    %2980 = vmatprep.subr.mxu0 0.0
    %2981 = vmatpush1.msra.mxu0 %v2641
    %2982 = vmatprep.subr.mxu0 0.0
    %2983 = vmatpush1.msra.mxu0 %v2640
    %2984 = vmatprep.subr.mxu0 0.0
    %2985 = vmatpush1.msra.mxu0 %v2639
    %2986 = vmatprep.subr.mxu0 0.0
    %2987 = vmatpush1.msra.mxu0 %v2638
    %2988 = vmatprep.subr.mxu0 0.0
    %2989 = vmatpush1.msra.mxu0 %v2637
    %2990 = vmatprep.subr.mxu0 0.0
    %2991 = vmatpush1.msra.mxu0 %v2636
    %2992 = vmatprep.subr.mxu0 0.0
    %2993 = vmatpush1.msra.mxu0 %v2635
    %2994 = vmatprep.subr.mxu0 0.0
    %2995 = vmatpush2.msra.mxu0 0.0
    %2996 = vmatprep.subr.mxu0 0.0
    %2997 = vmatpush2.msra.mxu0 0.0
    %2998 = vmatprep.subr.mxu0 0.0
    %2999 = vmatpush2.msra.mxu0 0.0
    %3000 = vmatprep.subr.mxu0 0.0
    %3001 = vmatpush2.msra.mxu0 0.0
    %3002 = vmatprep.subr.mxu0 0.0
    %3003 = vmatpush2.msra.mxu0 0.0
    %3004 = vmatprep.subr.mxu0 0.0
    %3005 = vmatpush2.msra.mxu0 0.0
    %3006 = vmatprep.subr.mxu0 0.0
    %3007 = vmatpush2.msra.mxu0 0.0
    %3008 = vmatprep.subr.mxu0 0.0
    %3009 = vmatpush2.msra.mxu0 0.0
    %3010 = vmatprep.subr.mxu0 0.0
    %3011 = vmatpush2.msra.mxu0 0.0
    %3012 = vmatprep.subr.mxu0 0.0
    %3013 = vmatpush2.msra.mxu0 0.0
    %3014 = vmatprep.subr.mxu0 0.0
    %3015 = vmatpush2.msra.mxu0 0.0
    %3016 = vmatprep.subr.mxu0 0.0
    %3017 = vmatpush2.msra.mxu0 0.0
    %3018 = vmatprep.subr.mxu0 0.0
    %3019 = vmatpush2.msra.mxu0 0.0
    %3020 = vmatprep.subr.mxu0 0.0
    %3021 = vmatpush2.msra.mxu0 0.0
    %3022 = vmatprep.subr.mxu0 0.0
    %3023 = vmatpush2.msra.mxu0 0.0
    %3024 = vmatprep.subr.mxu0 0.0
    %3025 = vmatpush2.msra.mxu0 0.0
    %3026 = vmatprep.mubr.f32.mxu0 0.0
    %3027 = vmatmul.mubr.f32.gmra.mxu0 %v2960
    %v3028 = vpop.f32.mrf.mxu0
    %v3029 = vadd.f32 0.0, %v3028
    %v3030 = vpop.f32.mrf.mxu0
    %3031 = vdwg.mxu0
    %v3032 = vadd.f32 %v2958, %v3029
    %v3033 = vmax.f32 %v3032, 0.0
    %v3035 = vsel %vm2805, %v3033, 0
    %3037 = vmatprep.subr.mxu0 0.0
    %3038 = vmatpush1.msra.mxu0 0.0
    %3039 = vmatprep.subr.mxu0 0.0
    %3040 = vmatpush1.msra.mxu0 0.0
    %3041 = vmatprep.subr.mxu0 0.0
    %3042 = vmatpush1.msra.mxu0 0.0
    %3043 = vmatprep.subr.mxu0 0.0
    %3044 = vmatpush1.msra.mxu0 0.0
    %3045 = vmatprep.subr.mxu0 0.0
    %3046 = vmatpush1.msra.mxu0 0.0
    %3047 = vmatprep.subr.mxu0 0.0
    %3048 = vmatpush1.msra.mxu0 0.0
    %3049 = vmatprep.subr.mxu0 0.0
    %3050 = vmatpush1.msra.mxu0 0.0
    %3051 = vmatprep.subr.mxu0 0.0
    %3052 = vmatpush1.msra.mxu0 0.0
    %3053 = vmatprep.subr.mxu0 0.0
    %3054 = vmatpush1.msra.mxu0 0.0
    %3055 = vmatprep.subr.mxu0 0.0
    %3056 = vmatpush1.msra.mxu0 %v2811
    %3057 = vmatprep.subr.mxu0 0.0
    %3058 = vmatpush1.msra.mxu0 %v2653
    %3059 = vmatprep.subr.mxu0 0.0
    %3060 = vmatpush1.msra.mxu0 %v2652
    %3061 = vmatprep.subr.mxu0 0.0
    %3062 = vmatpush1.msra.mxu0 %v2651
    %3063 = vmatprep.subr.mxu0 0.0
    %3064 = vmatpush1.msra.mxu0 %v2650
    %3065 = vmatprep.subr.mxu0 0.0
    %3066 = vmatpush1.msra.mxu0 %v2649
    %3067 = vmatprep.subr.mxu0 0.0
    %3068 = vmatpush1.msra.mxu0 %v2648
    %3069 = vmatprep.subr.mxu0 0.0
    %3070 = vmatpush2.msra.mxu0 0.0
    %3071 = vmatprep.subr.mxu0 0.0
    %3072 = vmatpush2.msra.mxu0 0.0
    %3073 = vmatprep.subr.mxu0 0.0
    %3074 = vmatpush2.msra.mxu0 0.0
    %3075 = vmatprep.subr.mxu0 0.0
    %3076 = vmatpush2.msra.mxu0 0.0
    %3077 = vmatprep.subr.mxu0 0.0
    %3078 = vmatpush2.msra.mxu0 0.0
    %3079 = vmatprep.subr.mxu0 0.0
    %3080 = vmatpush2.msra.mxu0 0.0
    %3081 = vmatprep.subr.mxu0 0.0
    %3082 = vmatpush2.msra.mxu0 0.0
    %3083 = vmatprep.subr.mxu0 0.0
    %3084 = vmatpush2.msra.mxu0 0.0
    %3085 = vmatprep.subr.mxu0 0.0
    %3086 = vmatpush2.msra.mxu0 0.0
    %3087 = vmatprep.subr.mxu0 0.0
    %3088 = vmatpush2.msra.mxu0 0.0
    %3089 = vmatprep.subr.mxu0 0.0
    %3090 = vmatpush2.msra.mxu0 0.0
    %3091 = vmatprep.subr.mxu0 0.0
    %3092 = vmatpush2.msra.mxu0 0.0
    %3093 = vmatprep.subr.mxu0 0.0
    %3094 = vmatpush2.msra.mxu0 0.0
    %3095 = vmatprep.subr.mxu0 0.0
    %3096 = vmatpush2.msra.mxu0 0.0
    %3097 = vmatprep.subr.mxu0 0.0
    %3098 = vmatpush2.msra.mxu0 0.0
    %3099 = vmatprep.subr.mxu0 0.0
    %3100 = vmatpush2.msra.mxu0 0.0
    %3101 = vmatprep.mubr.f32.mxu0 0.0
    %3102 = vmatmul.mubr.f32.gmra.mxu0 %v3035
    %v3103 = vpop.f32.mrf.mxu0
    %v3104 = vadd.f32 %v2655, %v3103
    %v3105 = vpop.f32.mrf.mxu0
    %3106 = vdwg.mxu0
    %3107 = vst.msk [vmem:[#allocation3 + $0x1] sm:$0x1] %vm2883, %v3104
    // Predicated region
    $region74: #{edgefeat_gat_svd_encoder_forward.1} parent=1 // pred_check
      _
    $region75: #{edgefeat_gat_svd_encoder_forward.1} parent=1 // pred_check_branch
      %3109 = sbr.rel (0) target = $region77
    $region76: #{edgefeat_gat_svd_encoder_forward.1} parent=1 // pred_region
      %s3111 = ssub.s32 32, 32
      %3112 = vsyncadd [#allocation4], %s3111
      %s3114 = sshll.u32 [#allocation3], 4
      %s3115 = int_to_ptr.vmem [resolvable:$true] %s3114
      %3117 = dma.vmem_to_hbm [thread:$0]  %s3115, 32, %s18, [#allocation4]
    $region77: #{edgefeat_gat_svd_encoder_forward.1} parent=1 // pred_fallthru
      _
    // Predicated region
    $region78: #{edgefeat_gat_svd_encoder_forward.1} parent=1 // pred_check
      _
    $region79: #{edgefeat_gat_svd_encoder_forward.1} parent=1 // pred_check_branch
      %3119 = sbr.rel (0) target = $region81
    $region80: #{edgefeat_gat_svd_encoder_forward.1} parent=1 // pred_region
      %3120 = dma.done [#allocation4], 32
    $region81: #{edgefeat_gat_svd_encoder_forward.1} parent=1 // pred_fallthru
      _
    %3121 = vsyncpa [#allocation4], 1

</llo_original>
